<compile_context>
chip_gen: v7x
topology: tpu7x:2x2x1
jax: 0.10.0
libtpu: 0.0.40
codegen_flags: <defaults>
</compile_context>

<pallas_src>
import math
import functools

import jax
import jax.numpy as jnp
from jax.experimental import pallas as pl
from jax.experimental.pallas import tpu as pltpu


# ----------------------------------------------------------------------------
# In-kernel helpers
# ----------------------------------------------------------------------------
def _layer_norm(x, g, b, eps=1e-5):
    """LayerNorm over the last axis (torch defaults: eps=1e-5)."""
    mean = jnp.mean(x, axis=-1, keepdims=True)
    xc = x - mean
    var = jnp.mean(xc * xc, axis=-1, keepdims=True)
    return xc * jax.lax.rsqrt(var + eps) * g + b


# ----------------------------------------------------------------------------
# Single fused encoder kernel
# ----------------------------------------------------------------------------
def _encoder_kernel(*refs, B, T, h, k, num_emb, num_layers):
    # refs = [x, pos_tiled,
    #         (w_emb_i, b_emb_i) * num_emb,
    #         per layer: (g1, b1 if layer>0), wqkv, g2, b2, wfc, bfc,
    #         gF, bF, wkv,
    #         o_ref, attn_scratch]
    o_ref, attn_ref = refs[-2], refs[-1]
    it = iter(refs[:-2])
    x_ref = next(it)
    pos_ref = next(it)

    # --- embedding MLP (relu on all but the last layer) + positional add ----
    x = x_ref[...]                                           # (B*T, d_in)
    for i in range(num_emb):
        w = next(it)[...]                                    # (din, dout)
        b_ = next(it)[...]                                   # (1, dout)
        x = jnp.dot(x, w, preferred_element_type=jnp.float32) + b_
        if i < num_emb - 1:
            x = jnp.maximum(x, 0.0)
    x = x + pos_ref[...]                                     # (B*T, k)

    dh = k // h

    # --- encoder layers ------------------------------------------------------
    for li in range(num_layers):
        if li != 0:                                          # norm1[li-1]
            g1 = next(it)[...]
            b1 = next(it)[...]
            x = _layer_norm(x, g1, b1)
        wqkv = next(it)[...]                                 # (k, 3k), scale folded in Wq
        g2 = next(it)[...]
        b2 = next(it)[...]
        wfc = next(it)[...]                                  # (k, k)
        bfc = next(it)[...]                                  # (1, k)

        # single fused QKV projection for the whole batch
        qkv = jnp.dot(x, wqkv, preferred_element_type=jnp.float32)   # (B*T, 3k)

        # multi-head self-attention (masking=False); per-(batch, head) tiles
        # are written into a VMEM scratch slice instead of a lane concatenate.
        for bb in range(B):
            rows = slice(bb * T, (bb + 1) * T)
            for j in range(h):
                cq = slice(j * dh, (j + 1) * dh)
                ck = slice(k + j * dh, k + (j + 1) * dh)
                cv = slice(2 * k + j * dh, 2 * k + (j + 1) * dh)
                qh = qkv[rows, cq]                           # (T, dh)
                kh = qkv[rows, ck]
                vh = qkv[rows, cv]
                # q @ k^T via contracting dims (no in-kernel transpose)
                s = jax.lax.dot_general(qh, kh, (((1,), (1,)), ((), ())),
                                        preferred_element_type=jnp.float32)
                s = s - jnp.max(s, axis=-1, keepdims=True)
                e = jnp.exp(s)
                den = jnp.sum(e, axis=-1, keepdims=True)
                oh = jnp.dot(e, vh, preferred_element_type=jnp.float32) / den
                attn_ref[rows, cq] = oh

        x = x + attn_ref[...]                                # residual
        x = _layer_norm(x, g2, b2)                           # norm2
        y = jnp.dot(x, wfc, preferred_element_type=jnp.float32) + bfc
        x = x + jnp.maximum(y, 0.0)                          # x + relu(fc(x))

    # --- final norm + fused K|V projection (FinalHead, no bias) --------------
    gF = next(it)[...]
    bF = next(it)[...]
    wkv = next(it)[...]                                      # (k, 2k)
    xn = _layer_norm(x, gF, bF)
    o_ref[...] = jnp.dot(xn, wkv,
                         preferred_element_type=jnp.float32).astype(o_ref.dtype)


# ----------------------------------------------------------------------------
# Positional encoding (matches get_positional_encoding semantics, base 1000)
# ----------------------------------------------------------------------------
def get_positional_encoding(d, t_in):
    assert d % 2 == 0
    pos = jnp.arange(1, t_in + 1, dtype=jnp.float32)[:, None] * jnp.ones(
        (1, d), jnp.float32)
    kk = jnp.arange(d // 2, dtype=jnp.float32)
    omega = 1.0 / (1000.0 ** (2.0 * kk / d))
    omega = jnp.repeat(omega, 2)[None, :]                    # repeat_interleave
    phase = jnp.tile(jnp.array([0.0, math.pi / 2.0], jnp.float32), d // 2)[None, :]
    return jnp.sin(pos * omega + phase)                      # (T, d)


# ----------------------------------------------------------------------------
# Parameter init (deterministic, synthetic, nn.Linear-style)
# ----------------------------------------------------------------------------
def init_encoder_params(key, cfg):
    n, h = cfg["dim"]
    emb_dim = cfg["emb"]
    d = cfg["max_ac"] * cfg["state_dim"]
    k = emb_dim[-1]

    def lin_t(key, din, dout, bias=True):
        # nn.Linear-style (dout, din) init, pre-transposed to (din, dout) so
        # kernels compute y = x @ W_t without an in-kernel .T
        kw, kb = jax.random.split(key)
        s = 1.0 / math.sqrt(din)
        w = jax.random.uniform(kw, (dout, din), jnp.float32, -s, s).T
        b = jax.random.uniform(kb, (1, dout), jnp.float32, -s, s) if bias else None
        return w, b

    keys = jax.random.split(key, 64)
    ki = iter(range(64))

    params = {}
    dims = [d] + list(emb_dim)
    params["emb"] = [lin_t(keys[next(ki)], dims[i], dims[i + 1])
                     for i in range(len(emb_dim))]
    params["pos"] = get_positional_encoding(k, cfg["T_in"])   # (T, k)

    ones = jnp.ones((1, k), jnp.float32)    # torch LayerNorm default init
    zeros = jnp.zeros((1, k), jnp.float32)
    scale = 1.0 / math.sqrt(k)              # PyTorch uses 1/sqrt(d_model), not d_head

    layers = []
    for i in range(n - 1):
        lp = {}
        if i != 0:                          # norm1[i-1] in the PyTorch forward
            lp["g1"], lp["b1"] = ones, zeros
        wq, _ = lin_t(keys[next(ki)], k, k, bias=False)
        wk_, _ = lin_t(keys[next(ki)], k, k, bias=False)
        wv, _ = lin_t(keys[next(ki)], k, k, bias=False)
        # fused QKV weight; score scale folded into Wq once at init
        lp["wqkv"] = jnp.concatenate([wq * scale, wk_, wv], axis=1)   # (k, 3k)
        lp["g2"], lp["b2"] = ones, zeros
        lp["wfc"], lp["bfc"] = lin_t(keys[next(ki)], k, k)
        layers.append(lp)
    params["layers"] = layers

    params["gF"], params["bF"] = ones, zeros          # norm1[n-2]
    wkf, _ = lin_t(keys[next(ki)], k, k, bias=False)
    wvf, _ = lin_t(keys[next(ki)], k, k, bias=False)
    params["wkv"] = jnp.concatenate([wkf, wvf], axis=1)       # (k, 2k): fused K|V
    return params


# ----------------------------------------------------------------------------
# Forward: one fused pallas_call for the whole encoder
# ----------------------------------------------------------------------------
def encoder_forward(params, x, cfg):
    n, h = cfg["dim"]
    emb_dim = cfg["emb"]
    k = emb_dim[-1]
    B, T, d_in = x.shape
    num_emb = len(emb_dim)
    num_layers = n - 1

    # Flat argument list: activation first, then all (VMEM-resident) weights.
    args = [x.reshape(B * T, d_in), jnp.tile(params["pos"], (B, 1))]
    for (w, b_) in params["emb"]:
        args += [w, b_]
    for li in range(num_layers):
        lp = params["layers"][li]
        if li != 0:
            args += [lp["g1"], lp["b1"]]
        args += [lp["wqkv"], lp["g2"], lp["b2"], lp["wfc"], lp["bfc"]]
    args += [params["gF"], params["bF"], params["wkv"]]

    # No grid: the whole problem (<100 KiB) lives in VMEM for one invocation.
    # On v7x we intentionally do NOT shard across the 2 TensorCores at this
    # size — per-core work would not amortize the fixed per-step overhead.
    kv = pl.pallas_call(
        functools.partial(_encoder_kernel, B=B, T=T, h=h, k=k,
                          num_emb=num_emb, num_layers=num_layers),
        out_shape=jax.ShapeDtypeStruct((B * T, 2 * k), jnp.float32),
        in_specs=[pl.BlockSpec(memory_space=pltpu.MemorySpace.VMEM)] * len(args),
        out_specs=pl.BlockSpec(memory_space=pltpu.MemorySpace.VMEM),
        scratch_shapes=[pltpu.VMEM((B * T, k), jnp.float32)],   # attention scratch
    )(*args)

    # Kernel output is lane-dense (B*T, 2k).  The split below exists only to
    # match the PyTorch module's (B, h, T, dh) return shapes; a downstream
    # consumer could take kv directly and index heads itself.
    dh = k // h
    kv = kv.reshape(B, T, 2, h, dh)
    kf = kv[:, :, 0].transpose(0, 2, 1, 3)    # (B, h, T, dh)
    vf = kv[:, :, 1].transpose(0, 2, 1, 3)
    return kf, vf


# ----------------------------------------------------------------------------
# Main
# ----------------------------------------------------------------------------
if __name__ == "__main__":
    cfg = {
        "dim": (3, 4),        # n multi-head blocks, h heads each
        "emb": [16, 32],      # embedding MLP dims; k = 32
        "max_ac": 4,
        "state_dim": 2,       # d_in = 8
        "T_in": 8,
    }
    B, T = 2, cfg["T_in"]
    d_in = cfg["max_ac"] * cfg["state_dim"]

    key = jax.random.PRNGKey(0)
    k_params, k_x = jax.random.split(key)
    params = init_encoder_params(k_params, cfg)
    x = jax.random.normal(k_x, (B, T, d_in), jnp.float32)

    fwd = jax.jit(functools.partial(encoder_forward, cfg=cfg))
    k_out, v_out = fwd(params, x)
    jax.block_until_ready((k_out, v_out))

    n, h = cfg["dim"]
    kdim = cfg["emb"][-1]
    assert k_out.shape == (B, h, T, kdim // h)
    assert v_out.shape == (B, h, T, kdim // h)
    assert bool(jnp.all(jnp.isfinite(k_out))) and bool(jnp.all(jnp.isfinite(v_out)))
    print("KERNEL_OK")
</pallas_src>

<mosaic_0001>
module attributes {stable_mosaic.version = 11 : i64} {
  func.func @_encoder_kernel(%arg0: memref<16x8xf32, #tpu.memory_space<vmem>>, %arg1: memref<16x32xf32, #tpu.memory_space<vmem>>, %arg2: memref<8x16xf32, #tpu.memory_space<vmem>>, %arg3: memref<1x16xf32, #tpu.memory_space<vmem>>, %arg4: memref<16x32xf32, #tpu.memory_space<vmem>>, %arg5: memref<1x32xf32, #tpu.memory_space<vmem>>, %arg6: memref<32x96xf32, #tpu.memory_space<vmem>>, %arg7: memref<1x32xf32, #tpu.memory_space<vmem>>, %arg8: memref<1x32xf32, #tpu.memory_space<vmem>>, %arg9: memref<32x32xf32, #tpu.memory_space<vmem>>, %arg10: memref<1x32xf32, #tpu.memory_space<vmem>>, %arg11: memref<1x32xf32, #tpu.memory_space<vmem>>, %arg12: memref<1x32xf32, #tpu.memory_space<vmem>>, %arg13: memref<32x96xf32, #tpu.memory_space<vmem>>, %arg14: memref<1x32xf32, #tpu.memory_space<vmem>>, %arg15: memref<1x32xf32, #tpu.memory_space<vmem>>, %arg16: memref<32x32xf32, #tpu.memory_space<vmem>>, %arg17: memref<1x32xf32, #tpu.memory_space<vmem>>, %arg18: memref<1x32xf32, #tpu.memory_space<vmem>>, %arg19: memref<1x32xf32, #tpu.memory_space<vmem>>, %arg20: memref<32x64xf32, #tpu.memory_space<vmem>>, %arg21: memref<16x64xf32, #tpu.memory_space<vmem>>, %arg22: memref<16x32xf32, #tpu.memory_space<vmem>>) attributes {dimension_semantics = [], scalar_prefetch = 0 : i64, scratch_operands = 1 : i64, tpu.core_type = #tpu.core_type<tc>} {
    %c0 = arith.constant 0 : index
    %c0_0 = arith.constant 0 : index
    %0 = vector.load %arg0[%c0, %c0_0] : memref<16x8xf32, #tpu.memory_space<vmem>>, vector<16x8xf32>
    %c0_1 = arith.constant 0 : index
    %c0_2 = arith.constant 0 : index
    %1 = vector.load %arg2[%c0_1, %c0_2] : memref<8x16xf32, #tpu.memory_space<vmem>>, vector<8x16xf32>
    %c0_3 = arith.constant 0 : index
    %c0_4 = arith.constant 0 : index
    %2 = vector.load %arg3[%c0_3, %c0_4] : memref<1x16xf32, #tpu.memory_space<vmem>>, vector<1x16xf32>
    %cst = arith.constant dense<0.000000e+00> : vector<16x16xf32>
    %3 = tpu.matmul %0, %1, %cst {dimension_numbers = #tpu.dot_dimension_numbers<[1], [0], [0], [1], [0, 0, 1, 1], [], []>} : vector<16x8xf32>, vector<8x16xf32>, vector<16x16xf32> -> vector<16x16xf32>
    %4 = vector.broadcast %2 : vector<1x16xf32> to vector<16x16xf32>
    %5 = arith.addf %3, %4 : vector<16x16xf32>
    %cst_5 = arith.constant 0.000000e+00 : f32
    %6 = vector.broadcast %cst_5 : f32 to vector<16x16xf32>
    %7 = arith.maximumf %5, %6 : vector<16x16xf32>
    %c0_6 = arith.constant 0 : index
    %c0_7 = arith.constant 0 : index
    %8 = vector.load %arg4[%c0_6, %c0_7] : memref<16x32xf32, #tpu.memory_space<vmem>>, vector<16x32xf32>
    %c0_8 = arith.constant 0 : index
    %c0_9 = arith.constant 0 : index
    %9 = vector.load %arg5[%c0_8, %c0_9] : memref<1x32xf32, #tpu.memory_space<vmem>>, vector<1x32xf32>
    %cst_10 = arith.constant dense<0.000000e+00> : vector<16x32xf32>
    %10 = tpu.matmul %7, %8, %cst_10 {dimension_numbers = #tpu.dot_dimension_numbers<[1], [0], [0], [1], [0, 0, 1, 1], [], []>} : vector<16x16xf32>, vector<16x32xf32>, vector<16x32xf32> -> vector<16x32xf32>
    %11 = vector.broadcast %9 : vector<1x32xf32> to vector<16x32xf32>
    %12 = arith.addf %10, %11 : vector<16x32xf32>
    %c0_11 = arith.constant 0 : index
    %c0_12 = arith.constant 0 : index
    %13 = vector.load %arg1[%c0_11, %c0_12] : memref<16x32xf32, #tpu.memory_space<vmem>>, vector<16x32xf32>
    %14 = arith.addf %12, %13 : vector<16x32xf32>
    %c0_13 = arith.constant 0 : index
    %c0_14 = arith.constant 0 : index
    %15 = vector.load %arg6[%c0_13, %c0_14] : memref<32x96xf32, #tpu.memory_space<vmem>>, vector<32x96xf32>
    %c0_15 = arith.constant 0 : index
    %c0_16 = arith.constant 0 : index
    %16 = vector.load %arg7[%c0_15, %c0_16] : memref<1x32xf32, #tpu.memory_space<vmem>>, vector<1x32xf32>
    %c0_17 = arith.constant 0 : index
    %c0_18 = arith.constant 0 : index
    %17 = vector.load %arg8[%c0_17, %c0_18] : memref<1x32xf32, #tpu.memory_space<vmem>>, vector<1x32xf32>
    %c0_19 = arith.constant 0 : index
    %c0_20 = arith.constant 0 : index
    %18 = vector.load %arg9[%c0_19, %c0_20] : memref<32x32xf32, #tpu.memory_space<vmem>>, vector<32x32xf32>
    %c0_21 = arith.constant 0 : index
    %c0_22 = arith.constant 0 : index
    %19 = vector.load %arg10[%c0_21, %c0_22] : memref<1x32xf32, #tpu.memory_space<vmem>>, vector<1x32xf32>
    %cst_23 = arith.constant dense<0.000000e+00> : vector<16x96xf32>
    %20 = tpu.matmul %14, %15, %cst_23 {dimension_numbers = #tpu.dot_dimension_numbers<[1], [0], [0], [1], [0, 0, 1, 1], [], []>} : vector<16x32xf32>, vector<32x96xf32>, vector<16x96xf32> -> vector<16x96xf32>
    %21 = vector.extract_strided_slice %20 {offsets = [0, 0], sizes = [8, 8], strides = [1, 1]} : vector<16x96xf32> to vector<8x8xf32>
    %22 = vector.extract_strided_slice %20 {offsets = [0, 32], sizes = [8, 8], strides = [1, 1]} : vector<16x96xf32> to vector<8x8xf32>
    %23 = vector.extract_strided_slice %20 {offsets = [0, 64], sizes = [8, 8], strides = [1, 1]} : vector<16x96xf32> to vector<8x8xf32>
    %cst_24 = arith.constant dense<0.000000e+00> : vector<8x8xf32>
    %24 = tpu.matmul %21, %22, %cst_24 {dimension_numbers = #tpu.dot_dimension_numbers<[1], [1], [0], [0], [0, 0, 1, 0], [], []>} : vector<8x8xf32>, vector<8x8xf32>, vector<8x8xf32> -> vector<8x8xf32>
    %cst_25 = arith.constant dense<0xFF800000> : vector<8xf32>
    %25 = vector.multi_reduction <maximumf>, %24, %cst_25 [1] : vector<8x8xf32> to vector<8xf32>
    %26 = vector.shape_cast %25 : vector<8xf32> to vector<8x1xf32>
    %27 = vector.broadcast %26 : vector<8x1xf32> to vector<8x8xf32>
    %28 = arith.subf %24, %27 : vector<8x8xf32>
    %29 = math.exp %28 : vector<8x8xf32>
    %cst_26 = arith.constant dense<0.000000e+00> : vector<8xf32>
    %30 = vector.multi_reduction <add>, %29, %cst_26 [1] : vector<8x8xf32> to vector<8xf32>
    %31 = vector.shape_cast %30 : vector<8xf32> to vector<8x1xf32>
    %cst_27 = arith.constant dense<0.000000e+00> : vector<8x8xf32>
    %32 = tpu.matmul %29, %23, %cst_27 {dimension_numbers = #tpu.dot_dimension_numbers<[1], [0], [0], [1], [0, 0, 1, 1], [], []>} : vector<8x8xf32>, vector<8x8xf32>, vector<8x8xf32> -> vector<8x8xf32>
    %33 = vector.broadcast %31 : vector<8x1xf32> to vector<8x8xf32>
    %34 = arith.divf %32, %33 : vector<8x8xf32>
    %c0_28 = arith.constant 0 : index
    %c0_29 = arith.constant 0 : index
    %35 = vector.load %arg22[%c0_28, %c0_29] : memref<16x32xf32, #tpu.memory_space<vmem>>, vector<8x8xf32>
    tpu.vector_store %arg22[%c0_28, %c0_29], %34 {strides = array<i32>} : memref<16x32xf32, #tpu.memory_space<vmem>>, vector<8x8xf32>,
    %36 = vector.extract_strided_slice %20 {offsets = [0, 8], sizes = [8, 8], strides = [1, 1]} : vector<16x96xf32> to vector<8x8xf32>
    %37 = vector.extract_strided_slice %20 {offsets = [0, 40], sizes = [8, 8], strides = [1, 1]} : vector<16x96xf32> to vector<8x8xf32>
    %38 = vector.extract_strided_slice %20 {offsets = [0, 72], sizes = [8, 8], strides = [1, 1]} : vector<16x96xf32> to vector<8x8xf32>
    %cst_30 = arith.constant dense<0.000000e+00> : vector<8x8xf32>
    %39 = tpu.matmul %36, %37, %cst_30 {dimension_numbers = #tpu.dot_dimension_numbers<[1], [1], [0], [0], [0, 0, 1, 0], [], []>} : vector<8x8xf32>, vector<8x8xf32>, vector<8x8xf32> -> vector<8x8xf32>
    %cst_31 = arith.constant dense<0xFF800000> : vector<8xf32>
    %40 = vector.multi_reduction <maximumf>, %39, %cst_31 [1] : vector<8x8xf32> to vector<8xf32>
    %41 = vector.shape_cast %40 : vector<8xf32> to vector<8x1xf32>
    %42 = vector.broadcast %41 : vector<8x1xf32> to vector<8x8xf32>
    %43 = arith.subf %39, %42 : vector<8x8xf32>
    %44 = math.exp %43 : vector<8x8xf32>
    %cst_32 = arith.constant dense<0.000000e+00> : vector<8xf32>
    %45 = vector.multi_reduction <add>, %44, %cst_32 [1] : vector<8x8xf32> to vector<8xf32>
    %46 = vector.shape_cast %45 : vector<8xf32> to vector<8x1xf32>
    %cst_33 = arith.constant dense<0.000000e+00> : vector<8x8xf32>
    %47 = tpu.matmul %44, %38, %cst_33 {dimension_numbers = #tpu.dot_dimension_numbers<[1], [0], [0], [1], [0, 0, 1, 1], [], []>} : vector<8x8xf32>, vector<8x8xf32>, vector<8x8xf32> -> vector<8x8xf32>
    %48 = vector.broadcast %46 : vector<8x1xf32> to vector<8x8xf32>
    %49 = arith.divf %47, %48 : vector<8x8xf32>
    %c0_34 = arith.constant 0 : index
    %c8 = arith.constant 8 : index
    %50 = vector.load %arg22[%c0_34, %c8] : memref<16x32xf32, #tpu.memory_space<vmem>>, vector<8x8xf32>
    tpu.vector_store %arg22[%c0_34, %c8], %49 {strides = array<i32>} : memref<16x32xf32, #tpu.memory_space<vmem>>, vector<8x8xf32>,
    %51 = vector.extract_strided_slice %20 {offsets = [0, 16], sizes = [8, 8], strides = [1, 1]} : vector<16x96xf32> to vector<8x8xf32>
    %52 = vector.extract_strided_slice %20 {offsets = [0, 48], sizes = [8, 8], strides = [1, 1]} : vector<16x96xf32> to vector<8x8xf32>
    %53 = vector.extract_strided_slice %20 {offsets = [0, 80], sizes = [8, 8], strides = [1, 1]} : vector<16x96xf32> to vector<8x8xf32>
    %cst_35 = arith.constant dense<0.000000e+00> : vector<8x8xf32>
    %54 = tpu.matmul %51, %52, %cst_35 {dimension_numbers = #tpu.dot_dimension_numbers<[1], [1], [0], [0], [0, 0, 1, 0], [], []>} : vector<8x8xf32>, vector<8x8xf32>, vector<8x8xf32> -> vector<8x8xf32>
    %cst_36 = arith.constant dense<0xFF800000> : vector<8xf32>
    %55 = vector.multi_reduction <maximumf>, %54, %cst_36 [1] : vector<8x8xf32> to vector<8xf32>
    %56 = vector.shape_cast %55 : vector<8xf32> to vector<8x1xf32>
    %57 = vector.broadcast %56 : vector<8x1xf32> to vector<8x8xf32>
    %58 = arith.subf %54, %57 : vector<8x8xf32>
    %59 = math.exp %58 : vector<8x8xf32>
    %cst_37 = arith.constant dense<0.000000e+00> : vector<8xf32>
    %60 = vector.multi_reduction <add>, %59, %cst_37 [1] : vector<8x8xf32> to vector<8xf32>
    %61 = vector.shape_cast %60 : vector<8xf32> to vector<8x1xf32>
    %cst_38 = arith.constant dense<0.000000e+00> : vector<8x8xf32>
    %62 = tpu.matmul %59, %53, %cst_38 {dimension_numbers = #tpu.dot_dimension_numbers<[1], [0], [0], [1], [0, 0, 1, 1], [], []>} : vector<8x8xf32>, vector<8x8xf32>, vector<8x8xf32> -> vector<8x8xf32>
    %63 = vector.broadcast %61 : vector<8x1xf32> to vector<8x8xf32>
    %64 = arith.divf %62, %63 : vector<8x8xf32>
    %c0_39 = arith.constant 0 : index
    %c16 = arith.constant 16 : index
    %65 = vector.load %arg22[%c0_39, %c16] : memref<16x32xf32, #tpu.memory_space<vmem>>, vector<8x8xf32>
    tpu.vector_store %arg22[%c0_39, %c16], %64 {strides = array<i32>} : memref<16x32xf32, #tpu.memory_space<vmem>>, vector<8x8xf32>,
    %66 = vector.extract_strided_slice %20 {offsets = [0, 24], sizes = [8, 8], strides = [1, 1]} : vector<16x96xf32> to vector<8x8xf32>
    %67 = vector.extract_strided_slice %20 {offsets = [0, 56], sizes = [8, 8], strides = [1, 1]} : vector<16x96xf32> to vector<8x8xf32>
    %68 = vector.extract_strided_slice %20 {offsets = [0, 88], sizes = [8, 8], strides = [1, 1]} : vector<16x96xf32> to vector<8x8xf32>
    %cst_40 = arith.constant dense<0.000000e+00> : vector<8x8xf32>
    %69 = tpu.matmul %66, %67, %cst_40 {dimension_numbers = #tpu.dot_dimension_numbers<[1], [1], [0], [0], [0, 0, 1, 0], [], []>} : vector<8x8xf32>, vector<8x8xf32>, vector<8x8xf32> -> vector<8x8xf32>
    %cst_41 = arith.constant dense<0xFF800000> : vector<8xf32>
    %70 = vector.multi_reduction <maximumf>, %69, %cst_41 [1] : vector<8x8xf32> to vector<8xf32>
    %71 = vector.shape_cast %70 : vector<8xf32> to vector<8x1xf32>
    %72 = vector.broadcast %71 : vector<8x1xf32> to vector<8x8xf32>
    %73 = arith.subf %69, %72 : vector<8x8xf32>
    %74 = math.exp %73 : vector<8x8xf32>
    %cst_42 = arith.constant dense<0.000000e+00> : vector<8xf32>
    %75 = vector.multi_reduction <add>, %74, %cst_42 [1] : vector<8x8xf32> to vector<8xf32>
    %76 = vector.shape_cast %75 : vector<8xf32> to vector<8x1xf32>
    %cst_43 = arith.constant dense<0.000000e+00> : vector<8x8xf32>
    %77 = tpu.matmul %74, %68, %cst_43 {dimension_numbers = #tpu.dot_dimension_numbers<[1], [0], [0], [1], [0, 0, 1, 1], [], []>} : vector<8x8xf32>, vector<8x8xf32>, vector<8x8xf32> -> vector<8x8xf32>
    %78 = vector.broadcast %76 : vector<8x1xf32> to vector<8x8xf32>
    %79 = arith.divf %77, %78 : vector<8x8xf32>
    %c0_44 = arith.constant 0 : index
    %c24 = arith.constant 24 : index
    %80 = vector.load %arg22[%c0_44, %c24] : memref<16x32xf32, #tpu.memory_space<vmem>>, vector<8x8xf32>
    tpu.vector_store %arg22[%c0_44, %c24], %79 {strides = array<i32>} : memref<16x32xf32, #tpu.memory_space<vmem>>, vector<8x8xf32>,
    %81 = vector.extract_strided_slice %20 {offsets = [8, 0], sizes = [8, 8], strides = [1, 1]} : vector<16x96xf32> to vector<8x8xf32>
    %82 = vector.extract_strided_slice %20 {offsets = [8, 32], sizes = [8, 8], strides = [1, 1]} : vector<16x96xf32> to vector<8x8xf32>
    %83 = vector.extract_strided_slice %20 {offsets = [8, 64], sizes = [8, 8], strides = [1, 1]} : vector<16x96xf32> to vector<8x8xf32>
    %cst_45 = arith.constant dense<0.000000e+00> : vector<8x8xf32>
    %84 = tpu.matmul %81, %82, %cst_45 {dimension_numbers = #tpu.dot_dimension_numbers<[1], [1], [0], [0], [0, 0, 1, 0], [], []>} : vector<8x8xf32>, vector<8x8xf32>, vector<8x8xf32> -> vector<8x8xf32>
    %cst_46 = arith.constant dense<0xFF800000> : vector<8xf32>
    %85 = vector.multi_reduction <maximumf>, %84, %cst_46 [1] : vector<8x8xf32> to vector<8xf32>
    %86 = vector.shape_cast %85 : vector<8xf32> to vector<8x1xf32>
    %87 = vector.broadcast %86 : vector<8x1xf32> to vector<8x8xf32>
    %88 = arith.subf %84, %87 : vector<8x8xf32>
    %89 = math.exp %88 : vector<8x8xf32>
    %cst_47 = arith.constant dense<0.000000e+00> : vector<8xf32>
    %90 = vector.multi_reduction <add>, %89, %cst_47 [1] : vector<8x8xf32> to vector<8xf32>
    %91 = vector.shape_cast %90 : vector<8xf32> to vector<8x1xf32>
    %cst_48 = arith.constant dense<0.000000e+00> : vector<8x8xf32>
    %92 = tpu.matmul %89, %83, %cst_48 {dimension_numbers = #tpu.dot_dimension_numbers<[1], [0], [0], [1], [0, 0, 1, 1], [], []>} : vector<8x8xf32>, vector<8x8xf32>, vector<8x8xf32> -> vector<8x8xf32>
    %93 = vector.broadcast %91 : vector<8x1xf32> to vector<8x8xf32>
    %94 = arith.divf %92, %93 : vector<8x8xf32>
    %c8_49 = arith.constant 8 : index
    %c0_50 = arith.constant 0 : index
    %95 = vector.load %arg22[%c8_49, %c0_50] : memref<16x32xf32, #tpu.memory_space<vmem>>, vector<8x8xf32>
    tpu.vector_store %arg22[%c8_49, %c0_50], %94 {strides = array<i32>} : memref<16x32xf32, #tpu.memory_space<vmem>>, vector<8x8xf32>,
    %96 = vector.extract_strided_slice %20 {offsets = [8, 8], sizes = [8, 8], strides = [1, 1]} : vector<16x96xf32> to vector<8x8xf32>
    %97 = vector.extract_strided_slice %20 {offsets = [8, 40], sizes = [8, 8], strides = [1, 1]} : vector<16x96xf32> to vector<8x8xf32>
    %98 = vector.extract_strided_slice %20 {offsets = [8, 72], sizes = [8, 8], strides = [1, 1]} : vector<16x96xf32> to vector<8x8xf32>
    %cst_51 = arith.constant dense<0.000000e+00> : vector<8x8xf32>
    %99 = tpu.matmul %96, %97, %cst_51 {dimension_numbers = #tpu.dot_dimension_numbers<[1], [1], [0], [0], [0, 0, 1, 0], [], []>} : vector<8x8xf32>, vector<8x8xf32>, vector<8x8xf32> -> vector<8x8xf32>
    %cst_52 = arith.constant dense<0xFF800000> : vector<8xf32>
    %100 = vector.multi_reduction <maximumf>, %99, %cst_52 [1] : vector<8x8xf32> to vector<8xf32>
    %101 = vector.shape_cast %100 : vector<8xf32> to vector<8x1xf32>
    %102 = vector.broadcast %101 : vector<8x1xf32> to vector<8x8xf32>
    %103 = arith.subf %99, %102 : vector<8x8xf32>
    %104 = math.exp %103 : vector<8x8xf32>
    %cst_53 = arith.constant dense<0.000000e+00> : vector<8xf32>
    %105 = vector.multi_reduction <add>, %104, %cst_53 [1] : vector<8x8xf32> to vector<8xf32>
    %106 = vector.shape_cast %105 : vector<8xf32> to vector<8x1xf32>
    %cst_54 = arith.constant dense<0.000000e+00> : vector<8x8xf32>
    %107 = tpu.matmul %104, %98, %cst_54 {dimension_numbers = #tpu.dot_dimension_numbers<[1], [0], [0], [1], [0, 0, 1, 1], [], []>} : vector<8x8xf32>, vector<8x8xf32>, vector<8x8xf32> -> vector<8x8xf32>
    %108 = vector.broadcast %106 : vector<8x1xf32> to vector<8x8xf32>
    %109 = arith.divf %107, %108 : vector<8x8xf32>
    %c8_55 = arith.constant 8 : index
    %c8_56 = arith.constant 8 : index
    %110 = vector.load %arg22[%c8_55, %c8_56] : memref<16x32xf32, #tpu.memory_space<vmem>>, vector<8x8xf32>
    tpu.vector_store %arg22[%c8_55, %c8_56], %109 {strides = array<i32>} : memref<16x32xf32, #tpu.memory_space<vmem>>, vector<8x8xf32>,
    %111 = vector.extract_strided_slice %20 {offsets = [8, 16], sizes = [8, 8], strides = [1, 1]} : vector<16x96xf32> to vector<8x8xf32>
    %112 = vector.extract_strided_slice %20 {offsets = [8, 48], sizes = [8, 8], strides = [1, 1]} : vector<16x96xf32> to vector<8x8xf32>
    %113 = vector.extract_strided_slice %20 {offsets = [8, 80], sizes = [8, 8], strides = [1, 1]} : vector<16x96xf32> to vector<8x8xf32>
    %cst_57 = arith.constant dense<0.000000e+00> : vector<8x8xf32>
    %114 = tpu.matmul %111, %112, %cst_57 {dimension_numbers = #tpu.dot_dimension_numbers<[1], [1], [0], [0], [0, 0, 1, 0], [], []>} : vector<8x8xf32>, vector<8x8xf32>, vector<8x8xf32> -> vector<8x8xf32>
    %cst_58 = arith.constant dense<0xFF800000> : vector<8xf32>
    %115 = vector.multi_reduction <maximumf>, %114, %cst_58 [1] : vector<8x8xf32> to vector<8xf32>
    %116 = vector.shape_cast %115 : vector<8xf32> to vector<8x1xf32>
    %117 = vector.broadcast %116 : vector<8x1xf32> to vector<8x8xf32>
    %118 = arith.subf %114, %117 : vector<8x8xf32>
    %119 = math.exp %118 : vector<8x8xf32>
    %cst_59 = arith.constant dense<0.000000e+00> : vector<8xf32>
    %120 = vector.multi_reduction <add>, %119, %cst_59 [1] : vector<8x8xf32> to vector<8xf32>
    %121 = vector.shape_cast %120 : vector<8xf32> to vector<8x1xf32>
    %cst_60 = arith.constant dense<0.000000e+00> : vector<8x8xf32>
    %122 = tpu.matmul %119, %113, %cst_60 {dimension_numbers = #tpu.dot_dimension_numbers<[1], [0], [0], [1], [0, 0, 1, 1], [], []>} : vector<8x8xf32>, vector<8x8xf32>, vector<8x8xf32> -> vector<8x8xf32>
    %123 = vector.broadcast %121 : vector<8x1xf32> to vector<8x8xf32>
    %124 = arith.divf %122, %123 : vector<8x8xf32>
    %c8_61 = arith.constant 8 : index
    %c16_62 = arith.constant 16 : index
    %125 = vector.load %arg22[%c8_61, %c16_62] : memref<16x32xf32, #tpu.memory_space<vmem>>, vector<8x8xf32>
    tpu.vector_store %arg22[%c8_61, %c16_62], %124 {strides = array<i32>} : memref<16x32xf32, #tpu.memory_space<vmem>>, vector<8x8xf32>,
    %126 = vector.extract_strided_slice %20 {offsets = [8, 24], sizes = [8, 8], strides = [1, 1]} : vector<16x96xf32> to vector<8x8xf32>
    %127 = vector.extract_strided_slice %20 {offsets = [8, 56], sizes = [8, 8], strides = [1, 1]} : vector<16x96xf32> to vector<8x8xf32>
    %128 = vector.extract_strided_slice %20 {offsets = [8, 88], sizes = [8, 8], strides = [1, 1]} : vector<16x96xf32> to vector<8x8xf32>
    %cst_63 = arith.constant dense<0.000000e+00> : vector<8x8xf32>
    %129 = tpu.matmul %126, %127, %cst_63 {dimension_numbers = #tpu.dot_dimension_numbers<[1], [1], [0], [0], [0, 0, 1, 0], [], []>} : vector<8x8xf32>, vector<8x8xf32>, vector<8x8xf32> -> vector<8x8xf32>
    %cst_64 = arith.constant dense<0xFF800000> : vector<8xf32>
    %130 = vector.multi_reduction <maximumf>, %129, %cst_64 [1] : vector<8x8xf32> to vector<8xf32>
    %131 = vector.shape_cast %130 : vector<8xf32> to vector<8x1xf32>
    %132 = vector.broadcast %131 : vector<8x1xf32> to vector<8x8xf32>
    %133 = arith.subf %129, %132 : vector<8x8xf32>
    %134 = math.exp %133 : vector<8x8xf32>
    %cst_65 = arith.constant dense<0.000000e+00> : vector<8xf32>
    %135 = vector.multi_reduction <add>, %134, %cst_65 [1] : vector<8x8xf32> to vector<8xf32>
    %136 = vector.shape_cast %135 : vector<8xf32> to vector<8x1xf32>
    %cst_66 = arith.constant dense<0.000000e+00> : vector<8x8xf32>
    %137 = tpu.matmul %134, %128, %cst_66 {dimension_numbers = #tpu.dot_dimension_numbers<[1], [0], [0], [1], [0, 0, 1, 1], [], []>} : vector<8x8xf32>, vector<8x8xf32>, vector<8x8xf32> -> vector<8x8xf32>
    %138 = vector.broadcast %136 : vector<8x1xf32> to vector<8x8xf32>
    %139 = arith.divf %137, %138 : vector<8x8xf32>
    %c8_67 = arith.constant 8 : index
    %c24_68 = arith.constant 24 : index
    %140 = vector.load %arg22[%c8_67, %c24_68] : memref<16x32xf32, #tpu.memory_space<vmem>>, vector<8x8xf32>
    tpu.vector_store %arg22[%c8_67, %c24_68], %139 {strides = array<i32>} : memref<16x32xf32, #tpu.memory_space<vmem>>, vector<8x8xf32>,
    %c0_69 = arith.constant 0 : index
    %c0_70 = arith.constant 0 : index
    %141 = vector.load %arg22[%c0_69, %c0_70] : memref<16x32xf32, #tpu.memory_space<vmem>>, vector<16x32xf32>
    %142 = arith.addf %14, %141 : vector<16x32xf32>
    %cst_71 = arith.constant dense<0.000000e+00> : vector<16xf32>
    %143 = vector.multi_reduction <add>, %142, %cst_71 [1] : vector<16x32xf32> to vector<16xf32>
    %144 = vector.shape_cast %143 : vector<16xf32> to vector<16x1xf32>
    %cst_72 = arith.constant 3.200000e+01 : f32
    %145 = vector.broadcast %cst_72 : f32 to vector<16x1xf32>
    %146 = arith.divf %144, %145 : vector<16x1xf32>
    %147 = vector.broadcast %146 : vector<16x1xf32> to vector<16x32xf32>
    %148 = arith.subf %142, %147 : vector<16x32xf32>
    %149 = arith.mulf %148, %148 : vector<16x32xf32>
    %cst_73 = arith.constant dense<0.000000e+00> : vector<16xf32>
    %150 = vector.multi_reduction <add>, %149, %cst_73 [1] : vector<16x32xf32> to vector<16xf32>
    %151 = vector.shape_cast %150 : vector<16xf32> to vector<16x1xf32>
    %cst_74 = arith.constant 3.200000e+01 : f32
    %152 = vector.broadcast %cst_74 : f32 to vector<16x1xf32>
    %153 = arith.divf %151, %152 : vector<16x1xf32>
    %cst_75 = arith.constant 9.99999974E-6 : f32
    %154 = vector.broadcast %cst_75 : f32 to vector<16x1xf32>
    %155 = arith.addf %153, %154 : vector<16x1xf32>
    %156 = math.rsqrt %155 : vector<16x1xf32>
    %157 = vector.broadcast %156 : vector<16x1xf32> to vector<16x32xf32>
    %158 = arith.mulf %148, %157 : vector<16x32xf32>
    %159 = vector.broadcast %16 : vector<1x32xf32> to vector<16x32xf32>
    %160 = arith.mulf %158, %159 : vector<16x32xf32>
    %161 = vector.broadcast %17 : vector<1x32xf32> to vector<16x32xf32>
    %162 = arith.addf %160, %161 : vector<16x32xf32>
    %cst_76 = arith.constant dense<0.000000e+00> : vector<16x32xf32>
    %163 = tpu.matmul %162, %18, %cst_76 {dimension_numbers = #tpu.dot_dimension_numbers<[1], [0], [0], [1], [0, 0, 1, 1], [], []>} : vector<16x32xf32>, vector<32x32xf32>, vector<16x32xf32> -> vector<16x32xf32>
    %164 = vector.broadcast %19 : vector<1x32xf32> to vector<16x32xf32>
    %165 = arith.addf %163, %164 : vector<16x32xf32>
    %cst_77 = arith.constant 0.000000e+00 : f32
    %166 = vector.broadcast %cst_77 : f32 to vector<16x32xf32>
    %167 = arith.maximumf %165, %166 : vector<16x32xf32>
    %168 = arith.addf %162, %167 : vector<16x32xf32>
    %c0_78 = arith.constant 0 : index
    %c0_79 = arith.constant 0 : index
    %169 = vector.load %arg11[%c0_78, %c0_79] : memref<1x32xf32, #tpu.memory_space<vmem>>, vector<1x32xf32>
    %c0_80 = arith.constant 0 : index
    %c0_81 = arith.constant 0 : index
    %170 = vector.load %arg12[%c0_80, %c0_81] : memref<1x32xf32, #tpu.memory_space<vmem>>, vector<1x32xf32>
    %cst_82 = arith.constant dense<0.000000e+00> : vector<16xf32>
    %171 = vector.multi_reduction <add>, %168, %cst_82 [1] : vector<16x32xf32> to vector<16xf32>
    %172 = vector.shape_cast %171 : vector<16xf32> to vector<16x1xf32>
    %cst_83 = arith.constant 3.200000e+01 : f32
    %173 = vector.broadcast %cst_83 : f32 to vector<16x1xf32>
    %174 = arith.divf %172, %173 : vector<16x1xf32>
    %175 = vector.broadcast %174 : vector<16x1xf32> to vector<16x32xf32>
    %176 = arith.subf %168, %175 : vector<16x32xf32>
    %177 = arith.mulf %176, %176 : vector<16x32xf32>
    %cst_84 = arith.constant dense<0.000000e+00> : vector<16xf32>
    %178 = vector.multi_reduction <add>, %177, %cst_84 [1] : vector<16x32xf32> to vector<16xf32>
    %179 = vector.shape_cast %178 : vector<16xf32> to vector<16x1xf32>
    %cst_85 = arith.constant 3.200000e+01 : f32
    %180 = vector.broadcast %cst_85 : f32 to vector<16x1xf32>
    %181 = arith.divf %179, %180 : vector<16x1xf32>
    %cst_86 = arith.constant 9.99999974E-6 : f32
    %182 = vector.broadcast %cst_86 : f32 to vector<16x1xf32>
    %183 = arith.addf %181, %182 : vector<16x1xf32>
    %184 = math.rsqrt %183 : vector<16x1xf32>
    %185 = vector.broadcast %184 : vector<16x1xf32> to vector<16x32xf32>
    %186 = arith.mulf %176, %185 : vector<16x32xf32>
    %187 = vector.broadcast %169 : vector<1x32xf32> to vector<16x32xf32>
    %188 = arith.mulf %186, %187 : vector<16x32xf32>
    %189 = vector.broadcast %170 : vector<1x32xf32> to vector<16x32xf32>
    %190 = arith.addf %188, %189 : vector<16x32xf32>
    %c0_87 = arith.constant 0 : index
    %c0_88 = arith.constant 0 : index
    %191 = vector.load %arg13[%c0_87, %c0_88] : memref<32x96xf32, #tpu.memory_space<vmem>>, vector<32x96xf32>
    %c0_89 = arith.constant 0 : index
    %c0_90 = arith.constant 0 : index
    %192 = vector.load %arg14[%c0_89, %c0_90] : memref<1x32xf32, #tpu.memory_space<vmem>>, vector<1x32xf32>
    %c0_91 = arith.constant 0 : index
    %c0_92 = arith.constant 0 : index
    %193 = vector.load %arg15[%c0_91, %c0_92] : memref<1x32xf32, #tpu.memory_space<vmem>>, vector<1x32xf32>
    %c0_93 = arith.constant 0 : index
    %c0_94 = arith.constant 0 : index
    %194 = vector.load %arg16[%c0_93, %c0_94] : memref<32x32xf32, #tpu.memory_space<vmem>>, vector<32x32xf32>
    %c0_95 = arith.constant 0 : index
    %c0_96 = arith.constant 0 : index
    %195 = vector.load %arg17[%c0_95, %c0_96] : memref<1x32xf32, #tpu.memory_space<vmem>>, vector<1x32xf32>
    %cst_97 = arith.constant dense<0.000000e+00> : vector<16x96xf32>
    %196 = tpu.matmul %190, %191, %cst_97 {dimension_numbers = #tpu.dot_dimension_numbers<[1], [0], [0], [1], [0, 0, 1, 1], [], []>} : vector<16x32xf32>, vector<32x96xf32>, vector<16x96xf32> -> vector<16x96xf32>
    %197 = vector.extract_strided_slice %196 {offsets = [0, 0], sizes = [8, 8], strides = [1, 1]} : vector<16x96xf32> to vector<8x8xf32>
    %198 = vector.extract_strided_slice %196 {offsets = [0, 32], sizes = [8, 8], strides = [1, 1]} : vector<16x96xf32> to vector<8x8xf32>
    %199 = vector.extract_strided_slice %196 {offsets = [0, 64], sizes = [8, 8], strides = [1, 1]} : vector<16x96xf32> to vector<8x8xf32>
    %cst_98 = arith.constant dense<0.000000e+00> : vector<8x8xf32>
    %200 = tpu.matmul %197, %198, %cst_98 {dimension_numbers = #tpu.dot_dimension_numbers<[1], [1], [0], [0], [0, 0, 1, 0], [], []>} : vector<8x8xf32>, vector<8x8xf32>, vector<8x8xf32> -> vector<8x8xf32>
    %cst_99 = arith.constant dense<0xFF800000> : vector<8xf32>
    %201 = vector.multi_reduction <maximumf>, %200, %cst_99 [1] : vector<8x8xf32> to vector<8xf32>
    %202 = vector.shape_cast %201 : vector<8xf32> to vector<8x1xf32>
    %203 = vector.broadcast %202 : vector<8x1xf32> to vector<8x8xf32>
    %204 = arith.subf %200, %203 : vector<8x8xf32>
    %205 = math.exp %204 : vector<8x8xf32>
    %cst_100 = arith.constant dense<0.000000e+00> : vector<8xf32>
    %206 = vector.multi_reduction <add>, %205, %cst_100 [1] : vector<8x8xf32> to vector<8xf32>
    %207 = vector.shape_cast %206 : vector<8xf32> to vector<8x1xf32>
    %cst_101 = arith.constant dense<0.000000e+00> : vector<8x8xf32>
    %208 = tpu.matmul %205, %199, %cst_101 {dimension_numbers = #tpu.dot_dimension_numbers<[1], [0], [0], [1], [0, 0, 1, 1], [], []>} : vector<8x8xf32>, vector<8x8xf32>, vector<8x8xf32> -> vector<8x8xf32>
    %209 = vector.broadcast %207 : vector<8x1xf32> to vector<8x8xf32>
    %210 = arith.divf %208, %209 : vector<8x8xf32>
    %c0_102 = arith.constant 0 : index
    %c0_103 = arith.constant 0 : index
    %211 = vector.load %arg22[%c0_102, %c0_103] : memref<16x32xf32, #tpu.memory_space<vmem>>, vector<8x8xf32>
    tpu.vector_store %arg22[%c0_102, %c0_103], %210 {strides = array<i32>} : memref<16x32xf32, #tpu.memory_space<vmem>>, vector<8x8xf32>,
    %212 = vector.extract_strided_slice %196 {offsets = [0, 8], sizes = [8, 8], strides = [1, 1]} : vector<16x96xf32> to vector<8x8xf32>
    %213 = vector.extract_strided_slice %196 {offsets = [0, 40], sizes = [8, 8], strides = [1, 1]} : vector<16x96xf32> to vector<8x8xf32>
    %214 = vector.extract_strided_slice %196 {offsets = [0, 72], sizes = [8, 8], strides = [1, 1]} : vector<16x96xf32> to vector<8x8xf32>
    %cst_104 = arith.constant dense<0.000000e+00> : vector<8x8xf32>
    %215 = tpu.matmul %212, %213, %cst_104 {dimension_numbers = #tpu.dot_dimension_numbers<[1], [1], [0], [0], [0, 0, 1, 0], [], []>} : vector<8x8xf32>, vector<8x8xf32>, vector<8x8xf32> -> vector<8x8xf32>
    %cst_105 = arith.constant dense<0xFF800000> : vector<8xf32>
    %216 = vector.multi_reduction <maximumf>, %215, %cst_105 [1] : vector<8x8xf32> to vector<8xf32>
    %217 = vector.shape_cast %216 : vector<8xf32> to vector<8x1xf32>
    %218 = vector.broadcast %217 : vector<8x1xf32> to vector<8x8xf32>
    %219 = arith.subf %215, %218 : vector<8x8xf32>
    %220 = math.exp %219 : vector<8x8xf32>
    %cst_106 = arith.constant dense<0.000000e+00> : vector<8xf32>
    %221 = vector.multi_reduction <add>, %220, %cst_106 [1] : vector<8x8xf32> to vector<8xf32>
    %222 = vector.shape_cast %221 : vector<8xf32> to vector<8x1xf32>
    %cst_107 = arith.constant dense<0.000000e+00> : vector<8x8xf32>
    %223 = tpu.matmul %220, %214, %cst_107 {dimension_numbers = #tpu.dot_dimension_numbers<[1], [0], [0], [1], [0, 0, 1, 1], [], []>} : vector<8x8xf32>, vector<8x8xf32>, vector<8x8xf32> -> vector<8x8xf32>
    %224 = vector.broadcast %222 : vector<8x1xf32> to vector<8x8xf32>
    %225 = arith.divf %223, %224 : vector<8x8xf32>
    %c0_108 = arith.constant 0 : index
    %c8_109 = arith.constant 8 : index
    %226 = vector.load %arg22[%c0_108, %c8_109] : memref<16x32xf32, #tpu.memory_space<vmem>>, vector<8x8xf32>
    tpu.vector_store %arg22[%c0_108, %c8_109], %225 {strides = array<i32>} : memref<16x32xf32, #tpu.memory_space<vmem>>, vector<8x8xf32>,
    %227 = vector.extract_strided_slice %196 {offsets = [0, 16], sizes = [8, 8], strides = [1, 1]} : vector<16x96xf32> to vector<8x8xf32>
    %228 = vector.extract_strided_slice %196 {offsets = [0, 48], sizes = [8, 8], strides = [1, 1]} : vector<16x96xf32> to vector<8x8xf32>
    %229 = vector.extract_strided_slice %196 {offsets = [0, 80], sizes = [8, 8], strides = [1, 1]} : vector<16x96xf32> to vector<8x8xf32>
    %cst_110 = arith.constant dense<0.000000e+00> : vector<8x8xf32>
    %230 = tpu.matmul %227, %228, %cst_110 {dimension_numbers = #tpu.dot_dimension_numbers<[1], [1], [0], [0], [0, 0, 1, 0], [], []>} : vector<8x8xf32>, vector<8x8xf32>, vector<8x8xf32> -> vector<8x8xf32>
    %cst_111 = arith.constant dense<0xFF800000> : vector<8xf32>
    %231 = vector.multi_reduction <maximumf>, %230, %cst_111 [1] : vector<8x8xf32> to vector<8xf32>
    %232 = vector.shape_cast %231 : vector<8xf32> to vector<8x1xf32>
    %233 = vector.broadcast %232 : vector<8x1xf32> to vector<8x8xf32>
    %234 = arith.subf %230, %233 : vector<8x8xf32>
    %235 = math.exp %234 : vector<8x8xf32>
    %cst_112 = arith.constant dense<0.000000e+00> : vector<8xf32>
    %236 = vector.multi_reduction <add>, %235, %cst_112 [1] : vector<8x8xf32> to vector<8xf32>
    %237 = vector.shape_cast %236 : vector<8xf32> to vector<8x1xf32>
    %cst_113 = arith.constant dense<0.000000e+00> : vector<8x8xf32>
    %238 = tpu.matmul %235, %229, %cst_113 {dimension_numbers = #tpu.dot_dimension_numbers<[1], [0], [0], [1], [0, 0, 1, 1], [], []>} : vector<8x8xf32>, vector<8x8xf32>, vector<8x8xf32> -> vector<8x8xf32>
    %239 = vector.broadcast %237 : vector<8x1xf32> to vector<8x8xf32>
    %240 = arith.divf %238, %239 : vector<8x8xf32>
    %c0_114 = arith.constant 0 : index
    %c16_115 = arith.constant 16 : index
    %241 = vector.load %arg22[%c0_114, %c16_115] : memref<16x32xf32, #tpu.memory_space<vmem>>, vector<8x8xf32>
    tpu.vector_store %arg22[%c0_114, %c16_115], %240 {strides = array<i32>} : memref<16x32xf32, #tpu.memory_space<vmem>>, vector<8x8xf32>,
    %242 = vector.extract_strided_slice %196 {offsets = [0, 24], sizes = [8, 8], strides = [1, 1]} : vector<16x96xf32> to vector<8x8xf32>
    %243 = vector.extract_strided_slice %196 {offsets = [0, 56], sizes = [8, 8], strides = [1, 1]} : vector<16x96xf32> to vector<8x8xf32>
    %244 = vector.extract_strided_slice %196 {offsets = [0, 88], sizes = [8, 8], strides = [1, 1]} : vector<16x96xf32> to vector<8x8xf32>
    %cst_116 = arith.constant dense<0.000000e+00> : vector<8x8xf32>
    %245 = tpu.matmul %242, %243, %cst_116 {dimension_numbers = #tpu.dot_dimension_numbers<[1], [1], [0], [0], [0, 0, 1, 0], [], []>} : vector<8x8xf32>, vector<8x8xf32>, vector<8x8xf32> -> vector<8x8xf32>
    %cst_117 = arith.constant dense<0xFF800000> : vector<8xf32>
    %246 = vector.multi_reduction <maximumf>, %245, %cst_117 [1] : vector<8x8xf32> to vector<8xf32>
    %247 = vector.shape_cast %246 : vector<8xf32> to vector<8x1xf32>
    %248 = vector.broadcast %247 : vector<8x1xf32> to vector<8x8xf32>
    %249 = arith.subf %245, %248 : vector<8x8xf32>
    %250 = math.exp %249 : vector<8x8xf32>
    %cst_118 = arith.constant dense<0.000000e+00> : vector<8xf32>
    %251 = vector.multi_reduction <add>, %250, %cst_118 [1] : vector<8x8xf32> to vector<8xf32>
    %252 = vector.shape_cast %251 : vector<8xf32> to vector<8x1xf32>
    %cst_119 = arith.constant dense<0.000000e+00> : vector<8x8xf32>
    %253 = tpu.matmul %250, %244, %cst_119 {dimension_numbers = #tpu.dot_dimension_numbers<[1], [0], [0], [1], [0, 0, 1, 1], [], []>} : vector<8x8xf32>, vector<8x8xf32>, vector<8x8xf32> -> vector<8x8xf32>
    %254 = vector.broadcast %252 : vector<8x1xf32> to vector<8x8xf32>
    %255 = arith.divf %253, %254 : vector<8x8xf32>
    %c0_120 = arith.constant 0 : index
    %c24_121 = arith.constant 24 : index
    %256 = vector.load %arg22[%c0_120, %c24_121] : memref<16x32xf32, #tpu.memory_space<vmem>>, vector<8x8xf32>
    tpu.vector_store %arg22[%c0_120, %c24_121], %255 {strides = array<i32>} : memref<16x32xf32, #tpu.memory_space<vmem>>, vector<8x8xf32>,
    %257 = vector.extract_strided_slice %196 {offsets = [8, 0], sizes = [8, 8], strides = [1, 1]} : vector<16x96xf32> to vector<8x8xf32>
    %258 = vector.extract_strided_slice %196 {offsets = [8, 32], sizes = [8, 8], strides = [1, 1]} : vector<16x96xf32> to vector<8x8xf32>
    %259 = vector.extract_strided_slice %196 {offsets = [8, 64], sizes = [8, 8], strides = [1, 1]} : vector<16x96xf32> to vector<8x8xf32>
    %cst_122 = arith.constant dense<0.000000e+00> : vector<8x8xf32>
    %260 = tpu.matmul %257, %258, %cst_122 {dimension_numbers = #tpu.dot_dimension_numbers<[1], [1], [0], [0], [0, 0, 1, 0], [], []>} : vector<8x8xf32>, vector<8x8xf32>, vector<8x8xf32> -> vector<8x8xf32>
    %cst_123 = arith.constant dense<0xFF800000> : vector<8xf32>
    %261 = vector.multi_reduction <maximumf>, %260, %cst_123 [1] : vector<8x8xf32> to vector<8xf32>
    %262 = vector.shape_cast %261 : vector<8xf32> to vector<8x1xf32>
    %263 = vector.broadcast %262 : vector<8x1xf32> to vector<8x8xf32>
    %264 = arith.subf %260, %263 : vector<8x8xf32>
    %265 = math.exp %264 : vector<8x8xf32>
    %cst_124 = arith.constant dense<0.000000e+00> : vector<8xf32>
    %266 = vector.multi_reduction <add>, %265, %cst_124 [1] : vector<8x8xf32> to vector<8xf32>
    %267 = vector.shape_cast %266 : vector<8xf32> to vector<8x1xf32>
    %cst_125 = arith.constant dense<0.000000e+00> : vector<8x8xf32>
    %268 = tpu.matmul %265, %259, %cst_125 {dimension_numbers = #tpu.dot_dimension_numbers<[1], [0], [0], [1], [0, 0, 1, 1], [], []>} : vector<8x8xf32>, vector<8x8xf32>, vector<8x8xf32> -> vector<8x8xf32>
    %269 = vector.broadcast %267 : vector<8x1xf32> to vector<8x8xf32>
    %270 = arith.divf %268, %269 : vector<8x8xf32>
    %c8_126 = arith.constant 8 : index
    %c0_127 = arith.constant 0 : index
    %271 = vector.load %arg22[%c8_126, %c0_127] : memref<16x32xf32, #tpu.memory_space<vmem>>, vector<8x8xf32>
    tpu.vector_store %arg22[%c8_126, %c0_127], %270 {strides = array<i32>} : memref<16x32xf32, #tpu.memory_space<vmem>>, vector<8x8xf32>,
    %272 = vector.extract_strided_slice %196 {offsets = [8, 8], sizes = [8, 8], strides = [1, 1]} : vector<16x96xf32> to vector<8x8xf32>
    %273 = vector.extract_strided_slice %196 {offsets = [8, 40], sizes = [8, 8], strides = [1, 1]} : vector<16x96xf32> to vector<8x8xf32>
    %274 = vector.extract_strided_slice %196 {offsets = [8, 72], sizes = [8, 8], strides = [1, 1]} : vector<16x96xf32> to vector<8x8xf32>
    %cst_128 = arith.constant dense<0.000000e+00> : vector<8x8xf32>
    %275 = tpu.matmul %272, %273, %cst_128 {dimension_numbers = #tpu.dot_dimension_numbers<[1], [1], [0], [0], [0, 0, 1, 0], [], []>} : vector<8x8xf32>, vector<8x8xf32>, vector<8x8xf32> -> vector<8x8xf32>
    %cst_129 = arith.constant dense<0xFF800000> : vector<8xf32>
    %276 = vector.multi_reduction <maximumf>, %275, %cst_129 [1] : vector<8x8xf32> to vector<8xf32>
    %277 = vector.shape_cast %276 : vector<8xf32> to vector<8x1xf32>
    %278 = vector.broadcast %277 : vector<8x1xf32> to vector<8x8xf32>
    %279 = arith.subf %275, %278 : vector<8x8xf32>
    %280 = math.exp %279 : vector<8x8xf32>
    %cst_130 = arith.constant dense<0.000000e+00> : vector<8xf32>
    %281 = vector.multi_reduction <add>, %280, %cst_130 [1] : vector<8x8xf32> to vector<8xf32>
    %282 = vector.shape_cast %281 : vector<8xf32> to vector<8x1xf32>
    %cst_131 = arith.constant dense<0.000000e+00> : vector<8x8xf32>
    %283 = tpu.matmul %280, %274, %cst_131 {dimension_numbers = #tpu.dot_dimension_numbers<[1], [0], [0], [1], [0, 0, 1, 1], [], []>} : vector<8x8xf32>, vector<8x8xf32>, vector<8x8xf32> -> vector<8x8xf32>
    %284 = vector.broadcast %282 : vector<8x1xf32> to vector<8x8xf32>
    %285 = arith.divf %283, %284 : vector<8x8xf32>
    %c8_132 = arith.constant 8 : index
    %c8_133 = arith.constant 8 : index
    %286 = vector.load %arg22[%c8_132, %c8_133] : memref<16x32xf32, #tpu.memory_space<vmem>>, vector<8x8xf32>
    tpu.vector_store %arg22[%c8_132, %c8_133], %285 {strides = array<i32>} : memref<16x32xf32, #tpu.memory_space<vmem>>, vector<8x8xf32>,
    %287 = vector.extract_strided_slice %196 {offsets = [8, 16], sizes = [8, 8], strides = [1, 1]} : vector<16x96xf32> to vector<8x8xf32>
    %288 = vector.extract_strided_slice %196 {offsets = [8, 48], sizes = [8, 8], strides = [1, 1]} : vector<16x96xf32> to vector<8x8xf32>
    %289 = vector.extract_strided_slice %196 {offsets = [8, 80], sizes = [8, 8], strides = [1, 1]} : vector<16x96xf32> to vector<8x8xf32>
    %cst_134 = arith.constant dense<0.000000e+00> : vector<8x8xf32>
    %290 = tpu.matmul %287, %288, %cst_134 {dimension_numbers = #tpu.dot_dimension_numbers<[1], [1], [0], [0], [0, 0, 1, 0], [], []>} : vector<8x8xf32>, vector<8x8xf32>, vector<8x8xf32> -> vector<8x8xf32>
    %cst_135 = arith.constant dense<0xFF800000> : vector<8xf32>
    %291 = vector.multi_reduction <maximumf>, %290, %cst_135 [1] : vector<8x8xf32> to vector<8xf32>
    %292 = vector.shape_cast %291 : vector<8xf32> to vector<8x1xf32>
    %293 = vector.broadcast %292 : vector<8x1xf32> to vector<8x8xf32>
    %294 = arith.subf %290, %293 : vector<8x8xf32>
    %295 = math.exp %294 : vector<8x8xf32>
    %cst_136 = arith.constant dense<0.000000e+00> : vector<8xf32>
    %296 = vector.multi_reduction <add>, %295, %cst_136 [1] : vector<8x8xf32> to vector<8xf32>
    %297 = vector.shape_cast %296 : vector<8xf32> to vector<8x1xf32>
    %cst_137 = arith.constant dense<0.000000e+00> : vector<8x8xf32>
    %298 = tpu.matmul %295, %289, %cst_137 {dimension_numbers = #tpu.dot_dimension_numbers<[1], [0], [0], [1], [0, 0, 1, 1], [], []>} : vector<8x8xf32>, vector<8x8xf32>, vector<8x8xf32> -> vector<8x8xf32>
    %299 = vector.broadcast %297 : vector<8x1xf32> to vector<8x8xf32>
    %300 = arith.divf %298, %299 : vector<8x8xf32>
    %c8_138 = arith.constant 8 : index
    %c16_139 = arith.constant 16 : index
    %301 = vector.load %arg22[%c8_138, %c16_139] : memref<16x32xf32, #tpu.memory_space<vmem>>, vector<8x8xf32>
    tpu.vector_store %arg22[%c8_138, %c16_139], %300 {strides = array<i32>} : memref<16x32xf32, #tpu.memory_space<vmem>>, vector<8x8xf32>,
    %302 = vector.extract_strided_slice %196 {offsets = [8, 24], sizes = [8, 8], strides = [1, 1]} : vector<16x96xf32> to vector<8x8xf32>
    %303 = vector.extract_strided_slice %196 {offsets = [8, 56], sizes = [8, 8], strides = [1, 1]} : vector<16x96xf32> to vector<8x8xf32>
    %304 = vector.extract_strided_slice %196 {offsets = [8, 88], sizes = [8, 8], strides = [1, 1]} : vector<16x96xf32> to vector<8x8xf32>
    %cst_140 = arith.constant dense<0.000000e+00> : vector<8x8xf32>
    %305 = tpu.matmul %302, %303, %cst_140 {dimension_numbers = #tpu.dot_dimension_numbers<[1], [1], [0], [0], [0, 0, 1, 0], [], []>} : vector<8x8xf32>, vector<8x8xf32>, vector<8x8xf32> -> vector<8x8xf32>
    %cst_141 = arith.constant dense<0xFF800000> : vector<8xf32>
    %306 = vector.multi_reduction <maximumf>, %305, %cst_141 [1] : vector<8x8xf32> to vector<8xf32>
    %307 = vector.shape_cast %306 : vector<8xf32> to vector<8x1xf32>
    %308 = vector.broadcast %307 : vector<8x1xf32> to vector<8x8xf32>
    %309 = arith.subf %305, %308 : vector<8x8xf32>
    %310 = math.exp %309 : vector<8x8xf32>
    %cst_142 = arith.constant dense<0.000000e+00> : vector<8xf32>
    %311 = vector.multi_reduction <add>, %310, %cst_142 [1] : vector<8x8xf32> to vector<8xf32>
    %312 = vector.shape_cast %311 : vector<8xf32> to vector<8x1xf32>
    %cst_143 = arith.constant dense<0.000000e+00> : vector<8x8xf32>
    %313 = tpu.matmul %310, %304, %cst_143 {dimension_numbers = #tpu.dot_dimension_numbers<[1], [0], [0], [1], [0, 0, 1, 1], [], []>} : vector<8x8xf32>, vector<8x8xf32>, vector<8x8xf32> -> vector<8x8xf32>
    %314 = vector.broadcast %312 : vector<8x1xf32> to vector<8x8xf32>
    %315 = arith.divf %313, %314 : vector<8x8xf32>
    %c8_144 = arith.constant 8 : index
    %c24_145 = arith.constant 24 : index
    %316 = vector.load %arg22[%c8_144, %c24_145] : memref<16x32xf32, #tpu.memory_space<vmem>>, vector<8x8xf32>
    tpu.vector_store %arg22[%c8_144, %c24_145], %315 {strides = array<i32>} : memref<16x32xf32, #tpu.memory_space<vmem>>, vector<8x8xf32>,
    %c0_146 = arith.constant 0 : index
    %c0_147 = arith.constant 0 : index
    %317 = vector.load %arg22[%c0_146, %c0_147] : memref<16x32xf32, #tpu.memory_space<vmem>>, vector<16x32xf32>
    %318 = arith.addf %190, %317 : vector<16x32xf32>
    %cst_148 = arith.constant dense<0.000000e+00> : vector<16xf32>
    %319 = vector.multi_reduction <add>, %318, %cst_148 [1] : vector<16x32xf32> to vector<16xf32>
    %320 = vector.shape_cast %319 : vector<16xf32> to vector<16x1xf32>
    %cst_149 = arith.constant 3.200000e+01 : f32
    %321 = vector.broadcast %cst_149 : f32 to vector<16x1xf32>
    %322 = arith.divf %320, %321 : vector<16x1xf32>
    %323 = vector.broadcast %322 : vector<16x1xf32> to vector<16x32xf32>
    %324 = arith.subf %318, %323 : vector<16x32xf32>
    %325 = arith.mulf %324, %324 : vector<16x32xf32>
    %cst_150 = arith.constant dense<0.000000e+00> : vector<16xf32>
    %326 = vector.multi_reduction <add>, %325, %cst_150 [1] : vector<16x32xf32> to vector<16xf32>
    %327 = vector.shape_cast %326 : vector<16xf32> to vector<16x1xf32>
    %cst_151 = arith.constant 3.200000e+01 : f32
    %328 = vector.broadcast %cst_151 : f32 to vector<16x1xf32>
    %329 = arith.divf %327, %328 : vector<16x1xf32>
    %cst_152 = arith.constant 9.99999974E-6 : f32
    %330 = vector.broadcast %cst_152 : f32 to vector<16x1xf32>
    %331 = arith.addf %329, %330 : vector<16x1xf32>
    %332 = math.rsqrt %331 : vector<16x1xf32>
    %333 = vector.broadcast %332 : vector<16x1xf32> to vector<16x32xf32>
    %334 = arith.mulf %324, %333 : vector<16x32xf32>
    %335 = vector.broadcast %192 : vector<1x32xf32> to vector<16x32xf32>
    %336 = arith.mulf %334, %335 : vector<16x32xf32>
    %337 = vector.broadcast %193 : vector<1x32xf32> to vector<16x32xf32>
    %338 = arith.addf %336, %337 : vector<16x32xf32>
    %cst_153 = arith.constant dense<0.000000e+00> : vector<16x32xf32>
    %339 = tpu.matmul %338, %194, %cst_153 {dimension_numbers = #tpu.dot_dimension_numbers<[1], [0], [0], [1], [0, 0, 1, 1], [], []>} : vector<16x32xf32>, vector<32x32xf32>, vector<16x32xf32> -> vector<16x32xf32>
    %340 = vector.broadcast %195 : vector<1x32xf32> to vector<16x32xf32>
    %341 = arith.addf %339, %340 : vector<16x32xf32>
    %cst_154 = arith.constant 0.000000e+00 : f32
    %342 = vector.broadcast %cst_154 : f32 to vector<16x32xf32>
    %343 = arith.maximumf %341, %342 : vector<16x32xf32>
    %344 = arith.addf %338, %343 : vector<16x32xf32>
    %c0_155 = arith.constant 0 : index
    %c0_156 = arith.constant 0 : index
    %345 = vector.load %arg18[%c0_155, %c0_156] : memref<1x32xf32, #tpu.memory_space<vmem>>, vector<1x32xf32>
    %c0_157 = arith.constant 0 : index
    %c0_158 = arith.constant 0 : index
    %346 = vector.load %arg19[%c0_157, %c0_158] : memref<1x32xf32, #tpu.memory_space<vmem>>, vector<1x32xf32>
    %c0_159 = arith.constant 0 : index
    %c0_160 = arith.constant 0 : index
    %347 = vector.load %arg20[%c0_159, %c0_160] : memref<32x64xf32, #tpu.memory_space<vmem>>, vector<32x64xf32>
    %cst_161 = arith.constant dense<0.000000e+00> : vector<16xf32>
    %348 = vector.multi_reduction <add>, %344, %cst_161 [1] : vector<16x32xf32> to vector<16xf32>
    %349 = vector.shape_cast %348 : vector<16xf32> to vector<16x1xf32>
    %cst_162 = arith.constant 3.200000e+01 : f32
    %350 = vector.broadcast %cst_162 : f32 to vector<16x1xf32>
    %351 = arith.divf %349, %350 : vector<16x1xf32>
    %352 = vector.broadcast %351 : vector<16x1xf32> to vector<16x32xf32>
    %353 = arith.subf %344, %352 : vector<16x32xf32>
    %354 = arith.mulf %353, %353 : vector<16x32xf32>
    %cst_163 = arith.constant dense<0.000000e+00> : vector<16xf32>
    %355 = vector.multi_reduction <add>, %354, %cst_163 [1] : vector<16x32xf32> to vector<16xf32>
    %356 = vector.shape_cast %355 : vector<16xf32> to vector<16x1xf32>
    %cst_164 = arith.constant 3.200000e+01 : f32
    %357 = vector.broadcast %cst_164 : f32 to vector<16x1xf32>
    %358 = arith.divf %356, %357 : vector<16x1xf32>
    %cst_165 = arith.constant 9.99999974E-6 : f32
    %359 = vector.broadcast %cst_165 : f32 to vector<16x1xf32>
    %360 = arith.addf %358, %359 : vector<16x1xf32>
    %361 = math.rsqrt %360 : vector<16x1xf32>
    %362 = vector.broadcast %361 : vector<16x1xf32> to vector<16x32xf32>
    %363 = arith.mulf %353, %362 : vector<16x32xf32>
    %364 = vector.broadcast %345 : vector<1x32xf32> to vector<16x32xf32>
    %365 = arith.mulf %363, %364 : vector<16x32xf32>
    %366 = vector.broadcast %346 : vector<1x32xf32> to vector<16x32xf32>
    %367 = arith.addf %365, %366 : vector<16x32xf32>
    %cst_166 = arith.constant dense<0.000000e+00> : vector<16x64xf32>
    %368 = tpu.matmul %367, %347, %cst_166 {dimension_numbers = #tpu.dot_dimension_numbers<[1], [0], [0], [1], [0, 0, 1, 1], [], []>} : vector<16x32xf32>, vector<32x64xf32>, vector<16x64xf32> -> vector<16x64xf32>
    %c0_167 = arith.constant 0 : index
    %c0_168 = arith.constant 0 : index
    %369 = vector.load %arg21[%c0_167, %c0_168] : memref<16x64xf32, #tpu.memory_space<vmem>>, vector<16x64xf32>
    tpu.vector_store %arg21[%c0_167, %c0_168], %368 {strides = array<i32>} : memref<16x64xf32, #tpu.memory_space<vmem>>, vector<16x64xf32>,
    return
  }
}

</mosaic_0001>

<llo_original>
// kernel: encoder_forward.1
$region0: #{encoder_forward.1}
  #allocation0 [shape = 'u32[]', space=smem, size = 0x4, offset = 0x4, fixed_abs, tag = 'smem constant byte address 0x4 - core index']
  #allocation1 [shape = 'u32[144,128]{1,0:T(1,128)}', space=vmem, size = 0x12000, scoped, tag = 'internal scratch']
  #allocation2 [shape = 'f32[16,32]{1,0:T(8,128)}', space=vmem, size = 0x2000, scoped, tag = 'scratch operand']
  %s0 = inlined_call_operand.hbm [shape: f32[16,8], index: 0, kind: input, shape index: {}]
  %s1 = inlined_call_operand.vmem [shape: f32[16,32], index: 1, kind: input, shape index: {}]
  %s2 = inlined_call_operand.hbm [shape: f32[8,16], index: 2, kind: input, shape index: {}]
  %s3 = inlined_call_operand.vmem [shape: f32[1,16], index: 3, kind: input, shape index: {}]
  %s4 = inlined_call_operand.hbm [shape: f32[16,32], index: 4, kind: input, shape index: {}]
  %s5 = inlined_call_operand.hbm [shape: f32[1,32], index: 5, kind: input, shape index: {}]
  %s6 = inlined_call_operand.vmem [shape: f32[32,96], index: 6, kind: input, shape index: {}]
  %s7 = inlined_call_operand.hbm [shape: f32[1,32], index: 7, kind: input, shape index: {}]
  %s8 = inlined_call_operand.hbm [shape: f32[1,32], index: 8, kind: input, shape index: {}]
  %s9 = inlined_call_operand.vmem [shape: f32[32,32], index: 9, kind: input, shape index: {}]
  %s10 = inlined_call_operand.hbm [shape: f32[1,32], index: 10, kind: input, shape index: {}]
  %s11 = inlined_call_operand.vmem [shape: f32[1,32], index: 11, kind: input, shape index: {}]
  %s12 = inlined_call_operand.vmem [shape: f32[1,32], index: 12, kind: input, shape index: {}]
  %s13 = inlined_call_operand.hbm [shape: f32[32,96], index: 13, kind: input, shape index: {}]
  %s14 = inlined_call_operand.hbm [shape: f32[1,32], index: 14, kind: input, shape index: {}]
  %s15 = inlined_call_operand.hbm [shape: f32[1,32], index: 15, kind: input, shape index: {}]
  %s16 = inlined_call_operand.hbm [shape: f32[32,32], index: 16, kind: input, shape index: {}]
  %s17 = inlined_call_operand.hbm [shape: f32[1,32], index: 17, kind: input, shape index: {}]
  %s18 = inlined_call_operand.hbm [shape: f32[1,32], index: 18, kind: input, shape index: {}]
  %s19 = inlined_call_operand.hbm [shape: f32[1,32], index: 19, kind: input, shape index: {}]
  %s20 = inlined_call_operand.vmem [shape: f32[32,64], index: 20, kind: input, shape index: {}]
  %s21 = inlined_call_operand.vmem [shape: f32[16,64], index: 21, kind: output, shape index: {}]
  %s22 = sld [smem:[#allocation0]]
  $region150: #{encoder_forward.1} parent=0
    _
  %s24 = ssub.s32 1, %s22
  %s25 = scalar_select 0, %s24, %s22
  $region1: #{encoder_forward.1} parent=0
    #allocation3 [shape = 'u8[8192]{0}', space=vmem, size = 0x2000, scoped, tag = 'input window, operand 0, single buffered']
    #allocation4 [shape = 's32[1]{0}', space=sflag, size = 0x4, scoped, tag = 'scoped memory for encoder_forward.1']
    #allocation5 [shape = 'u8[4096]{0}', space=vmem, size = 0x1000, scoped, tag = 'input window, operand 2, single buffered']
    #allocation6 [shape = 's32[1]{0}', space=sflag, size = 0x4, scoped, tag = 'scoped memory for encoder_forward.1']
    #allocation7 [shape = 'u8[8192]{0}', space=vmem, size = 0x2000, scoped, tag = 'input window, operand 4, single buffered']
    #allocation8 [shape = 'u8[512]{0}', space=vmem, size = 0x400, scoped, tag = 'input window, operand 5, single buffered']
    #allocation9 [shape = 's32[1]{0}', space=sflag, size = 0x4, scoped, tag = 'scoped memory for encoder_forward.1']
    #allocation10 [shape = 'u8[512]{0}', space=vmem, size = 0x400, scoped, tag = 'input window, operand 7, single buffered']
    #allocation11 [shape = 'u8[512]{0}', space=vmem, size = 0x400, scoped, tag = 'input window, operand 8, single buffered']
    #allocation12 [shape = 's32[1]{0}', space=sflag, size = 0x4, scoped, tag = 'scoped memory for encoder_forward.1']
    #allocation13 [shape = 'u8[512]{0}', space=vmem, size = 0x400, scoped, tag = 'input window, operand 10, single buffered']
    #allocation14 [shape = 'u8[16384]{0}', space=vmem, size = 0x4000, scoped, tag = 'input window, operand 13, single buffered']
    #allocation15 [shape = 's32[1]{0}', space=sflag, size = 0x4, scoped, tag = 'scoped memory for encoder_forward.1']
    #allocation16 [shape = 'u8[512]{0}', space=vmem, size = 0x400, scoped, tag = 'input window, operand 14, single buffered']
    #allocation17 [shape = 'u8[512]{0}', space=vmem, size = 0x400, scoped, tag = 'input window, operand 15, single buffered']
    #allocation18 [shape = 's32[1]{0}', space=sflag, size = 0x4, scoped, tag = 'scoped memory for encoder_forward.1']
    #allocation19 [shape = 'u8[16384]{0}', space=vmem, size = 0x4000, scoped, tag = 'input window, operand 16, single buffered']
    #allocation20 [shape = 'u8[512]{0}', space=vmem, size = 0x400, scoped, tag = 'input window, operand 17, single buffered']
    #allocation21 [shape = 's32[1]{0}', space=sflag, size = 0x4, scoped, tag = 'scoped memory for encoder_forward.1']
    #allocation22 [shape = 'u8[512]{0}', space=vmem, size = 0x400, scoped, tag = 'input window, operand 18, single buffered']
    #allocation23 [shape = 'u8[512]{0}', space=vmem, size = 0x400, scoped, tag = 'input window, operand 19, single buffered']
    #allocation24 [shape = 's32[1]{0}', space=sflag, size = 0x4, scoped, tag = 'scoped memory for encoder_forward.1']
    %26 = vsyncpa [#allocation4], 0
    %27 = vsyncpa [#allocation6], 0
    %28 = vsyncpa [#allocation9], 0
    %29 = vsyncpa [#allocation12], 0
    %30 = vsyncpa [#allocation15], 0
    %31 = vsyncpa [#allocation18], 0
    %32 = vsyncpa [#allocation21], 0
    %33 = vsyncpa [#allocation24], 0
    // Predicated region
    $region2: #{encoder_forward.1} parent=1 // pred_check
      _
    $region3: #{encoder_forward.1} parent=1 // pred_check_branch
      %35 = sbr.rel (0) target = $region5
    $region4: #{encoder_forward.1} parent=1 // pred_region
      %s37 = ssub.s32 256, 256
      %38 = vsyncadd [#allocation4], %s37
      %s39 = sshll.u32 [#allocation3], 4
      %s40 = int_to_ptr.vmem [resolvable:$true] %s39
      %45 = dma.hbm_to_vmem [thread:$0]  %s0, 256, %s40, [#allocation4], 128, 128, 8
    $region5: #{encoder_forward.1} parent=1 // pred_fallthru
      _
    // Predicated region
    $region6: #{encoder_forward.1} parent=1 // pred_check
      _
    $region7: #{encoder_forward.1} parent=1 // pred_check_branch
      %47 = sbr.rel (0) target = $region9
    $region8: #{encoder_forward.1} parent=1 // pred_region
      _
    $region9: #{encoder_forward.1} parent=1 // pred_fallthru
      _
    // Predicated region
    $region10: #{encoder_forward.1} parent=1 // pred_check
      _
    $region11: #{encoder_forward.1} parent=1 // pred_check_branch
      %49 = sbr.rel (0) target = $region13
    $region12: #{encoder_forward.1} parent=1 // pred_region
      %s51 = ssub.s32 128, 128
      %52 = vsyncadd [#allocation6], %s51
      %s54 = sshll.u32 [#allocation5], 4
      %s55 = int_to_ptr.vmem [resolvable:$true] %s54
      %57 = dma.hbm_to_vmem [thread:$0]  %s2, 128, %s55, [#allocation6]
    $region13: #{encoder_forward.1} parent=1 // pred_fallthru
      _
    // Predicated region
    $region14: #{encoder_forward.1} parent=1 // pred_check
      _
    $region15: #{encoder_forward.1} parent=1 // pred_check_branch
      %59 = sbr.rel (0) target = $region17
    $region16: #{encoder_forward.1} parent=1 // pred_region
      _
    $region17: #{encoder_forward.1} parent=1 // pred_fallthru
      _
    // Predicated region
    $region18: #{encoder_forward.1} parent=1 // pred_check
      _
    $region19: #{encoder_forward.1} parent=1 // pred_check_branch
      %61 = sbr.rel (0) target = $region21
    $region20: #{encoder_forward.1} parent=1 // pred_region
      %s63 = ssub.s32 256, 256
      %64 = vsyncadd [#allocation6], %s63
      %s65 = sshll.u32 [#allocation7], 4
      %s66 = int_to_ptr.vmem [resolvable:$true] %s65
      %71 = dma.hbm_to_vmem [thread:$0]  %s4, 256, %s66, [#allocation6], 128, 128, 8
    $region21: #{encoder_forward.1} parent=1 // pred_fallthru
      _
    // Predicated region
    $region22: #{encoder_forward.1} parent=1 // pred_check
      _
    $region23: #{encoder_forward.1} parent=1 // pred_check_branch
      %73 = sbr.rel (0) target = $region25
    $region24: #{encoder_forward.1} parent=1 // pred_region
      %s75 = ssub.s32 16, 16
      %76 = vsyncadd [#allocation9], %s75
      %s78 = sshll.u32 [#allocation8], 4
      %s79 = int_to_ptr.vmem [resolvable:$true] %s78
      %81 = dma.hbm_to_vmem [thread:$0]  %s5, 16, %s79, [#allocation9]
    $region25: #{encoder_forward.1} parent=1 // pred_fallthru
      _
    // Predicated region
    $region26: #{encoder_forward.1} parent=1 // pred_check
      _
    $region27: #{encoder_forward.1} parent=1 // pred_check_branch
      %83 = sbr.rel (0) target = $region29
    $region28: #{encoder_forward.1} parent=1 // pred_region
      _
    $region29: #{encoder_forward.1} parent=1 // pred_fallthru
      _
    // Predicated region
    $region30: #{encoder_forward.1} parent=1 // pred_check
      _
    $region31: #{encoder_forward.1} parent=1 // pred_check_branch
      %85 = sbr.rel (0) target = $region33
    $region32: #{encoder_forward.1} parent=1 // pred_region
      %s87 = ssub.s32 16, 16
      %88 = vsyncadd [#allocation9], %s87
      %s90 = sshll.u32 [#allocation10], 4
      %s91 = int_to_ptr.vmem [resolvable:$true] %s90
      %93 = dma.hbm_to_vmem [thread:$0]  %s7, 16, %s91, [#allocation9]
    $region33: #{encoder_forward.1} parent=1 // pred_fallthru
      _
    // Predicated region
    $region34: #{encoder_forward.1} parent=1 // pred_check
      _
    $region35: #{encoder_forward.1} parent=1 // pred_check_branch
      %95 = sbr.rel (0) target = $region37
    $region36: #{encoder_forward.1} parent=1 // pred_region
      %s97 = ssub.s32 16, 16
      %98 = vsyncadd [#allocation12], %s97
      %s100 = sshll.u32 [#allocation11], 4
      %s101 = int_to_ptr.vmem [resolvable:$true] %s100
      %103 = dma.hbm_to_vmem [thread:$0]  %s8, 16, %s101, [#allocation12]
    $region37: #{encoder_forward.1} parent=1 // pred_fallthru
      _
    // Predicated region
    $region38: #{encoder_forward.1} parent=1 // pred_check
      _
    $region39: #{encoder_forward.1} parent=1 // pred_check_branch
      %105 = sbr.rel (0) target = $region41
    $region40: #{encoder_forward.1} parent=1 // pred_region
      _
    $region41: #{encoder_forward.1} parent=1 // pred_fallthru
      _
    // Predicated region
    $region42: #{encoder_forward.1} parent=1 // pred_check
      _
    $region43: #{encoder_forward.1} parent=1 // pred_check_branch
      %107 = sbr.rel (0) target = $region45
    $region44: #{encoder_forward.1} parent=1 // pred_region
      %s109 = ssub.s32 16, 16
      %110 = vsyncadd [#allocation12], %s109
      %s112 = sshll.u32 [#allocation13], 4
      %s113 = int_to_ptr.vmem [resolvable:$true] %s112
      %115 = dma.hbm_to_vmem [thread:$0]  %s10, 16, %s113, [#allocation12]
    $region45: #{encoder_forward.1} parent=1 // pred_fallthru
      _
    // Predicated region
    $region46: #{encoder_forward.1} parent=1 // pred_check
      _
    $region47: #{encoder_forward.1} parent=1 // pred_check_branch
      %117 = sbr.rel (0) target = $region49
    $region48: #{encoder_forward.1} parent=1 // pred_region
      _
    $region49: #{encoder_forward.1} parent=1 // pred_fallthru
      _
    // Predicated region
    $region50: #{encoder_forward.1} parent=1 // pred_check
      _
    $region51: #{encoder_forward.1} parent=1 // pred_check_branch
      %119 = sbr.rel (0) target = $region53
    $region52: #{encoder_forward.1} parent=1 // pred_region
      _
    $region53: #{encoder_forward.1} parent=1 // pred_fallthru
      _
    // Predicated region
    $region54: #{encoder_forward.1} parent=1 // pred_check
      _
    $region55: #{encoder_forward.1} parent=1 // pred_check_branch
      %121 = sbr.rel (0) target = $region57
    $region56: #{encoder_forward.1} parent=1 // pred_region
      %s123 = ssub.s32 512, 512
      %124 = vsyncadd [#allocation15], %s123
      %s125 = sshll.u32 [#allocation14], 4
      %s126 = int_to_ptr.vmem [resolvable:$true] %s125
      %131 = dma.hbm_to_vmem [thread:$0]  %s13, 512, %s126, [#allocation15], 128, 128, 8
    $region57: #{encoder_forward.1} parent=1 // pred_fallthru
      _
    // Predicated region
    $region58: #{encoder_forward.1} parent=1 // pred_check
      _
    $region59: #{encoder_forward.1} parent=1 // pred_check_branch
      %133 = sbr.rel (0) target = $region61
    $region60: #{encoder_forward.1} parent=1 // pred_region
      %s135 = ssub.s32 16, 16
      %136 = vsyncadd [#allocation15], %s135
      %s138 = sshll.u32 [#allocation16], 4
      %s139 = int_to_ptr.vmem [resolvable:$true] %s138
      %141 = dma.hbm_to_vmem [thread:$0]  %s14, 16, %s139, [#allocation15]
    $region61: #{encoder_forward.1} parent=1 // pred_fallthru
      _
    // Predicated region
    $region62: #{encoder_forward.1} parent=1 // pred_check
      _
    $region63: #{encoder_forward.1} parent=1 // pred_check_branch
      %143 = sbr.rel (0) target = $region65
    $region64: #{encoder_forward.1} parent=1 // pred_region
      %s145 = ssub.s32 16, 16
      %146 = vsyncadd [#allocation18], %s145
      %s148 = sshll.u32 [#allocation17], 4
      %s149 = int_to_ptr.vmem [resolvable:$true] %s148
      %151 = dma.hbm_to_vmem [thread:$0]  %s15, 16, %s149, [#allocation18]
    $region65: #{encoder_forward.1} parent=1 // pred_fallthru
      _
    // Predicated region
    $region66: #{encoder_forward.1} parent=1 // pred_check
      _
    $region67: #{encoder_forward.1} parent=1 // pred_check_branch
      %153 = sbr.rel (0) target = $region69
    $region68: #{encoder_forward.1} parent=1 // pred_region
      %s155 = ssub.s32 512, 512
      %156 = vsyncadd [#allocation18], %s155
      %s157 = sshll.u32 [#allocation19], 4
      %s158 = int_to_ptr.vmem [resolvable:$true] %s157
      %163 = dma.hbm_to_vmem [thread:$0]  %s16, 512, %s158, [#allocation18], 128, 128, 8
    $region69: #{encoder_forward.1} parent=1 // pred_fallthru
      _
    // Predicated region
    $region70: #{encoder_forward.1} parent=1 // pred_check
      _
    $region71: #{encoder_forward.1} parent=1 // pred_check_branch
      %165 = sbr.rel (0) target = $region73
    $region72: #{encoder_forward.1} parent=1 // pred_region
      %s167 = ssub.s32 16, 16
      %168 = vsyncadd [#allocation21], %s167
      %s170 = sshll.u32 [#allocation20], 4
      %s171 = int_to_ptr.vmem [resolvable:$true] %s170
      %173 = dma.hbm_to_vmem [thread:$0]  %s17, 16, %s171, [#allocation21]
    $region73: #{encoder_forward.1} parent=1 // pred_fallthru
      _
    // Predicated region
    $region74: #{encoder_forward.1} parent=1 // pred_check
      _
    $region75: #{encoder_forward.1} parent=1 // pred_check_branch
      %175 = sbr.rel (0) target = $region77
    $region76: #{encoder_forward.1} parent=1 // pred_region
      %s177 = ssub.s32 16, 16
      %178 = vsyncadd [#allocation21], %s177
      %s180 = sshll.u32 [#allocation22], 4
      %s181 = int_to_ptr.vmem [resolvable:$true] %s180
      %183 = dma.hbm_to_vmem [thread:$0]  %s18, 16, %s181, [#allocation21]
    $region77: #{encoder_forward.1} parent=1 // pred_fallthru
      _
    // Predicated region
    $region78: #{encoder_forward.1} parent=1 // pred_check
      _
    $region79: #{encoder_forward.1} parent=1 // pred_check_branch
      %185 = sbr.rel (0) target = $region81
    $region80: #{encoder_forward.1} parent=1 // pred_region
      %s187 = ssub.s32 16, 16
      %188 = vsyncadd [#allocation24], %s187
      %s190 = sshll.u32 [#allocation23], 4
      %s191 = int_to_ptr.vmem [resolvable:$true] %s190
      %193 = dma.hbm_to_vmem [thread:$0]  %s19, 16, %s191, [#allocation24]
    $region81: #{encoder_forward.1} parent=1 // pred_fallthru
      _
    // Predicated region
    $region82: #{encoder_forward.1} parent=1 // pred_check
      _
    $region83: #{encoder_forward.1} parent=1 // pred_check_branch
      %195 = sbr.rel (0) target = $region85
    $region84: #{encoder_forward.1} parent=1 // pred_region
      _
    $region85: #{encoder_forward.1} parent=1 // pred_fallthru
      _
    // Predicated region
    $region86: #{encoder_forward.1} parent=1 // pred_check
      _
    $region87: #{encoder_forward.1} parent=1 // pred_check_branch
      %197 = sbr.rel (0) target = $region89
    $region88: #{encoder_forward.1} parent=1 // pred_region
      %198 = dma.done [#allocation4], 256
    $region89: #{encoder_forward.1} parent=1 // pred_fallthru
      _
    // Predicated region
    $region90: #{encoder_forward.1} parent=1 // pred_check
      _
    $region91: #{encoder_forward.1} parent=1 // pred_check_branch
      %200 = sbr.rel (0) target = $region93
    $region92: #{encoder_forward.1} parent=1 // pred_region
      %201 = dma.done [#allocation6], 128
    $region93: #{encoder_forward.1} parent=1 // pred_fallthru
      _
    // Predicated region
    $region94: #{encoder_forward.1} parent=1 // pred_check
      _
    $region95: #{encoder_forward.1} parent=1 // pred_check_branch
      %203 = sbr.rel (0) target = $region97
    $region96: #{encoder_forward.1} parent=1 // pred_region
      %204 = dma.done [#allocation6], 256
    $region97: #{encoder_forward.1} parent=1 // pred_fallthru
      _
    // Predicated region
    $region98: #{encoder_forward.1} parent=1 // pred_check
      _
    $region99: #{encoder_forward.1} parent=1 // pred_check_branch
      %206 = sbr.rel (0) target = $region101
    $region100: #{encoder_forward.1} parent=1 // pred_region
      %207 = dma.done [#allocation9], 16
    $region101: #{encoder_forward.1} parent=1 // pred_fallthru
      _
    // Predicated region
    $region102: #{encoder_forward.1} parent=1 // pred_check
      _
    $region103: #{encoder_forward.1} parent=1 // pred_check_branch
      %209 = sbr.rel (0) target = $region105
    $region104: #{encoder_forward.1} parent=1 // pred_region
      %210 = dma.done [#allocation9], 16
    $region105: #{encoder_forward.1} parent=1 // pred_fallthru
      _
    // Predicated region
    $region106: #{encoder_forward.1} parent=1 // pred_check
      _
    $region107: #{encoder_forward.1} parent=1 // pred_check_branch
      %212 = sbr.rel (0) target = $region109
    $region108: #{encoder_forward.1} parent=1 // pred_region
      %213 = dma.done [#allocation12], 16
    $region109: #{encoder_forward.1} parent=1 // pred_fallthru
      _
    // Predicated region
    $region110: #{encoder_forward.1} parent=1 // pred_check
      _
    $region111: #{encoder_forward.1} parent=1 // pred_check_branch
      %215 = sbr.rel (0) target = $region113
    $region112: #{encoder_forward.1} parent=1 // pred_region
      %216 = dma.done [#allocation12], 16
    $region113: #{encoder_forward.1} parent=1 // pred_fallthru
      _
    // Predicated region
    $region114: #{encoder_forward.1} parent=1 // pred_check
      _
    $region115: #{encoder_forward.1} parent=1 // pred_check_branch
      %218 = sbr.rel (0) target = $region117
    $region116: #{encoder_forward.1} parent=1 // pred_region
      %219 = dma.done [#allocation15], 512
    $region117: #{encoder_forward.1} parent=1 // pred_fallthru
      _
    // Predicated region
    $region118: #{encoder_forward.1} parent=1 // pred_check
      _
    $region119: #{encoder_forward.1} parent=1 // pred_check_branch
      %221 = sbr.rel (0) target = $region121
    $region120: #{encoder_forward.1} parent=1 // pred_region
      %222 = dma.done [#allocation15], 16
    $region121: #{encoder_forward.1} parent=1 // pred_fallthru
      _
    // Predicated region
    $region122: #{encoder_forward.1} parent=1 // pred_check
      _
    $region123: #{encoder_forward.1} parent=1 // pred_check_branch
      %224 = sbr.rel (0) target = $region125
    $region124: #{encoder_forward.1} parent=1 // pred_region
      %225 = dma.done [#allocation18], 16
    $region125: #{encoder_forward.1} parent=1 // pred_fallthru
      _
    // Predicated region
    $region126: #{encoder_forward.1} parent=1 // pred_check
      _
    $region127: #{encoder_forward.1} parent=1 // pred_check_branch
      %227 = sbr.rel (0) target = $region129
    $region128: #{encoder_forward.1} parent=1 // pred_region
      %228 = dma.done [#allocation18], 512
    $region129: #{encoder_forward.1} parent=1 // pred_fallthru
      _
    // Predicated region
    $region130: #{encoder_forward.1} parent=1 // pred_check
      _
    $region131: #{encoder_forward.1} parent=1 // pred_check_branch
      %230 = sbr.rel (0) target = $region133
    $region132: #{encoder_forward.1} parent=1 // pred_region
      %231 = dma.done [#allocation21], 16
    $region133: #{encoder_forward.1} parent=1 // pred_fallthru
      _
    // Predicated region
    $region134: #{encoder_forward.1} parent=1 // pred_check
      _
    $region135: #{encoder_forward.1} parent=1 // pred_check_branch
      %233 = sbr.rel (0) target = $region137
    $region136: #{encoder_forward.1} parent=1 // pred_region
      %234 = dma.done [#allocation21], 16
    $region137: #{encoder_forward.1} parent=1 // pred_fallthru
      _
    // Predicated region
    $region138: #{encoder_forward.1} parent=1 // pred_check
      _
    $region139: #{encoder_forward.1} parent=1 // pred_check_branch
      %236 = sbr.rel (0) target = $region141
    $region140: #{encoder_forward.1} parent=1 // pred_region
      %237 = dma.done [#allocation24], 16
    $region141: #{encoder_forward.1} parent=1 // pred_fallthru
      _
    %v238 = vld [vmem:[#allocation3] sm:$0xff]
    %v239 = vld [vmem:[#allocation3 + $0x8] sm:$0xff]
    %v240 = vld [vmem:[#allocation5] sm:$0xff]
    %v241 = vld [vmem:[%s3] sm:$0x1]
    %v243 = vlaneseq
    %v244 = vshrl.u32 %v243, 7
    %v245 = vsub.s32 0, %v244
    %v246 = vrot.slane %v241, %v245
    %vm248 = vcmask 64512
    %v250 = vsel %vm248, %v238, 0
    %v253 = vsel %vm248, %v239, 0
    %255 = vmatprep.subr.mxu0 0.0
    %256 = vmatpush1.msra.mxu0 %v240
    %257 = vmatprep.subr.mxu0 0.0
    %258 = vmatpush1.msra.mxu0 0.0
    %259 = vmatprep.subr.mxu0 0.0
    %260 = vmatpush1.msra.mxu0 0.0
    %261 = vmatprep.subr.mxu0 0.0
    %262 = vmatpush1.msra.mxu0 0.0
    %263 = vmatprep.subr.mxu0 0.0
    %264 = vmatpush1.msra.mxu0 0.0
    %265 = vmatprep.subr.mxu0 0.0
    %266 = vmatpush1.msra.mxu0 0.0
    %267 = vmatprep.subr.mxu0 0.0
    %268 = vmatpush1.msra.mxu0 0.0
    %269 = vmatprep.subr.mxu0 0.0
    %270 = vmatpush1.msra.mxu0 0.0
    %271 = vmatprep.subr.mxu0 0.0
    %272 = vmatpush1.msra.mxu0 0.0
    %273 = vmatprep.subr.mxu0 0.0
    %274 = vmatpush1.msra.mxu0 0.0
    %275 = vmatprep.subr.mxu0 0.0
    %276 = vmatpush1.msra.mxu0 0.0
    %277 = vmatprep.subr.mxu0 0.0
    %278 = vmatpush1.msra.mxu0 0.0
    %279 = vmatprep.subr.mxu0 0.0
    %280 = vmatpush1.msra.mxu0 0.0
    %281 = vmatprep.subr.mxu0 0.0
    %282 = vmatpush1.msra.mxu0 0.0
    %283 = vmatprep.subr.mxu0 0.0
    %284 = vmatpush1.msra.mxu0 0.0
    %285 = vmatprep.subr.mxu0 0.0
    %286 = vmatpush1.msra.mxu0 0.0
    %287 = vmatprep.subr.mxu0 0.0
    %288 = vmatpush1.msra.mxu0 0.0
    %289 = vmatprep.subr.mxu0 0.0
    %290 = vmatpush1.msra.mxu0 0.0
    %291 = vmatprep.subr.mxu0 0.0
    %292 = vmatpush1.msra.mxu0 0.0
    %293 = vmatprep.subr.mxu0 0.0
    %294 = vmatpush1.msra.mxu0 0.0
    %295 = vmatprep.subr.mxu0 0.0
    %296 = vmatpush1.msra.mxu0 0.0
    %297 = vmatprep.subr.mxu0 0.0
    %298 = vmatpush1.msra.mxu0 0.0
    %299 = vmatprep.subr.mxu0 0.0
    %300 = vmatpush1.msra.mxu0 0.0
    %301 = vmatprep.subr.mxu0 0.0
    %302 = vmatpush1.msra.mxu0 0.0
    %303 = vmatprep.subr.mxu0 0.0
    %304 = vmatpush1.msra.mxu0 0.0
    %305 = vmatprep.subr.mxu0 0.0
    %306 = vmatpush1.msra.mxu0 0.0
    %307 = vmatprep.subr.mxu0 0.0
    %308 = vmatpush1.msra.mxu0 0.0
    %309 = vmatprep.subr.mxu0 0.0
    %310 = vmatpush1.msra.mxu0 0.0
    %311 = vmatprep.subr.mxu0 0.0
    %312 = vmatpush1.msra.mxu0 0.0
    %313 = vmatprep.subr.mxu0 0.0
    %314 = vmatpush1.msra.mxu0 0.0
    %315 = vmatprep.subr.mxu0 0.0
    %316 = vmatpush1.msra.mxu0 0.0
    %317 = vmatprep.subr.mxu0 0.0
    %318 = vmatpush1.msra.mxu0 0.0
    %319 = vmatprep.mubr.f32.mxu0 0.0
    %320 = vmatmul.mubr.f32.gmra.mrb[0].mxu0 %v250
    %v321 = vpop.f32.mrb[0].mxu0
    %v322 = vadd.f32 %v246, %v321
    %v323 = vpop.f32.mrb[0].mxu0
    %324 = vmatprep.mubr.f32.mxu0 0.0
    %325 = vmatmul.mubr.f32.gmra.mrb[0].mxu0 %v253
    %v326 = vpop.f32.mrb[0].mxu0
    %v327 = vadd.f32 %v246, %v326
    %v328 = vpop.f32.mrb[0].mxu0
    %329 = vdwg.mxu0
    %v330 = vmax.f32 %v322, 0.0
    %v331 = vmax.f32 %v327, 0.0
    %v332 = vld [vmem:[#allocation7] sm:$0xff]
    %v333 = vld [vmem:[#allocation7 + $0x8] sm:$0xff]
    %v334 = vld [vmem:[#allocation8] sm:$0x1]
    %v336 = vlaneseq
    %v337 = vshrl.u32 %v336, 7
    %v338 = vsub.s32 0, %v337
    %v339 = vrot.slane %v334, %v338
    %vm341 = vcmask 130048
    %v343 = vsel %vm341, %v330, 0
    %v346 = vsel %vm341, %v331, 0
    %348 = vmatprep.subr.mxu0 0.0
    %349 = vmatpush1.msra.mxu0 %v332
    %350 = vmatprep.subr.mxu0 0.0
    %351 = vmatpush1.msra.mxu0 %v333
    %352 = vmatprep.subr.mxu0 0.0
    %353 = vmatpush1.msra.mxu0 0.0
    %354 = vmatprep.subr.mxu0 0.0
    %355 = vmatpush1.msra.mxu0 0.0
    %356 = vmatprep.subr.mxu0 0.0
    %357 = vmatpush1.msra.mxu0 0.0
    %358 = vmatprep.subr.mxu0 0.0
    %359 = vmatpush1.msra.mxu0 0.0
    %360 = vmatprep.subr.mxu0 0.0
    %361 = vmatpush1.msra.mxu0 0.0
    %362 = vmatprep.subr.mxu0 0.0
    %363 = vmatpush1.msra.mxu0 0.0
    %364 = vmatprep.subr.mxu0 0.0
    %365 = vmatpush1.msra.mxu0 0.0
    %366 = vmatprep.subr.mxu0 0.0
    %367 = vmatpush1.msra.mxu0 0.0
    %368 = vmatprep.subr.mxu0 0.0
    %369 = vmatpush1.msra.mxu0 0.0
    %370 = vmatprep.subr.mxu0 0.0
    %371 = vmatpush1.msra.mxu0 0.0
    %372 = vmatprep.subr.mxu0 0.0
    %373 = vmatpush1.msra.mxu0 0.0
    %374 = vmatprep.subr.mxu0 0.0
    %375 = vmatpush1.msra.mxu0 0.0
    %376 = vmatprep.subr.mxu0 0.0
    %377 = vmatpush1.msra.mxu0 0.0
    %378 = vmatprep.subr.mxu0 0.0
    %379 = vmatpush1.msra.mxu0 0.0
    %380 = vmatprep.subr.mxu0 0.0
    %381 = vmatpush1.msra.mxu0 0.0
    %382 = vmatprep.subr.mxu0 0.0
    %383 = vmatpush1.msra.mxu0 0.0
    %384 = vmatprep.subr.mxu0 0.0
    %385 = vmatpush1.msra.mxu0 0.0
    %386 = vmatprep.subr.mxu0 0.0
    %387 = vmatpush1.msra.mxu0 0.0
    %388 = vmatprep.subr.mxu0 0.0
    %389 = vmatpush1.msra.mxu0 0.0
    %390 = vmatprep.subr.mxu0 0.0
    %391 = vmatpush1.msra.mxu0 0.0
    %392 = vmatprep.subr.mxu0 0.0
    %393 = vmatpush1.msra.mxu0 0.0
    %394 = vmatprep.subr.mxu0 0.0
    %395 = vmatpush1.msra.mxu0 0.0
    %396 = vmatprep.subr.mxu0 0.0
    %397 = vmatpush1.msra.mxu0 0.0
    %398 = vmatprep.subr.mxu0 0.0
    %399 = vmatpush1.msra.mxu0 0.0
    %400 = vmatprep.subr.mxu0 0.0
    %401 = vmatpush1.msra.mxu0 0.0
    %402 = vmatprep.subr.mxu0 0.0
    %403 = vmatpush1.msra.mxu0 0.0
    %404 = vmatprep.subr.mxu0 0.0
    %405 = vmatpush1.msra.mxu0 0.0
    %406 = vmatprep.subr.mxu0 0.0
    %407 = vmatpush1.msra.mxu0 0.0
    %408 = vmatprep.subr.mxu0 0.0
    %409 = vmatpush1.msra.mxu0 0.0
    %410 = vmatprep.subr.mxu0 0.0
    %411 = vmatpush1.msra.mxu0 0.0
    %412 = vmatprep.mubr.f32.mxu0 0.0
    %413 = vmatmul.mubr.f32.gmra.mrb[0].mxu0 %v343
    %v414 = vpop.f32.mrb[0].mxu0
    %v415 = vadd.f32 %v339, %v414
    %v416 = vpop.f32.mrb[0].mxu0
    %417 = vmatprep.mubr.f32.mxu0 0.0
    %418 = vmatmul.mubr.f32.gmra.mrb[0].mxu0 %v346
    %v419 = vpop.f32.mrb[0].mxu0
    %v420 = vadd.f32 %v339, %v419
    %v421 = vpop.f32.mrb[0].mxu0
    %422 = vdwg.mxu0
    %v423 = vld [vmem:[%s1] sm:$0xff]
    %v424 = vld [vmem:[%s1 + $0x8] sm:$0xff]
    %v425 = vadd.f32 %v415, %v423
    %v426 = vadd.f32 %v420, %v424
    %v427 = vld [vmem:[%s6] sm:$0xff]
    %v428 = vld [vmem:[%s6 + $0x8] sm:$0xff]
    %v429 = vld [vmem:[%s6 + $0x10] sm:$0xff]
    %v430 = vld [vmem:[%s6 + $0x18] sm:$0xff]
    %v431 = vld [vmem:[#allocation10] sm:$0x1]
    %v432 = vld [vmem:[#allocation11] sm:$0x1]
    %v433 = vld [vmem:[%s9] sm:$0xff]
    %v434 = vld [vmem:[%s9 + $0x8] sm:$0xff]
    %v435 = vld [vmem:[%s9 + $0x10] sm:$0xff]
    %v436 = vld [vmem:[%s9 + $0x18] sm:$0xff]
    %v437 = vld [vmem:[#allocation13] sm:$0x1]
    %vm438 = vcmask 261120
    %v440 = vsel %vm438, %v425, 0
    %v443 = vsel %vm438, %v426, 0
    %445 = vmatprep.subr.mxu0 0.0
    %446 = vmatpush1.msra.mxu0 %v427
    %447 = vmatprep.subr.mxu0 0.0
    %448 = vmatpush1.msra.mxu0 %v428
    %449 = vmatprep.subr.mxu0 0.0
    %450 = vmatpush1.msra.mxu0 %v429
    %451 = vmatprep.subr.mxu0 0.0
    %452 = vmatpush1.msra.mxu0 %v430
    %453 = vmatprep.subr.mxu0 0.0
    %454 = vmatpush1.msra.mxu0 0.0
    %455 = vmatprep.subr.mxu0 0.0
    %456 = vmatpush1.msra.mxu0 0.0
    %457 = vmatprep.subr.mxu0 0.0
    %458 = vmatpush1.msra.mxu0 0.0
    %459 = vmatprep.subr.mxu0 0.0
    %460 = vmatpush1.msra.mxu0 0.0
    %461 = vmatprep.subr.mxu0 0.0
    %462 = vmatpush1.msra.mxu0 0.0
    %463 = vmatprep.subr.mxu0 0.0
    %464 = vmatpush1.msra.mxu0 0.0
    %465 = vmatprep.subr.mxu0 0.0
    %466 = vmatpush1.msra.mxu0 0.0
    %467 = vmatprep.subr.mxu0 0.0
    %468 = vmatpush1.msra.mxu0 0.0
    %469 = vmatprep.subr.mxu0 0.0
    %470 = vmatpush1.msra.mxu0 0.0
    %471 = vmatprep.subr.mxu0 0.0
    %472 = vmatpush1.msra.mxu0 0.0
    %473 = vmatprep.subr.mxu0 0.0
    %474 = vmatpush1.msra.mxu0 0.0
    %475 = vmatprep.subr.mxu0 0.0
    %476 = vmatpush1.msra.mxu0 0.0
    %477 = vmatprep.subr.mxu0 0.0
    %478 = vmatpush1.msra.mxu0 0.0
    %479 = vmatprep.subr.mxu0 0.0
    %480 = vmatpush1.msra.mxu0 0.0
    %481 = vmatprep.subr.mxu0 0.0
    %482 = vmatpush1.msra.mxu0 0.0
    %483 = vmatprep.subr.mxu0 0.0
    %484 = vmatpush1.msra.mxu0 0.0
    %485 = vmatprep.subr.mxu0 0.0
    %486 = vmatpush1.msra.mxu0 0.0
    %487 = vmatprep.subr.mxu0 0.0
    %488 = vmatpush1.msra.mxu0 0.0
    %489 = vmatprep.subr.mxu0 0.0
    %490 = vmatpush1.msra.mxu0 0.0
    %491 = vmatprep.subr.mxu0 0.0
    %492 = vmatpush1.msra.mxu0 0.0
    %493 = vmatprep.subr.mxu0 0.0
    %494 = vmatpush1.msra.mxu0 0.0
    %495 = vmatprep.subr.mxu0 0.0
    %496 = vmatpush1.msra.mxu0 0.0
    %497 = vmatprep.subr.mxu0 0.0
    %498 = vmatpush1.msra.mxu0 0.0
    %499 = vmatprep.subr.mxu0 0.0
    %500 = vmatpush1.msra.mxu0 0.0
    %501 = vmatprep.subr.mxu0 0.0
    %502 = vmatpush1.msra.mxu0 0.0
    %503 = vmatprep.subr.mxu0 0.0
    %504 = vmatpush1.msra.mxu0 0.0
    %505 = vmatprep.subr.mxu0 0.0
    %506 = vmatpush1.msra.mxu0 0.0
    %507 = vmatprep.subr.mxu0 0.0
    %508 = vmatpush1.msra.mxu0 0.0
    %509 = vmatprep.mubr.f32.mxu0 0.0
    %510 = vmatmul.mubr.f32.gmra.mrb[0].mxu0 %v440
    %v511 = vpop.f32.mrb[0].mxu0
    %v512 = vadd.f32 0.0, %v511
    %v513 = vpop.f32.mrb[0].mxu0
    %514 = vmatprep.mubr.f32.mxu0 0.0
    %515 = vmatmul.mubr.f32.gmra.mrb[0].mxu0 %v443
    %v516 = vpop.f32.mrb[0].mxu0
    %v517 = vadd.f32 0.0, %v516
    %v518 = vpop.f32.mrb[0].mxu0
    %519 = vdwg.mxu0
    %521 = vrot.lane.b32.xlu0 %v512, 96
    %v522 = vpop.permute.xlu0 %521
    %v523 = vsel %vm248, %v512, 0
    %v525 = vsel %vm248, %v522, 0
    %527 = vmatprep.subr.mxu0 0.0
    %528 = vmatpush1.xpose.msra.mxu0 %v525
    %529 = vmatprep.subr.mxu0 0.0
    %530 = vmatpush1.xpose.msra.mxu0 0.0
    %531 = vmatprep.subr.mxu0 0.0
    %532 = vmatpush1.xpose.msra.mxu0 0.0
    %533 = vmatprep.subr.mxu0 0.0
    %534 = vmatpush1.xpose.msra.mxu0 0.0
    %535 = vmatprep.subr.mxu0 0.0
    %536 = vmatpush1.xpose.msra.mxu0 0.0
    %537 = vmatprep.subr.mxu0 0.0
    %538 = vmatpush1.xpose.msra.mxu0 0.0
    %539 = vmatprep.subr.mxu0 0.0
    %540 = vmatpush1.xpose.msra.mxu0 0.0
    %541 = vmatprep.subr.mxu0 0.0
    %542 = vmatpush1.xpose.msra.mxu0 0.0
    %543 = vmatprep.subr.mxu0 0.0
    %544 = vmatpush1.xpose.msra.mxu0 0.0
    %545 = vmatprep.subr.mxu0 0.0
    %546 = vmatpush1.xpose.msra.mxu0 0.0
    %547 = vmatprep.subr.mxu0 0.0
    %548 = vmatpush1.xpose.msra.mxu0 0.0
    %549 = vmatprep.subr.mxu0 0.0
    %550 = vmatpush1.xpose.msra.mxu0 0.0
    %551 = vmatprep.subr.mxu0 0.0
    %552 = vmatpush1.xpose.msra.mxu0 0.0
    %553 = vmatprep.subr.mxu0 0.0
    %554 = vmatpush1.xpose.msra.mxu0 0.0
    %555 = vmatprep.subr.mxu0 0.0
    %556 = vmatpush1.xpose.msra.mxu0 0.0
    %557 = vmatprep.subr.mxu0 0.0
    %558 = vmatpush1.xpose.msra.mxu0 0.0
    %559 = vmatprep.subr.mxu0 0.0
    %560 = vmatpush1.xpose.msra.mxu0 0.0
    %561 = vmatprep.subr.mxu0 0.0
    %562 = vmatpush1.xpose.msra.mxu0 0.0
    %563 = vmatprep.subr.mxu0 0.0
    %564 = vmatpush1.xpose.msra.mxu0 0.0
    %565 = vmatprep.subr.mxu0 0.0
    %566 = vmatpush1.xpose.msra.mxu0 0.0
    %567 = vmatprep.subr.mxu0 0.0
    %568 = vmatpush1.xpose.msra.mxu0 0.0
    %569 = vmatprep.subr.mxu0 0.0
    %570 = vmatpush1.xpose.msra.mxu0 0.0
    %571 = vmatprep.subr.mxu0 0.0
    %572 = vmatpush1.xpose.msra.mxu0 0.0
    %573 = vmatprep.subr.mxu0 0.0
    %574 = vmatpush1.xpose.msra.mxu0 0.0
    %575 = vmatprep.subr.mxu0 0.0
    %576 = vmatpush1.xpose.msra.mxu0 0.0
    %577 = vmatprep.subr.mxu0 0.0
    %578 = vmatpush1.xpose.msra.mxu0 0.0
    %579 = vmatprep.subr.mxu0 0.0
    %580 = vmatpush1.xpose.msra.mxu0 0.0
    %581 = vmatprep.subr.mxu0 0.0
    %582 = vmatpush1.xpose.msra.mxu0 0.0
    %583 = vmatprep.subr.mxu0 0.0
    %584 = vmatpush1.xpose.msra.mxu0 0.0
    %585 = vmatprep.subr.mxu0 0.0
    %586 = vmatpush1.xpose.msra.mxu0 0.0
    %587 = vmatprep.subr.mxu0 0.0
    %588 = vmatpush1.xpose.msra.mxu0 0.0
    %589 = vmatprep.subr.mxu0 0.0
    %590 = vmatpush1.xpose.msra.mxu0 0.0
    %591 = vmatprep.mubr.f32.mxu0 0.0
    %592 = vmatmul.mubr.f32.gmra.mrb[0].mxu0 %v523
    %v593 = vpop.f32.mrb[0].mxu0
    %v594 = vadd.f32 0.0, %v593
    %v595 = vpop.f32.mrb[0].mxu0
    %596 = vdwg.mxu0
    %v597 = vsel %vm248, %v594, -inf
    %598 = vmax.xlane.f32.xlu0 %v597
    %v599 = vpop.xlane.xlu0 %598
    %v600 = vsub.f32 %v594, %v599
    %v601 = vmul.f32 %v600, 1.442695
    %v602 = vpow.pop %v601
    %v603 = vsel %vm248, %v602, 0.0
    %604 = vadd.xlane.f32.xlu0 %v603
    %v605 = vpop.xlane.xlu0 %604
    %606 = vrot.lane.b32.xlu0 %v512, 64
    %v607 = vpop.permute.xlu0 %606
    %v610 = vsel %vm248, %v602, 0
    %612 = vmatprep.subr.mxu0 0.0
    %613 = vmatpush1.msra.mxu0 %v607
    %614 = vmatprep.subr.mxu0 0.0
    %615 = vmatpush1.msra.mxu0 0.0
    %616 = vmatprep.subr.mxu0 0.0
    %617 = vmatpush1.msra.mxu0 0.0
    %618 = vmatprep.subr.mxu0 0.0
    %619 = vmatpush1.msra.mxu0 0.0
    %620 = vmatprep.subr.mxu0 0.0
    %621 = vmatpush1.msra.mxu0 0.0
    %622 = vmatprep.subr.mxu0 0.0
    %623 = vmatpush1.msra.mxu0 0.0
    %624 = vmatprep.subr.mxu0 0.0
    %625 = vmatpush1.msra.mxu0 0.0
    %626 = vmatprep.subr.mxu0 0.0
    %627 = vmatpush1.msra.mxu0 0.0
    %628 = vmatprep.subr.mxu0 0.0
    %629 = vmatpush1.msra.mxu0 0.0
    %630 = vmatprep.subr.mxu0 0.0
    %631 = vmatpush1.msra.mxu0 0.0
    %632 = vmatprep.subr.mxu0 0.0
    %633 = vmatpush1.msra.mxu0 0.0
    %634 = vmatprep.subr.mxu0 0.0
    %635 = vmatpush1.msra.mxu0 0.0
    %636 = vmatprep.subr.mxu0 0.0
    %637 = vmatpush1.msra.mxu0 0.0
    %638 = vmatprep.subr.mxu0 0.0
    %639 = vmatpush1.msra.mxu0 0.0
    %640 = vmatprep.subr.mxu0 0.0
    %641 = vmatpush1.msra.mxu0 0.0
    %642 = vmatprep.subr.mxu0 0.0
    %643 = vmatpush1.msra.mxu0 0.0
    %644 = vmatprep.subr.mxu0 0.0
    %645 = vmatpush1.msra.mxu0 0.0
    %646 = vmatprep.subr.mxu0 0.0
    %647 = vmatpush1.msra.mxu0 0.0
    %648 = vmatprep.subr.mxu0 0.0
    %649 = vmatpush1.msra.mxu0 0.0
    %650 = vmatprep.subr.mxu0 0.0
    %651 = vmatpush1.msra.mxu0 0.0
    %652 = vmatprep.subr.mxu0 0.0
    %653 = vmatpush1.msra.mxu0 0.0
    %654 = vmatprep.subr.mxu0 0.0
    %655 = vmatpush1.msra.mxu0 0.0
    %656 = vmatprep.subr.mxu0 0.0
    %657 = vmatpush1.msra.mxu0 0.0
    %658 = vmatprep.subr.mxu0 0.0
    %659 = vmatpush1.msra.mxu0 0.0
    %660 = vmatprep.subr.mxu0 0.0
    %661 = vmatpush1.msra.mxu0 0.0
    %662 = vmatprep.subr.mxu0 0.0
    %663 = vmatpush1.msra.mxu0 0.0
    %664 = vmatprep.subr.mxu0 0.0
    %665 = vmatpush1.msra.mxu0 0.0
    %666 = vmatprep.subr.mxu0 0.0
    %667 = vmatpush1.msra.mxu0 0.0
    %668 = vmatprep.subr.mxu0 0.0
    %669 = vmatpush1.msra.mxu0 0.0
    %670 = vmatprep.subr.mxu0 0.0
    %671 = vmatpush1.msra.mxu0 0.0
    %672 = vmatprep.subr.mxu0 0.0
    %673 = vmatpush1.msra.mxu0 0.0
    %674 = vmatprep.subr.mxu0 0.0
    %675 = vmatpush1.msra.mxu0 0.0
    %676 = vmatprep.mubr.f32.mxu0 0.0
    %677 = vmatmul.mubr.f32.gmra.mrb[0].mxu0 %v610
    %v678 = vpop.f32.mrb[0].mxu0
    %v679 = vadd.f32 0.0, %v678
    %v680 = vpop.f32.mrb[0].mxu0
    %681 = vdwg.mxu0
    %v682 = vrcp.pop %v605
    %v683 = vmul.f32 %v679, %v682
    %684 = vst.msk [vmem:[#allocation2] sm:$0xff] %vm248, %v683
    %685 = vrot.lane.b32.xlu0 %v512, 120
    %v686 = vpop.permute.xlu0 %685
    %687 = vrot.lane.b32.xlu0 %v512, 88
    %v688 = vpop.permute.xlu0 %687
    %v689 = vsel %vm248, %v686, 0
    %v691 = vsel %vm248, %v688, 0
    %693 = vmatprep.subr.mxu0 0.0
    %694 = vmatpush1.xpose.msra.mxu0 %v691
    %695 = vmatprep.subr.mxu0 0.0
    %696 = vmatpush1.xpose.msra.mxu0 0.0
    %697 = vmatprep.subr.mxu0 0.0
    %698 = vmatpush1.xpose.msra.mxu0 0.0
    %699 = vmatprep.subr.mxu0 0.0
    %700 = vmatpush1.xpose.msra.mxu0 0.0
    %701 = vmatprep.subr.mxu0 0.0
    %702 = vmatpush1.xpose.msra.mxu0 0.0
    %703 = vmatprep.subr.mxu0 0.0
    %704 = vmatpush1.xpose.msra.mxu0 0.0
    %705 = vmatprep.subr.mxu0 0.0
    %706 = vmatpush1.xpose.msra.mxu0 0.0
    %707 = vmatprep.subr.mxu0 0.0
    %708 = vmatpush1.xpose.msra.mxu0 0.0
    %709 = vmatprep.subr.mxu0 0.0
    %710 = vmatpush1.xpose.msra.mxu0 0.0
    %711 = vmatprep.subr.mxu0 0.0
    %712 = vmatpush1.xpose.msra.mxu0 0.0
    %713 = vmatprep.subr.mxu0 0.0
    %714 = vmatpush1.xpose.msra.mxu0 0.0
    %715 = vmatprep.subr.mxu0 0.0
    %716 = vmatpush1.xpose.msra.mxu0 0.0
    %717 = vmatprep.subr.mxu0 0.0
    %718 = vmatpush1.xpose.msra.mxu0 0.0
    %719 = vmatprep.subr.mxu0 0.0
    %720 = vmatpush1.xpose.msra.mxu0 0.0
    %721 = vmatprep.subr.mxu0 0.0
    %722 = vmatpush1.xpose.msra.mxu0 0.0
    %723 = vmatprep.subr.mxu0 0.0
    %724 = vmatpush1.xpose.msra.mxu0 0.0
    %725 = vmatprep.subr.mxu0 0.0
    %726 = vmatpush1.xpose.msra.mxu0 0.0
    %727 = vmatprep.subr.mxu0 0.0
    %728 = vmatpush1.xpose.msra.mxu0 0.0
    %729 = vmatprep.subr.mxu0 0.0
    %730 = vmatpush1.xpose.msra.mxu0 0.0
    %731 = vmatprep.subr.mxu0 0.0
    %732 = vmatpush1.xpose.msra.mxu0 0.0
    %733 = vmatprep.subr.mxu0 0.0
    %734 = vmatpush1.xpose.msra.mxu0 0.0
    %735 = vmatprep.subr.mxu0 0.0
    %736 = vmatpush1.xpose.msra.mxu0 0.0
    %737 = vmatprep.subr.mxu0 0.0
    %738 = vmatpush1.xpose.msra.mxu0 0.0
    %739 = vmatprep.subr.mxu0 0.0
    %740 = vmatpush1.xpose.msra.mxu0 0.0
    %741 = vmatprep.subr.mxu0 0.0
    %742 = vmatpush1.xpose.msra.mxu0 0.0
    %743 = vmatprep.subr.mxu0 0.0
    %744 = vmatpush1.xpose.msra.mxu0 0.0
    %745 = vmatprep.subr.mxu0 0.0
    %746 = vmatpush1.xpose.msra.mxu0 0.0
    %747 = vmatprep.subr.mxu0 0.0
    %748 = vmatpush1.xpose.msra.mxu0 0.0
    %749 = vmatprep.subr.mxu0 0.0
    %750 = vmatpush1.xpose.msra.mxu0 0.0
    %751 = vmatprep.subr.mxu0 0.0
    %752 = vmatpush1.xpose.msra.mxu0 0.0
    %753 = vmatprep.subr.mxu0 0.0
    %754 = vmatpush1.xpose.msra.mxu0 0.0
    %755 = vmatprep.subr.mxu0 0.0
    %756 = vmatpush1.xpose.msra.mxu0 0.0
    %757 = vmatprep.mubr.f32.mxu0 0.0
    %758 = vmatmul.mubr.f32.gmra.mrb[0].mxu0 %v689
    %v759 = vpop.f32.mrb[0].mxu0
    %v760 = vadd.f32 0.0, %v759
    %v761 = vpop.f32.mrb[0].mxu0
    %762 = vdwg.mxu0
    %v763 = vsel %vm248, %v760, -inf
    %764 = vmax.xlane.f32.xlu0 %v763
    %v765 = vpop.xlane.xlu0 %764
    %v766 = vsub.f32 %v760, %v765
    %v767 = vmul.f32 %v766, 1.442695
    %v768 = vpow.pop %v767
    %v769 = vsel %vm248, %v768, 0.0
    %770 = vadd.xlane.f32.xlu0 %v769
    %v771 = vpop.xlane.xlu0 %770
    %772 = vrot.lane.b32.xlu0 %v512, 56
    %v773 = vpop.permute.xlu0 %772
    %v776 = vsel %vm248, %v768, 0
    %778 = vmatprep.subr.mxu0 0.0
    %779 = vmatpush1.msra.mxu0 %v773
    %780 = vmatprep.subr.mxu0 0.0
    %781 = vmatpush1.msra.mxu0 0.0
    %782 = vmatprep.subr.mxu0 0.0
    %783 = vmatpush1.msra.mxu0 0.0
    %784 = vmatprep.subr.mxu0 0.0
    %785 = vmatpush1.msra.mxu0 0.0
    %786 = vmatprep.subr.mxu0 0.0
    %787 = vmatpush1.msra.mxu0 0.0
    %788 = vmatprep.subr.mxu0 0.0
    %789 = vmatpush1.msra.mxu0 0.0
    %790 = vmatprep.subr.mxu0 0.0
    %791 = vmatpush1.msra.mxu0 0.0
    %792 = vmatprep.subr.mxu0 0.0
    %793 = vmatpush1.msra.mxu0 0.0
    %794 = vmatprep.subr.mxu0 0.0
    %795 = vmatpush1.msra.mxu0 0.0
    %796 = vmatprep.subr.mxu0 0.0
    %797 = vmatpush1.msra.mxu0 0.0
    %798 = vmatprep.subr.mxu0 0.0
    %799 = vmatpush1.msra.mxu0 0.0
    %800 = vmatprep.subr.mxu0 0.0
    %801 = vmatpush1.msra.mxu0 0.0
    %802 = vmatprep.subr.mxu0 0.0
    %803 = vmatpush1.msra.mxu0 0.0
    %804 = vmatprep.subr.mxu0 0.0
    %805 = vmatpush1.msra.mxu0 0.0
    %806 = vmatprep.subr.mxu0 0.0
    %807 = vmatpush1.msra.mxu0 0.0
    %808 = vmatprep.subr.mxu0 0.0
    %809 = vmatpush1.msra.mxu0 0.0
    %810 = vmatprep.subr.mxu0 0.0
    %811 = vmatpush1.msra.mxu0 0.0
    %812 = vmatprep.subr.mxu0 0.0
    %813 = vmatpush1.msra.mxu0 0.0
    %814 = vmatprep.subr.mxu0 0.0
    %815 = vmatpush1.msra.mxu0 0.0
    %816 = vmatprep.subr.mxu0 0.0
    %817 = vmatpush1.msra.mxu0 0.0
    %818 = vmatprep.subr.mxu0 0.0
    %819 = vmatpush1.msra.mxu0 0.0
    %820 = vmatprep.subr.mxu0 0.0
    %821 = vmatpush1.msra.mxu0 0.0
    %822 = vmatprep.subr.mxu0 0.0
    %823 = vmatpush1.msra.mxu0 0.0
    %824 = vmatprep.subr.mxu0 0.0
    %825 = vmatpush1.msra.mxu0 0.0
    %826 = vmatprep.subr.mxu0 0.0
    %827 = vmatpush1.msra.mxu0 0.0
    %828 = vmatprep.subr.mxu0 0.0
    %829 = vmatpush1.msra.mxu0 0.0
    %830 = vmatprep.subr.mxu0 0.0
    %831 = vmatpush1.msra.mxu0 0.0
    %832 = vmatprep.subr.mxu0 0.0
    %833 = vmatpush1.msra.mxu0 0.0
    %834 = vmatprep.subr.mxu0 0.0
    %835 = vmatpush1.msra.mxu0 0.0
    %836 = vmatprep.subr.mxu0 0.0
    %837 = vmatpush1.msra.mxu0 0.0
    %838 = vmatprep.subr.mxu0 0.0
    %839 = vmatpush1.msra.mxu0 0.0
    %840 = vmatprep.subr.mxu0 0.0
    %841 = vmatpush1.msra.mxu0 0.0
    %842 = vmatprep.mubr.f32.mxu0 0.0
    %843 = vmatmul.mubr.f32.gmra.mrb[0].mxu0 %v776
    %v844 = vpop.f32.mrb[0].mxu0
    %v845 = vadd.f32 0.0, %v844
    %v846 = vpop.f32.mrb[0].mxu0
    %847 = vdwg.mxu0
    %v848 = vrcp.pop %v771
    %v849 = vmul.f32 %v845, %v848
    %851 = vrot.lane.b32.xlu0 %v849, 8
    %v852 = vpop.permute.xlu0 %851
    %vm854 = vcmask 130112
    %855 = vst.msk [vmem:[#allocation2] sm:$0xff] %vm854, %v852
    %856 = vrot.lane.b32.xlu0 %v512, 112
    %v857 = vpop.permute.xlu0 %856
    %858 = vrot.lane.b32.xlu0 %v512, 80
    %v859 = vpop.permute.xlu0 %858
    %v860 = vsel %vm248, %v857, 0
    %v862 = vsel %vm248, %v859, 0
    %864 = vmatprep.subr.mxu0 0.0
    %865 = vmatpush1.xpose.msra.mxu0 %v862
    %866 = vmatprep.subr.mxu0 0.0
    %867 = vmatpush1.xpose.msra.mxu0 0.0
    %868 = vmatprep.subr.mxu0 0.0
    %869 = vmatpush1.xpose.msra.mxu0 0.0
    %870 = vmatprep.subr.mxu0 0.0
    %871 = vmatpush1.xpose.msra.mxu0 0.0
    %872 = vmatprep.subr.mxu0 0.0
    %873 = vmatpush1.xpose.msra.mxu0 0.0
    %874 = vmatprep.subr.mxu0 0.0
    %875 = vmatpush1.xpose.msra.mxu0 0.0
    %876 = vmatprep.subr.mxu0 0.0
    %877 = vmatpush1.xpose.msra.mxu0 0.0
    %878 = vmatprep.subr.mxu0 0.0
    %879 = vmatpush1.xpose.msra.mxu0 0.0
    %880 = vmatprep.subr.mxu0 0.0
    %881 = vmatpush1.xpose.msra.mxu0 0.0
    %882 = vmatprep.subr.mxu0 0.0
    %883 = vmatpush1.xpose.msra.mxu0 0.0
    %884 = vmatprep.subr.mxu0 0.0
    %885 = vmatpush1.xpose.msra.mxu0 0.0
    %886 = vmatprep.subr.mxu0 0.0
    %887 = vmatpush1.xpose.msra.mxu0 0.0
    %888 = vmatprep.subr.mxu0 0.0
    %889 = vmatpush1.xpose.msra.mxu0 0.0
    %890 = vmatprep.subr.mxu0 0.0
    %891 = vmatpush1.xpose.msra.mxu0 0.0
    %892 = vmatprep.subr.mxu0 0.0
    %893 = vmatpush1.xpose.msra.mxu0 0.0
    %894 = vmatprep.subr.mxu0 0.0
    %895 = vmatpush1.xpose.msra.mxu0 0.0
    %896 = vmatprep.subr.mxu0 0.0
    %897 = vmatpush1.xpose.msra.mxu0 0.0
    %898 = vmatprep.subr.mxu0 0.0
    %899 = vmatpush1.xpose.msra.mxu0 0.0
    %900 = vmatprep.subr.mxu0 0.0
    %901 = vmatpush1.xpose.msra.mxu0 0.0
    %902 = vmatprep.subr.mxu0 0.0
    %903 = vmatpush1.xpose.msra.mxu0 0.0
    %904 = vmatprep.subr.mxu0 0.0
    %905 = vmatpush1.xpose.msra.mxu0 0.0
    %906 = vmatprep.subr.mxu0 0.0
    %907 = vmatpush1.xpose.msra.mxu0 0.0
    %908 = vmatprep.subr.mxu0 0.0
    %909 = vmatpush1.xpose.msra.mxu0 0.0
    %910 = vmatprep.subr.mxu0 0.0
    %911 = vmatpush1.xpose.msra.mxu0 0.0
    %912 = vmatprep.subr.mxu0 0.0
    %913 = vmatpush1.xpose.msra.mxu0 0.0
    %914 = vmatprep.subr.mxu0 0.0
    %915 = vmatpush1.xpose.msra.mxu0 0.0
    %916 = vmatprep.subr.mxu0 0.0
    %917 = vmatpush1.xpose.msra.mxu0 0.0
    %918 = vmatprep.subr.mxu0 0.0
    %919 = vmatpush1.xpose.msra.mxu0 0.0
    %920 = vmatprep.subr.mxu0 0.0
    %921 = vmatpush1.xpose.msra.mxu0 0.0
    %922 = vmatprep.subr.mxu0 0.0
    %923 = vmatpush1.xpose.msra.mxu0 0.0
    %924 = vmatprep.subr.mxu0 0.0
    %925 = vmatpush1.xpose.msra.mxu0 0.0
    %926 = vmatprep.subr.mxu0 0.0
    %927 = vmatpush1.xpose.msra.mxu0 0.0
    %928 = vmatprep.mubr.f32.mxu0 0.0
    %929 = vmatmul.mubr.f32.gmra.mrb[0].mxu0 %v860
    %v930 = vpop.f32.mrb[0].mxu0
    %v931 = vadd.f32 0.0, %v930
    %v932 = vpop.f32.mrb[0].mxu0
    %933 = vdwg.mxu0
    %v934 = vsel %vm248, %v931, -inf
    %935 = vmax.xlane.f32.xlu0 %v934
    %v936 = vpop.xlane.xlu0 %935
    %v937 = vsub.f32 %v931, %v936
    %v938 = vmul.f32 %v937, 1.442695
    %v939 = vpow.pop %v938
    %v940 = vsel %vm248, %v939, 0.0
    %941 = vadd.xlane.f32.xlu0 %v940
    %v942 = vpop.xlane.xlu0 %941
    %943 = vrot.lane.b32.xlu0 %v512, 48
    %v944 = vpop.permute.xlu0 %943
    %v947 = vsel %vm248, %v939, 0
    %949 = vmatprep.subr.mxu0 0.0
    %950 = vmatpush1.msra.mxu0 %v944
    %951 = vmatprep.subr.mxu0 0.0
    %952 = vmatpush1.msra.mxu0 0.0
    %953 = vmatprep.subr.mxu0 0.0
    %954 = vmatpush1.msra.mxu0 0.0
    %955 = vmatprep.subr.mxu0 0.0
    %956 = vmatpush1.msra.mxu0 0.0
    %957 = vmatprep.subr.mxu0 0.0
    %958 = vmatpush1.msra.mxu0 0.0
    %959 = vmatprep.subr.mxu0 0.0
    %960 = vmatpush1.msra.mxu0 0.0
    %961 = vmatprep.subr.mxu0 0.0
    %962 = vmatpush1.msra.mxu0 0.0
    %963 = vmatprep.subr.mxu0 0.0
    %964 = vmatpush1.msra.mxu0 0.0
    %965 = vmatprep.subr.mxu0 0.0
    %966 = vmatpush1.msra.mxu0 0.0
    %967 = vmatprep.subr.mxu0 0.0
    %968 = vmatpush1.msra.mxu0 0.0
    %969 = vmatprep.subr.mxu0 0.0
    %970 = vmatpush1.msra.mxu0 0.0
    %971 = vmatprep.subr.mxu0 0.0
    %972 = vmatpush1.msra.mxu0 0.0
    %973 = vmatprep.subr.mxu0 0.0
    %974 = vmatpush1.msra.mxu0 0.0
    %975 = vmatprep.subr.mxu0 0.0
    %976 = vmatpush1.msra.mxu0 0.0
    %977 = vmatprep.subr.mxu0 0.0
    %978 = vmatpush1.msra.mxu0 0.0
    %979 = vmatprep.subr.mxu0 0.0
    %980 = vmatpush1.msra.mxu0 0.0
    %981 = vmatprep.subr.mxu0 0.0
    %982 = vmatpush1.msra.mxu0 0.0
    %983 = vmatprep.subr.mxu0 0.0
    %984 = vmatpush1.msra.mxu0 0.0
    %985 = vmatprep.subr.mxu0 0.0
    %986 = vmatpush1.msra.mxu0 0.0
    %987 = vmatprep.subr.mxu0 0.0
    %988 = vmatpush1.msra.mxu0 0.0
    %989 = vmatprep.subr.mxu0 0.0
    %990 = vmatpush1.msra.mxu0 0.0
    %991 = vmatprep.subr.mxu0 0.0
    %992 = vmatpush1.msra.mxu0 0.0
    %993 = vmatprep.subr.mxu0 0.0
    %994 = vmatpush1.msra.mxu0 0.0
    %995 = vmatprep.subr.mxu0 0.0
    %996 = vmatpush1.msra.mxu0 0.0
    %997 = vmatprep.subr.mxu0 0.0
    %998 = vmatpush1.msra.mxu0 0.0
    %999 = vmatprep.subr.mxu0 0.0
    %1000 = vmatpush1.msra.mxu0 0.0
    %1001 = vmatprep.subr.mxu0 0.0
    %1002 = vmatpush1.msra.mxu0 0.0
    %1003 = vmatprep.subr.mxu0 0.0
    %1004 = vmatpush1.msra.mxu0 0.0
    %1005 = vmatprep.subr.mxu0 0.0
    %1006 = vmatpush1.msra.mxu0 0.0
    %1007 = vmatprep.subr.mxu0 0.0
    %1008 = vmatpush1.msra.mxu0 0.0
    %1009 = vmatprep.subr.mxu0 0.0
    %1010 = vmatpush1.msra.mxu0 0.0
    %1011 = vmatprep.subr.mxu0 0.0
    %1012 = vmatpush1.msra.mxu0 0.0
    %1013 = vmatprep.mubr.f32.mxu0 0.0
    %1014 = vmatmul.mubr.f32.gmra.mrb[0].mxu0 %v947
    %v1015 = vpop.f32.mrb[0].mxu0
    %v1016 = vadd.f32 0.0, %v1015
    %v1017 = vpop.f32.mrb[0].mxu0
    %1018 = vdwg.mxu0
    %v1019 = vrcp.pop %v942
    %v1020 = vmul.f32 %v1016, %v1019
    %1022 = vrot.lane.b32.xlu0 %v1020, 16
    %v1023 = vpop.permute.xlu0 %1022
    %vm1025 = vcmask 195712
    %1026 = vst.msk [vmem:[#allocation2] sm:$0xff] %vm1025, %v1023
    %1027 = vrot.lane.b32.xlu0 %v512, 104
    %v1028 = vpop.permute.xlu0 %1027
    %1029 = vrot.lane.b32.xlu0 %v512, 72
    %v1030 = vpop.permute.xlu0 %1029
    %v1031 = vsel %vm248, %v1028, 0
    %v1033 = vsel %vm248, %v1030, 0
    %1035 = vmatprep.subr.mxu0 0.0
    %1036 = vmatpush1.xpose.msra.mxu0 %v1033
    %1037 = vmatprep.subr.mxu0 0.0
    %1038 = vmatpush1.xpose.msra.mxu0 0.0
    %1039 = vmatprep.subr.mxu0 0.0
    %1040 = vmatpush1.xpose.msra.mxu0 0.0
    %1041 = vmatprep.subr.mxu0 0.0
    %1042 = vmatpush1.xpose.msra.mxu0 0.0
    %1043 = vmatprep.subr.mxu0 0.0
    %1044 = vmatpush1.xpose.msra.mxu0 0.0
    %1045 = vmatprep.subr.mxu0 0.0
    %1046 = vmatpush1.xpose.msra.mxu0 0.0
    %1047 = vmatprep.subr.mxu0 0.0
    %1048 = vmatpush1.xpose.msra.mxu0 0.0
    %1049 = vmatprep.subr.mxu0 0.0
    %1050 = vmatpush1.xpose.msra.mxu0 0.0
    %1051 = vmatprep.subr.mxu0 0.0
    %1052 = vmatpush1.xpose.msra.mxu0 0.0
    %1053 = vmatprep.subr.mxu0 0.0
    %1054 = vmatpush1.xpose.msra.mxu0 0.0
    %1055 = vmatprep.subr.mxu0 0.0
    %1056 = vmatpush1.xpose.msra.mxu0 0.0
    %1057 = vmatprep.subr.mxu0 0.0
    %1058 = vmatpush1.xpose.msra.mxu0 0.0
    %1059 = vmatprep.subr.mxu0 0.0
    %1060 = vmatpush1.xpose.msra.mxu0 0.0
    %1061 = vmatprep.subr.mxu0 0.0
    %1062 = vmatpush1.xpose.msra.mxu0 0.0
    %1063 = vmatprep.subr.mxu0 0.0
    %1064 = vmatpush1.xpose.msra.mxu0 0.0
    %1065 = vmatprep.subr.mxu0 0.0
    %1066 = vmatpush1.xpose.msra.mxu0 0.0
    %1067 = vmatprep.subr.mxu0 0.0
    %1068 = vmatpush1.xpose.msra.mxu0 0.0
    %1069 = vmatprep.subr.mxu0 0.0
    %1070 = vmatpush1.xpose.msra.mxu0 0.0
    %1071 = vmatprep.subr.mxu0 0.0
    %1072 = vmatpush1.xpose.msra.mxu0 0.0
    %1073 = vmatprep.subr.mxu0 0.0
    %1074 = vmatpush1.xpose.msra.mxu0 0.0
    %1075 = vmatprep.subr.mxu0 0.0
    %1076 = vmatpush1.xpose.msra.mxu0 0.0
    %1077 = vmatprep.subr.mxu0 0.0
    %1078 = vmatpush1.xpose.msra.mxu0 0.0
    %1079 = vmatprep.subr.mxu0 0.0
    %1080 = vmatpush1.xpose.msra.mxu0 0.0
    %1081 = vmatprep.subr.mxu0 0.0
    %1082 = vmatpush1.xpose.msra.mxu0 0.0
    %1083 = vmatprep.subr.mxu0 0.0
    %1084 = vmatpush1.xpose.msra.mxu0 0.0
    %1085 = vmatprep.subr.mxu0 0.0
    %1086 = vmatpush1.xpose.msra.mxu0 0.0
    %1087 = vmatprep.subr.mxu0 0.0
    %1088 = vmatpush1.xpose.msra.mxu0 0.0
    %1089 = vmatprep.subr.mxu0 0.0
    %1090 = vmatpush1.xpose.msra.mxu0 0.0
    %1091 = vmatprep.subr.mxu0 0.0
    %1092 = vmatpush1.xpose.msra.mxu0 0.0
    %1093 = vmatprep.subr.mxu0 0.0
    %1094 = vmatpush1.xpose.msra.mxu0 0.0
    %1095 = vmatprep.subr.mxu0 0.0
    %1096 = vmatpush1.xpose.msra.mxu0 0.0
    %1097 = vmatprep.subr.mxu0 0.0
    %1098 = vmatpush1.xpose.msra.mxu0 0.0
    %1099 = vmatprep.mubr.f32.mxu0 0.0
    %1100 = vmatmul.mubr.f32.gmra.mrb[0].mxu0 %v1031
    %v1101 = vpop.f32.mrb[0].mxu0
    %v1102 = vadd.f32 0.0, %v1101
    %v1103 = vpop.f32.mrb[0].mxu0
    %1104 = vdwg.mxu0
    %v1105 = vsel %vm248, %v1102, -inf
    %1106 = vmax.xlane.f32.xlu0 %v1105
    %v1107 = vpop.xlane.xlu0 %1106
    %v1108 = vsub.f32 %v1102, %v1107
    %v1109 = vmul.f32 %v1108, 1.442695
    %v1110 = vpow.pop %v1109
    %v1111 = vsel %vm248, %v1110, 0.0
    %1112 = vadd.xlane.f32.xlu0 %v1111
    %v1113 = vpop.xlane.xlu0 %1112
    %1114 = vrot.lane.b32.xlu0 %v512, 40
    %v1115 = vpop.permute.xlu0 %1114
    %v1118 = vsel %vm248, %v1110, 0
    %1120 = vmatprep.subr.mxu0 0.0
    %1121 = vmatpush1.msra.mxu0 %v1115
    %1122 = vmatprep.subr.mxu0 0.0
    %1123 = vmatpush1.msra.mxu0 0.0
    %1124 = vmatprep.subr.mxu0 0.0
    %1125 = vmatpush1.msra.mxu0 0.0
    %1126 = vmatprep.subr.mxu0 0.0
    %1127 = vmatpush1.msra.mxu0 0.0
    %1128 = vmatprep.subr.mxu0 0.0
    %1129 = vmatpush1.msra.mxu0 0.0
    %1130 = vmatprep.subr.mxu0 0.0
    %1131 = vmatpush1.msra.mxu0 0.0
    %1132 = vmatprep.subr.mxu0 0.0
    %1133 = vmatpush1.msra.mxu0 0.0
    %1134 = vmatprep.subr.mxu0 0.0
    %1135 = vmatpush1.msra.mxu0 0.0
    %1136 = vmatprep.subr.mxu0 0.0
    %1137 = vmatpush1.msra.mxu0 0.0
    %1138 = vmatprep.subr.mxu0 0.0
    %1139 = vmatpush1.msra.mxu0 0.0
    %1140 = vmatprep.subr.mxu0 0.0
    %1141 = vmatpush1.msra.mxu0 0.0
    %1142 = vmatprep.subr.mxu0 0.0
    %1143 = vmatpush1.msra.mxu0 0.0
    %1144 = vmatprep.subr.mxu0 0.0
    %1145 = vmatpush1.msra.mxu0 0.0
    %1146 = vmatprep.subr.mxu0 0.0
    %1147 = vmatpush1.msra.mxu0 0.0
    %1148 = vmatprep.subr.mxu0 0.0
    %1149 = vmatpush1.msra.mxu0 0.0
    %1150 = vmatprep.subr.mxu0 0.0
    %1151 = vmatpush1.msra.mxu0 0.0
    %1152 = vmatprep.subr.mxu0 0.0
    %1153 = vmatpush1.msra.mxu0 0.0
    %1154 = vmatprep.subr.mxu0 0.0
    %1155 = vmatpush1.msra.mxu0 0.0
    %1156 = vmatprep.subr.mxu0 0.0
    %1157 = vmatpush1.msra.mxu0 0.0
    %1158 = vmatprep.subr.mxu0 0.0
    %1159 = vmatpush1.msra.mxu0 0.0
    %1160 = vmatprep.subr.mxu0 0.0
    %1161 = vmatpush1.msra.mxu0 0.0
    %1162 = vmatprep.subr.mxu0 0.0
    %1163 = vmatpush1.msra.mxu0 0.0
    %1164 = vmatprep.subr.mxu0 0.0
    %1165 = vmatpush1.msra.mxu0 0.0
    %1166 = vmatprep.subr.mxu0 0.0
    %1167 = vmatpush1.msra.mxu0 0.0
    %1168 = vmatprep.subr.mxu0 0.0
    %1169 = vmatpush1.msra.mxu0 0.0
    %1170 = vmatprep.subr.mxu0 0.0
    %1171 = vmatpush1.msra.mxu0 0.0
    %1172 = vmatprep.subr.mxu0 0.0
    %1173 = vmatpush1.msra.mxu0 0.0
    %1174 = vmatprep.subr.mxu0 0.0
    %1175 = vmatpush1.msra.mxu0 0.0
    %1176 = vmatprep.subr.mxu0 0.0
    %1177 = vmatpush1.msra.mxu0 0.0
    %1178 = vmatprep.subr.mxu0 0.0
    %1179 = vmatpush1.msra.mxu0 0.0
    %1180 = vmatprep.subr.mxu0 0.0
    %1181 = vmatpush1.msra.mxu0 0.0
    %1182 = vmatprep.subr.mxu0 0.0
    %1183 = vmatpush1.msra.mxu0 0.0
    %1184 = vmatprep.mubr.f32.mxu0 0.0
    %1185 = vmatmul.mubr.f32.gmra.mrb[0].mxu0 %v1118
    %v1186 = vpop.f32.mrb[0].mxu0
    %v1187 = vadd.f32 0.0, %v1186
    %v1188 = vpop.f32.mrb[0].mxu0
    %1189 = vdwg.mxu0
    %v1190 = vrcp.pop %v1113
    %v1191 = vmul.f32 %v1187, %v1190
    %1193 = vrot.lane.b32.xlu0 %v1191, 24
    %v1194 = vpop.permute.xlu0 %1193
    %vm1196 = vcmask 261312
    %1197 = vst.msk [vmem:[#allocation2] sm:$0xff] %vm1196, %v1194
    %1199 = vrot.lane.b32.xlu0 %v517, 96
    %v1200 = vpop.permute.xlu0 %1199
    %v1201 = vsel %vm248, %v517, 0
    %v1203 = vsel %vm248, %v1200, 0
    %1205 = vmatprep.subr.mxu0 0.0
    %1206 = vmatpush1.xpose.msra.mxu0 %v1203
    %1207 = vmatprep.subr.mxu0 0.0
    %1208 = vmatpush1.xpose.msra.mxu0 0.0
    %1209 = vmatprep.subr.mxu0 0.0
    %1210 = vmatpush1.xpose.msra.mxu0 0.0
    %1211 = vmatprep.subr.mxu0 0.0
    %1212 = vmatpush1.xpose.msra.mxu0 0.0
    %1213 = vmatprep.subr.mxu0 0.0
    %1214 = vmatpush1.xpose.msra.mxu0 0.0
    %1215 = vmatprep.subr.mxu0 0.0
    %1216 = vmatpush1.xpose.msra.mxu0 0.0
    %1217 = vmatprep.subr.mxu0 0.0
    %1218 = vmatpush1.xpose.msra.mxu0 0.0
    %1219 = vmatprep.subr.mxu0 0.0
    %1220 = vmatpush1.xpose.msra.mxu0 0.0
    %1221 = vmatprep.subr.mxu0 0.0
    %1222 = vmatpush1.xpose.msra.mxu0 0.0
    %1223 = vmatprep.subr.mxu0 0.0
    %1224 = vmatpush1.xpose.msra.mxu0 0.0
    %1225 = vmatprep.subr.mxu0 0.0
    %1226 = vmatpush1.xpose.msra.mxu0 0.0
    %1227 = vmatprep.subr.mxu0 0.0
    %1228 = vmatpush1.xpose.msra.mxu0 0.0
    %1229 = vmatprep.subr.mxu0 0.0
    %1230 = vmatpush1.xpose.msra.mxu0 0.0
    %1231 = vmatprep.subr.mxu0 0.0
    %1232 = vmatpush1.xpose.msra.mxu0 0.0
    %1233 = vmatprep.subr.mxu0 0.0
    %1234 = vmatpush1.xpose.msra.mxu0 0.0
    %1235 = vmatprep.subr.mxu0 0.0
    %1236 = vmatpush1.xpose.msra.mxu0 0.0
    %1237 = vmatprep.subr.mxu0 0.0
    %1238 = vmatpush1.xpose.msra.mxu0 0.0
    %1239 = vmatprep.subr.mxu0 0.0
    %1240 = vmatpush1.xpose.msra.mxu0 0.0
    %1241 = vmatprep.subr.mxu0 0.0
    %1242 = vmatpush1.xpose.msra.mxu0 0.0
    %1243 = vmatprep.subr.mxu0 0.0
    %1244 = vmatpush1.xpose.msra.mxu0 0.0
    %1245 = vmatprep.subr.mxu0 0.0
    %1246 = vmatpush1.xpose.msra.mxu0 0.0
    %1247 = vmatprep.subr.mxu0 0.0
    %1248 = vmatpush1.xpose.msra.mxu0 0.0
    %1249 = vmatprep.subr.mxu0 0.0
    %1250 = vmatpush1.xpose.msra.mxu0 0.0
    %1251 = vmatprep.subr.mxu0 0.0
    %1252 = vmatpush1.xpose.msra.mxu0 0.0
    %1253 = vmatprep.subr.mxu0 0.0
    %1254 = vmatpush1.xpose.msra.mxu0 0.0
    %1255 = vmatprep.subr.mxu0 0.0
    %1256 = vmatpush1.xpose.msra.mxu0 0.0
    %1257 = vmatprep.subr.mxu0 0.0
    %1258 = vmatpush1.xpose.msra.mxu0 0.0
    %1259 = vmatprep.subr.mxu0 0.0
    %1260 = vmatpush1.xpose.msra.mxu0 0.0
    %1261 = vmatprep.subr.mxu0 0.0
    %1262 = vmatpush1.xpose.msra.mxu0 0.0
    %1263 = vmatprep.subr.mxu0 0.0
    %1264 = vmatpush1.xpose.msra.mxu0 0.0
    %1265 = vmatprep.subr.mxu0 0.0
    %1266 = vmatpush1.xpose.msra.mxu0 0.0
    %1267 = vmatprep.subr.mxu0 0.0
    %1268 = vmatpush1.xpose.msra.mxu0 0.0
    %1269 = vmatprep.mubr.f32.mxu0 0.0
    %1270 = vmatmul.mubr.f32.gmra.mrb[0].mxu0 %v1201
    %v1271 = vpop.f32.mrb[0].mxu0
    %v1272 = vadd.f32 0.0, %v1271
    %v1273 = vpop.f32.mrb[0].mxu0
    %1274 = vdwg.mxu0
    %v1275 = vsel %vm248, %v1272, -inf
    %1276 = vmax.xlane.f32.xlu0 %v1275
    %v1277 = vpop.xlane.xlu0 %1276
    %v1278 = vsub.f32 %v1272, %v1277
    %v1279 = vmul.f32 %v1278, 1.442695
    %v1280 = vpow.pop %v1279
    %v1281 = vsel %vm248, %v1280, 0.0
    %1282 = vadd.xlane.f32.xlu0 %v1281
    %v1283 = vpop.xlane.xlu0 %1282
    %1284 = vrot.lane.b32.xlu0 %v517, 64
    %v1285 = vpop.permute.xlu0 %1284
    %v1288 = vsel %vm248, %v1280, 0
    %1290 = vmatprep.subr.mxu0 0.0
    %1291 = vmatpush1.msra.mxu0 %v1285
    %1292 = vmatprep.subr.mxu0 0.0
    %1293 = vmatpush1.msra.mxu0 0.0
    %1294 = vmatprep.subr.mxu0 0.0
    %1295 = vmatpush1.msra.mxu0 0.0
    %1296 = vmatprep.subr.mxu0 0.0
    %1297 = vmatpush1.msra.mxu0 0.0
    %1298 = vmatprep.subr.mxu0 0.0
    %1299 = vmatpush1.msra.mxu0 0.0
    %1300 = vmatprep.subr.mxu0 0.0
    %1301 = vmatpush1.msra.mxu0 0.0
    %1302 = vmatprep.subr.mxu0 0.0
    %1303 = vmatpush1.msra.mxu0 0.0
    %1304 = vmatprep.subr.mxu0 0.0
    %1305 = vmatpush1.msra.mxu0 0.0
    %1306 = vmatprep.subr.mxu0 0.0
    %1307 = vmatpush1.msra.mxu0 0.0
    %1308 = vmatprep.subr.mxu0 0.0
    %1309 = vmatpush1.msra.mxu0 0.0
    %1310 = vmatprep.subr.mxu0 0.0
    %1311 = vmatpush1.msra.mxu0 0.0
    %1312 = vmatprep.subr.mxu0 0.0
    %1313 = vmatpush1.msra.mxu0 0.0
    %1314 = vmatprep.subr.mxu0 0.0
    %1315 = vmatpush1.msra.mxu0 0.0
    %1316 = vmatprep.subr.mxu0 0.0
    %1317 = vmatpush1.msra.mxu0 0.0
    %1318 = vmatprep.subr.mxu0 0.0
    %1319 = vmatpush1.msra.mxu0 0.0
    %1320 = vmatprep.subr.mxu0 0.0
    %1321 = vmatpush1.msra.mxu0 0.0
    %1322 = vmatprep.subr.mxu0 0.0
    %1323 = vmatpush1.msra.mxu0 0.0
    %1324 = vmatprep.subr.mxu0 0.0
    %1325 = vmatpush1.msra.mxu0 0.0
    %1326 = vmatprep.subr.mxu0 0.0
    %1327 = vmatpush1.msra.mxu0 0.0
    %1328 = vmatprep.subr.mxu0 0.0
    %1329 = vmatpush1.msra.mxu0 0.0
    %1330 = vmatprep.subr.mxu0 0.0
    %1331 = vmatpush1.msra.mxu0 0.0
    %1332 = vmatprep.subr.mxu0 0.0
    %1333 = vmatpush1.msra.mxu0 0.0
    %1334 = vmatprep.subr.mxu0 0.0
    %1335 = vmatpush1.msra.mxu0 0.0
    %1336 = vmatprep.subr.mxu0 0.0
    %1337 = vmatpush1.msra.mxu0 0.0
    %1338 = vmatprep.subr.mxu0 0.0
    %1339 = vmatpush1.msra.mxu0 0.0
    %1340 = vmatprep.subr.mxu0 0.0
    %1341 = vmatpush1.msra.mxu0 0.0
    %1342 = vmatprep.subr.mxu0 0.0
    %1343 = vmatpush1.msra.mxu0 0.0
    %1344 = vmatprep.subr.mxu0 0.0
    %1345 = vmatpush1.msra.mxu0 0.0
    %1346 = vmatprep.subr.mxu0 0.0
    %1347 = vmatpush1.msra.mxu0 0.0
    %1348 = vmatprep.subr.mxu0 0.0
    %1349 = vmatpush1.msra.mxu0 0.0
    %1350 = vmatprep.subr.mxu0 0.0
    %1351 = vmatpush1.msra.mxu0 0.0
    %1352 = vmatprep.subr.mxu0 0.0
    %1353 = vmatpush1.msra.mxu0 0.0
    %1354 = vmatprep.mubr.f32.mxu0 0.0
    %1355 = vmatmul.mubr.f32.gmra.mrb[0].mxu0 %v1288
    %v1356 = vpop.f32.mrb[0].mxu0
    %v1357 = vadd.f32 0.0, %v1356
    %v1358 = vpop.f32.mrb[0].mxu0
    %1359 = vdwg.mxu0
    %v1360 = vrcp.pop %v1283
    %v1361 = vmul.f32 %v1357, %v1360
    %1362 = vst.msk [vmem:[#allocation2 + $0x8] sm:$0xff] %vm248, %v1361
    %1363 = vrot.lane.b32.xlu0 %v517, 120
    %v1364 = vpop.permute.xlu0 %1363
    %1365 = vrot.lane.b32.xlu0 %v517, 88
    %v1366 = vpop.permute.xlu0 %1365
    %v1367 = vsel %vm248, %v1364, 0
    %v1369 = vsel %vm248, %v1366, 0
    %1371 = vmatprep.subr.mxu0 0.0
    %1372 = vmatpush1.xpose.msra.mxu0 %v1369
    %1373 = vmatprep.subr.mxu0 0.0
    %1374 = vmatpush1.xpose.msra.mxu0 0.0
    %1375 = vmatprep.subr.mxu0 0.0
    %1376 = vmatpush1.xpose.msra.mxu0 0.0
    %1377 = vmatprep.subr.mxu0 0.0
    %1378 = vmatpush1.xpose.msra.mxu0 0.0
    %1379 = vmatprep.subr.mxu0 0.0
    %1380 = vmatpush1.xpose.msra.mxu0 0.0
    %1381 = vmatprep.subr.mxu0 0.0
    %1382 = vmatpush1.xpose.msra.mxu0 0.0
    %1383 = vmatprep.subr.mxu0 0.0
    %1384 = vmatpush1.xpose.msra.mxu0 0.0
    %1385 = vmatprep.subr.mxu0 0.0
    %1386 = vmatpush1.xpose.msra.mxu0 0.0
    %1387 = vmatprep.subr.mxu0 0.0
    %1388 = vmatpush1.xpose.msra.mxu0 0.0
    %1389 = vmatprep.subr.mxu0 0.0
    %1390 = vmatpush1.xpose.msra.mxu0 0.0
    %1391 = vmatprep.subr.mxu0 0.0
    %1392 = vmatpush1.xpose.msra.mxu0 0.0
    %1393 = vmatprep.subr.mxu0 0.0
    %1394 = vmatpush1.xpose.msra.mxu0 0.0
    %1395 = vmatprep.subr.mxu0 0.0
    %1396 = vmatpush1.xpose.msra.mxu0 0.0
    %1397 = vmatprep.subr.mxu0 0.0
    %1398 = vmatpush1.xpose.msra.mxu0 0.0
    %1399 = vmatprep.subr.mxu0 0.0
    %1400 = vmatpush1.xpose.msra.mxu0 0.0
    %1401 = vmatprep.subr.mxu0 0.0
    %1402 = vmatpush1.xpose.msra.mxu0 0.0
    %1403 = vmatprep.subr.mxu0 0.0
    %1404 = vmatpush1.xpose.msra.mxu0 0.0
    %1405 = vmatprep.subr.mxu0 0.0
    %1406 = vmatpush1.xpose.msra.mxu0 0.0
    %1407 = vmatprep.subr.mxu0 0.0
    %1408 = vmatpush1.xpose.msra.mxu0 0.0
    %1409 = vmatprep.subr.mxu0 0.0
    %1410 = vmatpush1.xpose.msra.mxu0 0.0
    %1411 = vmatprep.subr.mxu0 0.0
    %1412 = vmatpush1.xpose.msra.mxu0 0.0
    %1413 = vmatprep.subr.mxu0 0.0
    %1414 = vmatpush1.xpose.msra.mxu0 0.0
    %1415 = vmatprep.subr.mxu0 0.0
    %1416 = vmatpush1.xpose.msra.mxu0 0.0
    %1417 = vmatprep.subr.mxu0 0.0
    %1418 = vmatpush1.xpose.msra.mxu0 0.0
    %1419 = vmatprep.subr.mxu0 0.0
    %1420 = vmatpush1.xpose.msra.mxu0 0.0
    %1421 = vmatprep.subr.mxu0 0.0
    %1422 = vmatpush1.xpose.msra.mxu0 0.0
    %1423 = vmatprep.subr.mxu0 0.0
    %1424 = vmatpush1.xpose.msra.mxu0 0.0
    %1425 = vmatprep.subr.mxu0 0.0
    %1426 = vmatpush1.xpose.msra.mxu0 0.0
    %1427 = vmatprep.subr.mxu0 0.0
    %1428 = vmatpush1.xpose.msra.mxu0 0.0
    %1429 = vmatprep.subr.mxu0 0.0
    %1430 = vmatpush1.xpose.msra.mxu0 0.0
    %1431 = vmatprep.subr.mxu0 0.0
    %1432 = vmatpush1.xpose.msra.mxu0 0.0
    %1433 = vmatprep.subr.mxu0 0.0
    %1434 = vmatpush1.xpose.msra.mxu0 0.0
    %1435 = vmatprep.mubr.f32.mxu0 0.0
    %1436 = vmatmul.mubr.f32.gmra.mrb[0].mxu0 %v1367
    %v1437 = vpop.f32.mrb[0].mxu0
    %v1438 = vadd.f32 0.0, %v1437
    %v1439 = vpop.f32.mrb[0].mxu0
    %1440 = vdwg.mxu0
    %v1441 = vsel %vm248, %v1438, -inf
    %1442 = vmax.xlane.f32.xlu0 %v1441
    %v1443 = vpop.xlane.xlu0 %1442
    %v1444 = vsub.f32 %v1438, %v1443
    %v1445 = vmul.f32 %v1444, 1.442695
    %v1446 = vpow.pop %v1445
    %v1447 = vsel %vm248, %v1446, 0.0
    %1448 = vadd.xlane.f32.xlu0 %v1447
    %v1449 = vpop.xlane.xlu0 %1448
    %1450 = vrot.lane.b32.xlu0 %v517, 56
    %v1451 = vpop.permute.xlu0 %1450
    %v1454 = vsel %vm248, %v1446, 0
    %1456 = vmatprep.subr.mxu0 0.0
    %1457 = vmatpush1.msra.mxu0 %v1451
    %1458 = vmatprep.subr.mxu0 0.0
    %1459 = vmatpush1.msra.mxu0 0.0
    %1460 = vmatprep.subr.mxu0 0.0
    %1461 = vmatpush1.msra.mxu0 0.0
    %1462 = vmatprep.subr.mxu0 0.0
    %1463 = vmatpush1.msra.mxu0 0.0
    %1464 = vmatprep.subr.mxu0 0.0
    %1465 = vmatpush1.msra.mxu0 0.0
    %1466 = vmatprep.subr.mxu0 0.0
    %1467 = vmatpush1.msra.mxu0 0.0
    %1468 = vmatprep.subr.mxu0 0.0
    %1469 = vmatpush1.msra.mxu0 0.0
    %1470 = vmatprep.subr.mxu0 0.0
    %1471 = vmatpush1.msra.mxu0 0.0
    %1472 = vmatprep.subr.mxu0 0.0
    %1473 = vmatpush1.msra.mxu0 0.0
    %1474 = vmatprep.subr.mxu0 0.0
    %1475 = vmatpush1.msra.mxu0 0.0
    %1476 = vmatprep.subr.mxu0 0.0
    %1477 = vmatpush1.msra.mxu0 0.0
    %1478 = vmatprep.subr.mxu0 0.0
    %1479 = vmatpush1.msra.mxu0 0.0
    %1480 = vmatprep.subr.mxu0 0.0
    %1481 = vmatpush1.msra.mxu0 0.0
    %1482 = vmatprep.subr.mxu0 0.0
    %1483 = vmatpush1.msra.mxu0 0.0
    %1484 = vmatprep.subr.mxu0 0.0
    %1485 = vmatpush1.msra.mxu0 0.0
    %1486 = vmatprep.subr.mxu0 0.0
    %1487 = vmatpush1.msra.mxu0 0.0
    %1488 = vmatprep.subr.mxu0 0.0
    %1489 = vmatpush1.msra.mxu0 0.0
    %1490 = vmatprep.subr.mxu0 0.0
    %1491 = vmatpush1.msra.mxu0 0.0
    %1492 = vmatprep.subr.mxu0 0.0
    %1493 = vmatpush1.msra.mxu0 0.0
    %1494 = vmatprep.subr.mxu0 0.0
    %1495 = vmatpush1.msra.mxu0 0.0
    %1496 = vmatprep.subr.mxu0 0.0
    %1497 = vmatpush1.msra.mxu0 0.0
    %1498 = vmatprep.subr.mxu0 0.0
    %1499 = vmatpush1.msra.mxu0 0.0
    %1500 = vmatprep.subr.mxu0 0.0
    %1501 = vmatpush1.msra.mxu0 0.0
    %1502 = vmatprep.subr.mxu0 0.0
    %1503 = vmatpush1.msra.mxu0 0.0
    %1504 = vmatprep.subr.mxu0 0.0
    %1505 = vmatpush1.msra.mxu0 0.0
    %1506 = vmatprep.subr.mxu0 0.0
    %1507 = vmatpush1.msra.mxu0 0.0
    %1508 = vmatprep.subr.mxu0 0.0
    %1509 = vmatpush1.msra.mxu0 0.0
    %1510 = vmatprep.subr.mxu0 0.0
    %1511 = vmatpush1.msra.mxu0 0.0
    %1512 = vmatprep.subr.mxu0 0.0
    %1513 = vmatpush1.msra.mxu0 0.0
    %1514 = vmatprep.subr.mxu0 0.0
    %1515 = vmatpush1.msra.mxu0 0.0
    %1516 = vmatprep.subr.mxu0 0.0
    %1517 = vmatpush1.msra.mxu0 0.0
    %1518 = vmatprep.subr.mxu0 0.0
    %1519 = vmatpush1.msra.mxu0 0.0
    %1520 = vmatprep.mubr.f32.mxu0 0.0
    %1521 = vmatmul.mubr.f32.gmra.mrb[0].mxu0 %v1454
    %v1522 = vpop.f32.mrb[0].mxu0
    %v1523 = vadd.f32 0.0, %v1522
    %v1524 = vpop.f32.mrb[0].mxu0
    %1525 = vdwg.mxu0
    %v1526 = vrcp.pop %v1449
    %v1527 = vmul.f32 %v1523, %v1526
    %1529 = vrot.lane.b32.xlu0 %v1527, 8
    %v1530 = vpop.permute.xlu0 %1529
    %1532 = vst.msk [vmem:[#allocation2 + $0x8] sm:$0xff] %vm854, %v1530
    %1533 = vrot.lane.b32.xlu0 %v517, 112
    %v1534 = vpop.permute.xlu0 %1533
    %1535 = vrot.lane.b32.xlu0 %v517, 80
    %v1536 = vpop.permute.xlu0 %1535
    %v1537 = vsel %vm248, %v1534, 0
    %v1539 = vsel %vm248, %v1536, 0
    %1541 = vmatprep.subr.mxu0 0.0
    %1542 = vmatpush1.xpose.msra.mxu0 %v1539
    %1543 = vmatprep.subr.mxu0 0.0
    %1544 = vmatpush1.xpose.msra.mxu0 0.0
    %1545 = vmatprep.subr.mxu0 0.0
    %1546 = vmatpush1.xpose.msra.mxu0 0.0
    %1547 = vmatprep.subr.mxu0 0.0
    %1548 = vmatpush1.xpose.msra.mxu0 0.0
    %1549 = vmatprep.subr.mxu0 0.0
    %1550 = vmatpush1.xpose.msra.mxu0 0.0
    %1551 = vmatprep.subr.mxu0 0.0
    %1552 = vmatpush1.xpose.msra.mxu0 0.0
    %1553 = vmatprep.subr.mxu0 0.0
    %1554 = vmatpush1.xpose.msra.mxu0 0.0
    %1555 = vmatprep.subr.mxu0 0.0
    %1556 = vmatpush1.xpose.msra.mxu0 0.0
    %1557 = vmatprep.subr.mxu0 0.0
    %1558 = vmatpush1.xpose.msra.mxu0 0.0
    %1559 = vmatprep.subr.mxu0 0.0
    %1560 = vmatpush1.xpose.msra.mxu0 0.0
    %1561 = vmatprep.subr.mxu0 0.0
    %1562 = vmatpush1.xpose.msra.mxu0 0.0
    %1563 = vmatprep.subr.mxu0 0.0
    %1564 = vmatpush1.xpose.msra.mxu0 0.0
    %1565 = vmatprep.subr.mxu0 0.0
    %1566 = vmatpush1.xpose.msra.mxu0 0.0
    %1567 = vmatprep.subr.mxu0 0.0
    %1568 = vmatpush1.xpose.msra.mxu0 0.0
    %1569 = vmatprep.subr.mxu0 0.0
    %1570 = vmatpush1.xpose.msra.mxu0 0.0
    %1571 = vmatprep.subr.mxu0 0.0
    %1572 = vmatpush1.xpose.msra.mxu0 0.0
    %1573 = vmatprep.subr.mxu0 0.0
    %1574 = vmatpush1.xpose.msra.mxu0 0.0
    %1575 = vmatprep.subr.mxu0 0.0
    %1576 = vmatpush1.xpose.msra.mxu0 0.0
    %1577 = vmatprep.subr.mxu0 0.0
    %1578 = vmatpush1.xpose.msra.mxu0 0.0
    %1579 = vmatprep.subr.mxu0 0.0
    %1580 = vmatpush1.xpose.msra.mxu0 0.0
    %1581 = vmatprep.subr.mxu0 0.0
    %1582 = vmatpush1.xpose.msra.mxu0 0.0
    %1583 = vmatprep.subr.mxu0 0.0
    %1584 = vmatpush1.xpose.msra.mxu0 0.0
    %1585 = vmatprep.subr.mxu0 0.0
    %1586 = vmatpush1.xpose.msra.mxu0 0.0
    %1587 = vmatprep.subr.mxu0 0.0
    %1588 = vmatpush1.xpose.msra.mxu0 0.0
    %1589 = vmatprep.subr.mxu0 0.0
    %1590 = vmatpush1.xpose.msra.mxu0 0.0
    %1591 = vmatprep.subr.mxu0 0.0
    %1592 = vmatpush1.xpose.msra.mxu0 0.0
    %1593 = vmatprep.subr.mxu0 0.0
    %1594 = vmatpush1.xpose.msra.mxu0 0.0
    %1595 = vmatprep.subr.mxu0 0.0
    %1596 = vmatpush1.xpose.msra.mxu0 0.0
    %1597 = vmatprep.subr.mxu0 0.0
    %1598 = vmatpush1.xpose.msra.mxu0 0.0
    %1599 = vmatprep.subr.mxu0 0.0
    %1600 = vmatpush1.xpose.msra.mxu0 0.0
    %1601 = vmatprep.subr.mxu0 0.0
    %1602 = vmatpush1.xpose.msra.mxu0 0.0
    %1603 = vmatprep.subr.mxu0 0.0
    %1604 = vmatpush1.xpose.msra.mxu0 0.0
    %1605 = vmatprep.mubr.f32.mxu0 0.0
    %1606 = vmatmul.mubr.f32.gmra.mrb[0].mxu0 %v1537
    %v1607 = vpop.f32.mrb[0].mxu0
    %v1608 = vadd.f32 0.0, %v1607
    %v1609 = vpop.f32.mrb[0].mxu0
    %1610 = vdwg.mxu0
    %v1611 = vsel %vm248, %v1608, -inf
    %1612 = vmax.xlane.f32.xlu0 %v1611
    %v1613 = vpop.xlane.xlu0 %1612
    %v1614 = vsub.f32 %v1608, %v1613
    %v1615 = vmul.f32 %v1614, 1.442695
    %v1616 = vpow.pop %v1615
    %v1617 = vsel %vm248, %v1616, 0.0
    %1618 = vadd.xlane.f32.xlu0 %v1617
    %v1619 = vpop.xlane.xlu0 %1618
    %1620 = vrot.lane.b32.xlu0 %v517, 48
    %v1621 = vpop.permute.xlu0 %1620
    %v1624 = vsel %vm248, %v1616, 0
    %1626 = vmatprep.subr.mxu0 0.0
    %1627 = vmatpush1.msra.mxu0 %v1621
    %1628 = vmatprep.subr.mxu0 0.0
    %1629 = vmatpush1.msra.mxu0 0.0
    %1630 = vmatprep.subr.mxu0 0.0
    %1631 = vmatpush1.msra.mxu0 0.0
    %1632 = vmatprep.subr.mxu0 0.0
    %1633 = vmatpush1.msra.mxu0 0.0
    %1634 = vmatprep.subr.mxu0 0.0
    %1635 = vmatpush1.msra.mxu0 0.0
    %1636 = vmatprep.subr.mxu0 0.0
    %1637 = vmatpush1.msra.mxu0 0.0
    %1638 = vmatprep.subr.mxu0 0.0
    %1639 = vmatpush1.msra.mxu0 0.0
    %1640 = vmatprep.subr.mxu0 0.0
    %1641 = vmatpush1.msra.mxu0 0.0
    %1642 = vmatprep.subr.mxu0 0.0
    %1643 = vmatpush1.msra.mxu0 0.0
    %1644 = vmatprep.subr.mxu0 0.0
    %1645 = vmatpush1.msra.mxu0 0.0
    %1646 = vmatprep.subr.mxu0 0.0
    %1647 = vmatpush1.msra.mxu0 0.0
    %1648 = vmatprep.subr.mxu0 0.0
    %1649 = vmatpush1.msra.mxu0 0.0
    %1650 = vmatprep.subr.mxu0 0.0
    %1651 = vmatpush1.msra.mxu0 0.0
    %1652 = vmatprep.subr.mxu0 0.0
    %1653 = vmatpush1.msra.mxu0 0.0
    %1654 = vmatprep.subr.mxu0 0.0
    %1655 = vmatpush1.msra.mxu0 0.0
    %1656 = vmatprep.subr.mxu0 0.0
    %1657 = vmatpush1.msra.mxu0 0.0
    %1658 = vmatprep.subr.mxu0 0.0
    %1659 = vmatpush1.msra.mxu0 0.0
    %1660 = vmatprep.subr.mxu0 0.0
    %1661 = vmatpush1.msra.mxu0 0.0
    %1662 = vmatprep.subr.mxu0 0.0
    %1663 = vmatpush1.msra.mxu0 0.0
    %1664 = vmatprep.subr.mxu0 0.0
    %1665 = vmatpush1.msra.mxu0 0.0
    %1666 = vmatprep.subr.mxu0 0.0
    %1667 = vmatpush1.msra.mxu0 0.0
    %1668 = vmatprep.subr.mxu0 0.0
    %1669 = vmatpush1.msra.mxu0 0.0
    %1670 = vmatprep.subr.mxu0 0.0
    %1671 = vmatpush1.msra.mxu0 0.0
    %1672 = vmatprep.subr.mxu0 0.0
    %1673 = vmatpush1.msra.mxu0 0.0
    %1674 = vmatprep.subr.mxu0 0.0
    %1675 = vmatpush1.msra.mxu0 0.0
    %1676 = vmatprep.subr.mxu0 0.0
    %1677 = vmatpush1.msra.mxu0 0.0
    %1678 = vmatprep.subr.mxu0 0.0
    %1679 = vmatpush1.msra.mxu0 0.0
    %1680 = vmatprep.subr.mxu0 0.0
    %1681 = vmatpush1.msra.mxu0 0.0
    %1682 = vmatprep.subr.mxu0 0.0
    %1683 = vmatpush1.msra.mxu0 0.0
    %1684 = vmatprep.subr.mxu0 0.0
    %1685 = vmatpush1.msra.mxu0 0.0
    %1686 = vmatprep.subr.mxu0 0.0
    %1687 = vmatpush1.msra.mxu0 0.0
    %1688 = vmatprep.subr.mxu0 0.0
    %1689 = vmatpush1.msra.mxu0 0.0
    %1690 = vmatprep.mubr.f32.mxu0 0.0
    %1691 = vmatmul.mubr.f32.gmra.mrb[0].mxu0 %v1624
    %v1692 = vpop.f32.mrb[0].mxu0
    %v1693 = vadd.f32 0.0, %v1692
    %v1694 = vpop.f32.mrb[0].mxu0
    %1695 = vdwg.mxu0
    %v1696 = vrcp.pop %v1619
    %v1697 = vmul.f32 %v1693, %v1696
    %1699 = vrot.lane.b32.xlu0 %v1697, 16
    %v1700 = vpop.permute.xlu0 %1699
    %1702 = vst.msk [vmem:[#allocation2 + $0x8] sm:$0xff] %vm1025, %v1700
    %1703 = vrot.lane.b32.xlu0 %v517, 104
    %v1704 = vpop.permute.xlu0 %1703
    %1705 = vrot.lane.b32.xlu0 %v517, 72
    %v1706 = vpop.permute.xlu0 %1705
    %v1707 = vsel %vm248, %v1704, 0
    %v1709 = vsel %vm248, %v1706, 0
    %1711 = vmatprep.subr.mxu0 0.0
    %1712 = vmatpush1.xpose.msra.mxu0 %v1709
    %1713 = vmatprep.subr.mxu0 0.0
    %1714 = vmatpush1.xpose.msra.mxu0 0.0
    %1715 = vmatprep.subr.mxu0 0.0
    %1716 = vmatpush1.xpose.msra.mxu0 0.0
    %1717 = vmatprep.subr.mxu0 0.0
    %1718 = vmatpush1.xpose.msra.mxu0 0.0
    %1719 = vmatprep.subr.mxu0 0.0
    %1720 = vmatpush1.xpose.msra.mxu0 0.0
    %1721 = vmatprep.subr.mxu0 0.0
    %1722 = vmatpush1.xpose.msra.mxu0 0.0
    %1723 = vmatprep.subr.mxu0 0.0
    %1724 = vmatpush1.xpose.msra.mxu0 0.0
    %1725 = vmatprep.subr.mxu0 0.0
    %1726 = vmatpush1.xpose.msra.mxu0 0.0
    %1727 = vmatprep.subr.mxu0 0.0
    %1728 = vmatpush1.xpose.msra.mxu0 0.0
    %1729 = vmatprep.subr.mxu0 0.0
    %1730 = vmatpush1.xpose.msra.mxu0 0.0
    %1731 = vmatprep.subr.mxu0 0.0
    %1732 = vmatpush1.xpose.msra.mxu0 0.0
    %1733 = vmatprep.subr.mxu0 0.0
    %1734 = vmatpush1.xpose.msra.mxu0 0.0
    %1735 = vmatprep.subr.mxu0 0.0
    %1736 = vmatpush1.xpose.msra.mxu0 0.0
    %1737 = vmatprep.subr.mxu0 0.0
    %1738 = vmatpush1.xpose.msra.mxu0 0.0
    %1739 = vmatprep.subr.mxu0 0.0
    %1740 = vmatpush1.xpose.msra.mxu0 0.0
    %1741 = vmatprep.subr.mxu0 0.0
    %1742 = vmatpush1.xpose.msra.mxu0 0.0
    %1743 = vmatprep.subr.mxu0 0.0
    %1744 = vmatpush1.xpose.msra.mxu0 0.0
    %1745 = vmatprep.subr.mxu0 0.0
    %1746 = vmatpush1.xpose.msra.mxu0 0.0
    %1747 = vmatprep.subr.mxu0 0.0
    %1748 = vmatpush1.xpose.msra.mxu0 0.0
    %1749 = vmatprep.subr.mxu0 0.0
    %1750 = vmatpush1.xpose.msra.mxu0 0.0
    %1751 = vmatprep.subr.mxu0 0.0
    %1752 = vmatpush1.xpose.msra.mxu0 0.0
    %1753 = vmatprep.subr.mxu0 0.0
    %1754 = vmatpush1.xpose.msra.mxu0 0.0
    %1755 = vmatprep.subr.mxu0 0.0
    %1756 = vmatpush1.xpose.msra.mxu0 0.0
    %1757 = vmatprep.subr.mxu0 0.0
    %1758 = vmatpush1.xpose.msra.mxu0 0.0
    %1759 = vmatprep.subr.mxu0 0.0
    %1760 = vmatpush1.xpose.msra.mxu0 0.0
    %1761 = vmatprep.subr.mxu0 0.0
    %1762 = vmatpush1.xpose.msra.mxu0 0.0
    %1763 = vmatprep.subr.mxu0 0.0
    %1764 = vmatpush1.xpose.msra.mxu0 0.0
    %1765 = vmatprep.subr.mxu0 0.0
    %1766 = vmatpush1.xpose.msra.mxu0 0.0
    %1767 = vmatprep.subr.mxu0 0.0
    %1768 = vmatpush1.xpose.msra.mxu0 0.0
    %1769 = vmatprep.subr.mxu0 0.0
    %1770 = vmatpush1.xpose.msra.mxu0 0.0
    %1771 = vmatprep.subr.mxu0 0.0
    %1772 = vmatpush1.xpose.msra.mxu0 0.0
    %1773 = vmatprep.subr.mxu0 0.0
    %1774 = vmatpush1.xpose.msra.mxu0 0.0
    %1775 = vmatprep.mubr.f32.mxu0 0.0
    %1776 = vmatmul.mubr.f32.gmra.mrb[0].mxu0 %v1707
    %v1777 = vpop.f32.mrb[0].mxu0
    %v1778 = vadd.f32 0.0, %v1777
    %v1779 = vpop.f32.mrb[0].mxu0
    %1780 = vdwg.mxu0
    %v1781 = vsel %vm248, %v1778, -inf
    %1782 = vmax.xlane.f32.xlu0 %v1781
    %v1783 = vpop.xlane.xlu0 %1782
    %v1784 = vsub.f32 %v1778, %v1783
    %v1785 = vmul.f32 %v1784, 1.442695
    %v1786 = vpow.pop %v1785
    %v1787 = vsel %vm248, %v1786, 0.0
    %1788 = vadd.xlane.f32.xlu0 %v1787
    %v1789 = vpop.xlane.xlu0 %1788
    %1790 = vrot.lane.b32.xlu0 %v517, 40
    %v1791 = vpop.permute.xlu0 %1790
    %v1794 = vsel %vm248, %v1786, 0
    %1796 = vmatprep.subr.mxu0 0.0
    %1797 = vmatpush1.msra.mxu0 %v1791
    %1798 = vmatprep.subr.mxu0 0.0
    %1799 = vmatpush1.msra.mxu0 0.0
    %1800 = vmatprep.subr.mxu0 0.0
    %1801 = vmatpush1.msra.mxu0 0.0
    %1802 = vmatprep.subr.mxu0 0.0
    %1803 = vmatpush1.msra.mxu0 0.0
    %1804 = vmatprep.subr.mxu0 0.0
    %1805 = vmatpush1.msra.mxu0 0.0
    %1806 = vmatprep.subr.mxu0 0.0
    %1807 = vmatpush1.msra.mxu0 0.0
    %1808 = vmatprep.subr.mxu0 0.0
    %1809 = vmatpush1.msra.mxu0 0.0
    %1810 = vmatprep.subr.mxu0 0.0
    %1811 = vmatpush1.msra.mxu0 0.0
    %1812 = vmatprep.subr.mxu0 0.0
    %1813 = vmatpush1.msra.mxu0 0.0
    %1814 = vmatprep.subr.mxu0 0.0
    %1815 = vmatpush1.msra.mxu0 0.0
    %1816 = vmatprep.subr.mxu0 0.0
    %1817 = vmatpush1.msra.mxu0 0.0
    %1818 = vmatprep.subr.mxu0 0.0
    %1819 = vmatpush1.msra.mxu0 0.0
    %1820 = vmatprep.subr.mxu0 0.0
    %1821 = vmatpush1.msra.mxu0 0.0
    %1822 = vmatprep.subr.mxu0 0.0
    %1823 = vmatpush1.msra.mxu0 0.0
    %1824 = vmatprep.subr.mxu0 0.0
    %1825 = vmatpush1.msra.mxu0 0.0
    %1826 = vmatprep.subr.mxu0 0.0
    %1827 = vmatpush1.msra.mxu0 0.0
    %1828 = vmatprep.subr.mxu0 0.0
    %1829 = vmatpush1.msra.mxu0 0.0
    %1830 = vmatprep.subr.mxu0 0.0
    %1831 = vmatpush1.msra.mxu0 0.0
    %1832 = vmatprep.subr.mxu0 0.0
    %1833 = vmatpush1.msra.mxu0 0.0
    %1834 = vmatprep.subr.mxu0 0.0
    %1835 = vmatpush1.msra.mxu0 0.0
    %1836 = vmatprep.subr.mxu0 0.0
    %1837 = vmatpush1.msra.mxu0 0.0
    %1838 = vmatprep.subr.mxu0 0.0
    %1839 = vmatpush1.msra.mxu0 0.0
    %1840 = vmatprep.subr.mxu0 0.0
    %1841 = vmatpush1.msra.mxu0 0.0
    %1842 = vmatprep.subr.mxu0 0.0
    %1843 = vmatpush1.msra.mxu0 0.0
    %1844 = vmatprep.subr.mxu0 0.0
    %1845 = vmatpush1.msra.mxu0 0.0
    %1846 = vmatprep.subr.mxu0 0.0
    %1847 = vmatpush1.msra.mxu0 0.0
    %1848 = vmatprep.subr.mxu0 0.0
    %1849 = vmatpush1.msra.mxu0 0.0
    %1850 = vmatprep.subr.mxu0 0.0
    %1851 = vmatpush1.msra.mxu0 0.0
    %1852 = vmatprep.subr.mxu0 0.0
    %1853 = vmatpush1.msra.mxu0 0.0
    %1854 = vmatprep.subr.mxu0 0.0
    %1855 = vmatpush1.msra.mxu0 0.0
    %1856 = vmatprep.subr.mxu0 0.0
    %1857 = vmatpush1.msra.mxu0 0.0
    %1858 = vmatprep.subr.mxu0 0.0
    %1859 = vmatpush1.msra.mxu0 0.0
    %1860 = vmatprep.mubr.f32.mxu0 0.0
    %1861 = vmatmul.mubr.f32.gmra.mrb[0].mxu0 %v1794
    %v1862 = vpop.f32.mrb[0].mxu0
    %v1863 = vadd.f32 0.0, %v1862
    %v1864 = vpop.f32.mrb[0].mxu0
    %1865 = vdwg.mxu0
    %v1866 = vrcp.pop %v1789
    %v1867 = vmul.f32 %v1863, %v1866
    %1869 = vrot.lane.b32.xlu0 %v1867, 24
    %v1870 = vpop.permute.xlu0 %1869
    %1872 = vst.msk [vmem:[#allocation2 + $0x8] sm:$0xff] %vm1196, %v1870
    %v1873 = vld [vmem:[#allocation2] sm:$0xff]
    %v1874 = vld [vmem:[#allocation2 + $0x8] sm:$0xff]
    %v1875 = vadd.f32 %v425, %v1873
    %v1876 = vadd.f32 %v426, %v1874
    %v1877 = vsel %vm438, %v1875, 0.0
    %1878 = vadd.xlane.f32.xlu0 %v1877
    %v1879 = vpop.xlane.xlu0 %1878
    %v1880 = vsel %vm438, %v1876, 0.0
    %1881 = vadd.xlane.f32.xlu0 %v1880
    %v1882 = vpop.xlane.xlu0 %1881
    %v1883 = vrcp.pop 32.0
    %v1884 = vmul.f32 %v1879, %v1883
    %v1885 = vmul.f32 %v1882, %v1883
    %v1886 = vsub.f32 %v1875, %v1884
    %v1887 = vsub.f32 %v1876, %v1885
    %v1888 = vmul.f32 %v1886, %v1886
    %v1889 = vmul.f32 %v1887, %v1887
    %v1890 = vsel %vm438, %v1888, 0.0
    %1891 = vadd.xlane.f32.xlu0 %v1890
    %v1892 = vpop.xlane.xlu0 %1891
    %v1893 = vsel %vm438, %v1889, 0.0
    %1894 = vadd.xlane.f32.xlu0 %v1893
    %v1895 = vpop.xlane.xlu0 %1894
    %v1896 = vmul.f32 %v1892, %v1883
    %v1897 = vmul.f32 %v1895, %v1883
    %v1898 = vadd.f32 %v1896, 1e-05
    %v1899 = vadd.f32 %v1897, 1e-05
    %v1900 = vrsqrt.pop %v1898
    %v1901 = vrsqrt.pop %v1899
    %v1902 = vmul.f32 %v1886, %v1900
    %v1903 = vmul.f32 %v1887, %v1901
    %v1905 = vlaneseq
    %v1906 = vshrl.u32 %v1905, 7
    %v1907 = vsub.s32 0, %v1906
    %v1908 = vrot.slane %v431, %v1907
    %v1910 = vmul.f32 %v1902, %v1908
    %v1911 = vmul.f32 %v1903, %v1908
    %v1913 = vlaneseq
    %v1914 = vshrl.u32 %v1913, 7
    %v1915 = vsub.s32 0, %v1914
    %v1916 = vrot.slane %v432, %v1915
    %v1918 = vadd.f32 %v1910, %v1916
    %v1919 = vadd.f32 %v1911, %v1916
    %v1921 = vlaneseq
    %v1922 = vshrl.u32 %v1921, 7
    %v1923 = vsub.s32 0, %v1922
    %v1924 = vrot.slane %v437, %v1923
    %v1927 = vsel %vm438, %v1918, 0
    %v1930 = vsel %vm438, %v1919, 0
    %1932 = vmatprep.subr.mxu0 0.0
    %1933 = vmatpush1.msra.mxu0 %v433
    %1934 = vmatprep.subr.mxu0 0.0
    %1935 = vmatpush1.msra.mxu0 %v434
    %1936 = vmatprep.subr.mxu0 0.0
    %1937 = vmatpush1.msra.mxu0 %v435
    %1938 = vmatprep.subr.mxu0 0.0
    %1939 = vmatpush1.msra.mxu0 %v436
    %1940 = vmatprep.subr.mxu0 0.0
    %1941 = vmatpush1.msra.mxu0 0.0
    %1942 = vmatprep.subr.mxu0 0.0
    %1943 = vmatpush1.msra.mxu0 0.0
    %1944 = vmatprep.subr.mxu0 0.0
    %1945 = vmatpush1.msra.mxu0 0.0
    %1946 = vmatprep.subr.mxu0 0.0
    %1947 = vmatpush1.msra.mxu0 0.0
    %1948 = vmatprep.subr.mxu0 0.0
    %1949 = vmatpush1.msra.mxu0 0.0
    %1950 = vmatprep.subr.mxu0 0.0
    %1951 = vmatpush1.msra.mxu0 0.0
    %1952 = vmatprep.subr.mxu0 0.0
    %1953 = vmatpush1.msra.mxu0 0.0
    %1954 = vmatprep.subr.mxu0 0.0
    %1955 = vmatpush1.msra.mxu0 0.0
    %1956 = vmatprep.subr.mxu0 0.0
    %1957 = vmatpush1.msra.mxu0 0.0
    %1958 = vmatprep.subr.mxu0 0.0
    %1959 = vmatpush1.msra.mxu0 0.0
    %1960 = vmatprep.subr.mxu0 0.0
    %1961 = vmatpush1.msra.mxu0 0.0
    %1962 = vmatprep.subr.mxu0 0.0
    %1963 = vmatpush1.msra.mxu0 0.0
    %1964 = vmatprep.subr.mxu0 0.0
    %1965 = vmatpush1.msra.mxu0 0.0
    %1966 = vmatprep.subr.mxu0 0.0
    %1967 = vmatpush1.msra.mxu0 0.0
    %1968 = vmatprep.subr.mxu0 0.0
    %1969 = vmatpush1.msra.mxu0 0.0
    %1970 = vmatprep.subr.mxu0 0.0
    %1971 = vmatpush1.msra.mxu0 0.0
    %1972 = vmatprep.subr.mxu0 0.0
    %1973 = vmatpush1.msra.mxu0 0.0
    %1974 = vmatprep.subr.mxu0 0.0
    %1975 = vmatpush1.msra.mxu0 0.0
    %1976 = vmatprep.subr.mxu0 0.0
    %1977 = vmatpush1.msra.mxu0 0.0
    %1978 = vmatprep.subr.mxu0 0.0
    %1979 = vmatpush1.msra.mxu0 0.0
    %1980 = vmatprep.subr.mxu0 0.0
    %1981 = vmatpush1.msra.mxu0 0.0
    %1982 = vmatprep.subr.mxu0 0.0
    %1983 = vmatpush1.msra.mxu0 0.0
    %1984 = vmatprep.subr.mxu0 0.0
    %1985 = vmatpush1.msra.mxu0 0.0
    %1986 = vmatprep.subr.mxu0 0.0
    %1987 = vmatpush1.msra.mxu0 0.0
    %1988 = vmatprep.subr.mxu0 0.0
    %1989 = vmatpush1.msra.mxu0 0.0
    %1990 = vmatprep.subr.mxu0 0.0
    %1991 = vmatpush1.msra.mxu0 0.0
    %1992 = vmatprep.subr.mxu0 0.0
    %1993 = vmatpush1.msra.mxu0 0.0
    %1994 = vmatprep.subr.mxu0 0.0
    %1995 = vmatpush1.msra.mxu0 0.0
    %1996 = vmatprep.mubr.f32.mxu0 0.0
    %1997 = vmatmul.mubr.f32.gmra.mrb[0].mxu0 %v1927
    %v1998 = vpop.f32.mrb[0].mxu0
    %v1999 = vadd.f32 %v1924, %v1998
    %v2000 = vpop.f32.mrb[0].mxu0
    %2001 = vmatprep.mubr.f32.mxu0 0.0
    %2002 = vmatmul.mubr.f32.gmra.mrb[0].mxu0 %v1930
    %v2003 = vpop.f32.mrb[0].mxu0
    %v2004 = vadd.f32 %v1924, %v2003
    %v2005 = vpop.f32.mrb[0].mxu0
    %2006 = vdwg.mxu0
    %v2007 = vmax.f32 %v1999, 0.0
    %v2008 = vmax.f32 %v2004, 0.0
    %v2009 = vadd.f32 %v1918, %v2007
    %v2010 = vadd.f32 %v1919, %v2008
    %v2011 = vld [vmem:[%s11] sm:$0x1]
    %v2012 = vld [vmem:[%s12] sm:$0x1]
    %v2013 = vsel %vm438, %v2009, 0.0
    %2014 = vadd.xlane.f32.xlu0 %v2013
    %v2015 = vpop.xlane.xlu0 %2014
    %v2016 = vsel %vm438, %v2010, 0.0
    %2017 = vadd.xlane.f32.xlu0 %v2016
    %v2018 = vpop.xlane.xlu0 %2017
    %v2019 = vmul.f32 %v2015, %v1883
    %v2020 = vmul.f32 %v2018, %v1883
    %v2021 = vsub.f32 %v2009, %v2019
    %v2022 = vsub.f32 %v2010, %v2020
    %v2023 = vmul.f32 %v2021, %v2021
    %v2024 = vmul.f32 %v2022, %v2022
    %v2025 = vsel %vm438, %v2023, 0.0
    %2026 = vadd.xlane.f32.xlu0 %v2025
    %v2027 = vpop.xlane.xlu0 %2026
    %v2028 = vsel %vm438, %v2024, 0.0
    %2029 = vadd.xlane.f32.xlu0 %v2028
    %v2030 = vpop.xlane.xlu0 %2029
    %v2031 = vmul.f32 %v2027, %v1883
    %v2032 = vmul.f32 %v2030, %v1883
    %v2033 = vadd.f32 %v2031, 1e-05
    %v2034 = vadd.f32 %v2032, 1e-05
    %v2035 = vrsqrt.pop %v2033
    %v2036 = vrsqrt.pop %v2034
    %v2037 = vmul.f32 %v2021, %v2035
    %v2038 = vmul.f32 %v2022, %v2036
    %v2040 = vlaneseq
    %v2041 = vshrl.u32 %v2040, 7
    %v2042 = vsub.s32 0, %v2041
    %v2043 = vrot.slane %v2011, %v2042
    %v2045 = vmul.f32 %v2037, %v2043
    %v2046 = vmul.f32 %v2038, %v2043
    %v2048 = vlaneseq
    %v2049 = vshrl.u32 %v2048, 7
    %v2050 = vsub.s32 0, %v2049
    %v2051 = vrot.slane %v2012, %v2050
    %v2053 = vadd.f32 %v2045, %v2051
    %v2054 = vadd.f32 %v2046, %v2051
    %v2055 = vld [vmem:[#allocation14] sm:$0xff]
    %v2056 = vld [vmem:[#allocation14 + $0x8] sm:$0xff]
    %v2057 = vld [vmem:[#allocation14 + $0x10] sm:$0xff]
    %v2058 = vld [vmem:[#allocation14 + $0x18] sm:$0xff]
    %v2059 = vld [vmem:[#allocation16] sm:$0x1]
    %v2060 = vld [vmem:[#allocation17] sm:$0x1]
    %v2061 = vld [vmem:[#allocation19] sm:$0xff]
    %v2062 = vld [vmem:[#allocation19 + $0x8] sm:$0xff]
    %v2063 = vld [vmem:[#allocation19 + $0x10] sm:$0xff]
    %v2064 = vld [vmem:[#allocation19 + $0x18] sm:$0xff]
    %v2065 = vld [vmem:[#allocation20] sm:$0x1]
    %v2067 = vsel %vm438, %v2053, 0
    %v2070 = vsel %vm438, %v2054, 0
    %2072 = vmatprep.subr.mxu0 0.0
    %2073 = vmatpush1.msra.mxu0 %v2055
    %2074 = vmatprep.subr.mxu0 0.0
    %2075 = vmatpush1.msra.mxu0 %v2056
    %2076 = vmatprep.subr.mxu0 0.0
    %2077 = vmatpush1.msra.mxu0 %v2057
    %2078 = vmatprep.subr.mxu0 0.0
    %2079 = vmatpush1.msra.mxu0 %v2058
    %2080 = vmatprep.subr.mxu0 0.0
    %2081 = vmatpush1.msra.mxu0 0.0
    %2082 = vmatprep.subr.mxu0 0.0
    %2083 = vmatpush1.msra.mxu0 0.0
    %2084 = vmatprep.subr.mxu0 0.0
    %2085 = vmatpush1.msra.mxu0 0.0
    %2086 = vmatprep.subr.mxu0 0.0
    %2087 = vmatpush1.msra.mxu0 0.0
    %2088 = vmatprep.subr.mxu0 0.0
    %2089 = vmatpush1.msra.mxu0 0.0
    %2090 = vmatprep.subr.mxu0 0.0
    %2091 = vmatpush1.msra.mxu0 0.0
    %2092 = vmatprep.subr.mxu0 0.0
    %2093 = vmatpush1.msra.mxu0 0.0
    %2094 = vmatprep.subr.mxu0 0.0
    %2095 = vmatpush1.msra.mxu0 0.0
    %2096 = vmatprep.subr.mxu0 0.0
    %2097 = vmatpush1.msra.mxu0 0.0
    %2098 = vmatprep.subr.mxu0 0.0
    %2099 = vmatpush1.msra.mxu0 0.0
    %2100 = vmatprep.subr.mxu0 0.0
    %2101 = vmatpush1.msra.mxu0 0.0
    %2102 = vmatprep.subr.mxu0 0.0
    %2103 = vmatpush1.msra.mxu0 0.0
    %2104 = vmatprep.subr.mxu0 0.0
    %2105 = vmatpush1.msra.mxu0 0.0
    %2106 = vmatprep.subr.mxu0 0.0
    %2107 = vmatpush1.msra.mxu0 0.0
    %2108 = vmatprep.subr.mxu0 0.0
    %2109 = vmatpush1.msra.mxu0 0.0
    %2110 = vmatprep.subr.mxu0 0.0
    %2111 = vmatpush1.msra.mxu0 0.0
    %2112 = vmatprep.subr.mxu0 0.0
    %2113 = vmatpush1.msra.mxu0 0.0
    %2114 = vmatprep.subr.mxu0 0.0
    %2115 = vmatpush1.msra.mxu0 0.0
    %2116 = vmatprep.subr.mxu0 0.0
    %2117 = vmatpush1.msra.mxu0 0.0
    %2118 = vmatprep.subr.mxu0 0.0
    %2119 = vmatpush1.msra.mxu0 0.0
    %2120 = vmatprep.subr.mxu0 0.0
    %2121 = vmatpush1.msra.mxu0 0.0
    %2122 = vmatprep.subr.mxu0 0.0
    %2123 = vmatpush1.msra.mxu0 0.0
    %2124 = vmatprep.subr.mxu0 0.0
    %2125 = vmatpush1.msra.mxu0 0.0
    %2126 = vmatprep.subr.mxu0 0.0
    %2127 = vmatpush1.msra.mxu0 0.0
    %2128 = vmatprep.subr.mxu0 0.0
    %2129 = vmatpush1.msra.mxu0 0.0
    %2130 = vmatprep.subr.mxu0 0.0
    %2131 = vmatpush1.msra.mxu0 0.0
    %2132 = vmatprep.subr.mxu0 0.0
    %2133 = vmatpush1.msra.mxu0 0.0
    %2134 = vmatprep.subr.mxu0 0.0
    %2135 = vmatpush1.msra.mxu0 0.0
    %2136 = vmatprep.mubr.f32.mxu0 0.0
    %2137 = vmatmul.mubr.f32.gmra.mrb[0].mxu0 %v2067
    %v2138 = vpop.f32.mrb[0].mxu0
    %v2139 = vadd.f32 0.0, %v2138
    %v2140 = vpop.f32.mrb[0].mxu0
    %2141 = vmatprep.mubr.f32.mxu0 0.0
    %2142 = vmatmul.mubr.f32.gmra.mrb[0].mxu0 %v2070
    %v2143 = vpop.f32.mrb[0].mxu0
    %v2144 = vadd.f32 0.0, %v2143
    %v2145 = vpop.f32.mrb[0].mxu0
    %2146 = vdwg.mxu0
    %2148 = vrot.lane.b32.xlu0 %v2139, 96
    %v2149 = vpop.permute.xlu0 %2148
    %v2150 = vsel %vm248, %v2139, 0
    %v2152 = vsel %vm248, %v2149, 0
    %2154 = vmatprep.subr.mxu0 0.0
    %2155 = vmatpush1.xpose.msra.mxu0 %v2152
    %2156 = vmatprep.subr.mxu0 0.0
    %2157 = vmatpush1.xpose.msra.mxu0 0.0
    %2158 = vmatprep.subr.mxu0 0.0
    %2159 = vmatpush1.xpose.msra.mxu0 0.0
    %2160 = vmatprep.subr.mxu0 0.0
    %2161 = vmatpush1.xpose.msra.mxu0 0.0
    %2162 = vmatprep.subr.mxu0 0.0
    %2163 = vmatpush1.xpose.msra.mxu0 0.0
    %2164 = vmatprep.subr.mxu0 0.0
    %2165 = vmatpush1.xpose.msra.mxu0 0.0
    %2166 = vmatprep.subr.mxu0 0.0
    %2167 = vmatpush1.xpose.msra.mxu0 0.0
    %2168 = vmatprep.subr.mxu0 0.0
    %2169 = vmatpush1.xpose.msra.mxu0 0.0
    %2170 = vmatprep.subr.mxu0 0.0
    %2171 = vmatpush1.xpose.msra.mxu0 0.0
    %2172 = vmatprep.subr.mxu0 0.0
    %2173 = vmatpush1.xpose.msra.mxu0 0.0
    %2174 = vmatprep.subr.mxu0 0.0
    %2175 = vmatpush1.xpose.msra.mxu0 0.0
    %2176 = vmatprep.subr.mxu0 0.0
    %2177 = vmatpush1.xpose.msra.mxu0 0.0
    %2178 = vmatprep.subr.mxu0 0.0
    %2179 = vmatpush1.xpose.msra.mxu0 0.0
    %2180 = vmatprep.subr.mxu0 0.0
    %2181 = vmatpush1.xpose.msra.mxu0 0.0
    %2182 = vmatprep.subr.mxu0 0.0
    %2183 = vmatpush1.xpose.msra.mxu0 0.0
    %2184 = vmatprep.subr.mxu0 0.0
    %2185 = vmatpush1.xpose.msra.mxu0 0.0
    %2186 = vmatprep.subr.mxu0 0.0
    %2187 = vmatpush1.xpose.msra.mxu0 0.0
    %2188 = vmatprep.subr.mxu0 0.0
    %2189 = vmatpush1.xpose.msra.mxu0 0.0
    %2190 = vmatprep.subr.mxu0 0.0
    %2191 = vmatpush1.xpose.msra.mxu0 0.0
    %2192 = vmatprep.subr.mxu0 0.0
    %2193 = vmatpush1.xpose.msra.mxu0 0.0
    %2194 = vmatprep.subr.mxu0 0.0
    %2195 = vmatpush1.xpose.msra.mxu0 0.0
    %2196 = vmatprep.subr.mxu0 0.0
    %2197 = vmatpush1.xpose.msra.mxu0 0.0
    %2198 = vmatprep.subr.mxu0 0.0
    %2199 = vmatpush1.xpose.msra.mxu0 0.0
    %2200 = vmatprep.subr.mxu0 0.0
    %2201 = vmatpush1.xpose.msra.mxu0 0.0
    %2202 = vmatprep.subr.mxu0 0.0
    %2203 = vmatpush1.xpose.msra.mxu0 0.0
    %2204 = vmatprep.subr.mxu0 0.0
    %2205 = vmatpush1.xpose.msra.mxu0 0.0
    %2206 = vmatprep.subr.mxu0 0.0
    %2207 = vmatpush1.xpose.msra.mxu0 0.0
    %2208 = vmatprep.subr.mxu0 0.0
    %2209 = vmatpush1.xpose.msra.mxu0 0.0
    %2210 = vmatprep.subr.mxu0 0.0
    %2211 = vmatpush1.xpose.msra.mxu0 0.0
    %2212 = vmatprep.subr.mxu0 0.0
    %2213 = vmatpush1.xpose.msra.mxu0 0.0
    %2214 = vmatprep.subr.mxu0 0.0
    %2215 = vmatpush1.xpose.msra.mxu0 0.0
    %2216 = vmatprep.subr.mxu0 0.0
    %2217 = vmatpush1.xpose.msra.mxu0 0.0
    %2218 = vmatprep.mubr.f32.mxu0 0.0
    %2219 = vmatmul.mubr.f32.gmra.mrb[0].mxu0 %v2150
    %v2220 = vpop.f32.mrb[0].mxu0
    %v2221 = vadd.f32 0.0, %v2220
    %v2222 = vpop.f32.mrb[0].mxu0
    %2223 = vdwg.mxu0
    %v2224 = vsel %vm248, %v2221, -inf
    %2225 = vmax.xlane.f32.xlu0 %v2224
    %v2226 = vpop.xlane.xlu0 %2225
    %v2227 = vsub.f32 %v2221, %v2226
    %v2228 = vmul.f32 %v2227, 1.442695
    %v2229 = vpow.pop %v2228
    %v2230 = vsel %vm248, %v2229, 0.0
    %2231 = vadd.xlane.f32.xlu0 %v2230
    %v2232 = vpop.xlane.xlu0 %2231
    %2233 = vrot.lane.b32.xlu0 %v2139, 64
    %v2234 = vpop.permute.xlu0 %2233
    %v2237 = vsel %vm248, %v2229, 0
    %2239 = vmatprep.subr.mxu0 0.0
    %2240 = vmatpush1.msra.mxu0 %v2234
    %2241 = vmatprep.subr.mxu0 0.0
    %2242 = vmatpush1.msra.mxu0 0.0
    %2243 = vmatprep.subr.mxu0 0.0
    %2244 = vmatpush1.msra.mxu0 0.0
    %2245 = vmatprep.subr.mxu0 0.0
    %2246 = vmatpush1.msra.mxu0 0.0
    %2247 = vmatprep.subr.mxu0 0.0
    %2248 = vmatpush1.msra.mxu0 0.0
    %2249 = vmatprep.subr.mxu0 0.0
    %2250 = vmatpush1.msra.mxu0 0.0
    %2251 = vmatprep.subr.mxu0 0.0
    %2252 = vmatpush1.msra.mxu0 0.0
    %2253 = vmatprep.subr.mxu0 0.0
    %2254 = vmatpush1.msra.mxu0 0.0
    %2255 = vmatprep.subr.mxu0 0.0
    %2256 = vmatpush1.msra.mxu0 0.0
    %2257 = vmatprep.subr.mxu0 0.0
    %2258 = vmatpush1.msra.mxu0 0.0
    %2259 = vmatprep.subr.mxu0 0.0
    %2260 = vmatpush1.msra.mxu0 0.0
    %2261 = vmatprep.subr.mxu0 0.0
    %2262 = vmatpush1.msra.mxu0 0.0
    %2263 = vmatprep.subr.mxu0 0.0
    %2264 = vmatpush1.msra.mxu0 0.0
    %2265 = vmatprep.subr.mxu0 0.0
    %2266 = vmatpush1.msra.mxu0 0.0
    %2267 = vmatprep.subr.mxu0 0.0
    %2268 = vmatpush1.msra.mxu0 0.0
    %2269 = vmatprep.subr.mxu0 0.0
    %2270 = vmatpush1.msra.mxu0 0.0
    %2271 = vmatprep.subr.mxu0 0.0
    %2272 = vmatpush1.msra.mxu0 0.0
    %2273 = vmatprep.subr.mxu0 0.0
    %2274 = vmatpush1.msra.mxu0 0.0
    %2275 = vmatprep.subr.mxu0 0.0
    %2276 = vmatpush1.msra.mxu0 0.0
    %2277 = vmatprep.subr.mxu0 0.0
    %2278 = vmatpush1.msra.mxu0 0.0
    %2279 = vmatprep.subr.mxu0 0.0
    %2280 = vmatpush1.msra.mxu0 0.0
    %2281 = vmatprep.subr.mxu0 0.0
    %2282 = vmatpush1.msra.mxu0 0.0
    %2283 = vmatprep.subr.mxu0 0.0
    %2284 = vmatpush1.msra.mxu0 0.0
    %2285 = vmatprep.subr.mxu0 0.0
    %2286 = vmatpush1.msra.mxu0 0.0
    %2287 = vmatprep.subr.mxu0 0.0
    %2288 = vmatpush1.msra.mxu0 0.0
    %2289 = vmatprep.subr.mxu0 0.0
    %2290 = vmatpush1.msra.mxu0 0.0
    %2291 = vmatprep.subr.mxu0 0.0
    %2292 = vmatpush1.msra.mxu0 0.0
    %2293 = vmatprep.subr.mxu0 0.0
    %2294 = vmatpush1.msra.mxu0 0.0
    %2295 = vmatprep.subr.mxu0 0.0
    %2296 = vmatpush1.msra.mxu0 0.0
    %2297 = vmatprep.subr.mxu0 0.0
    %2298 = vmatpush1.msra.mxu0 0.0
    %2299 = vmatprep.subr.mxu0 0.0
    %2300 = vmatpush1.msra.mxu0 0.0
    %2301 = vmatprep.subr.mxu0 0.0
    %2302 = vmatpush1.msra.mxu0 0.0
    %2303 = vmatprep.mubr.f32.mxu0 0.0
    %2304 = vmatmul.mubr.f32.gmra.mrb[0].mxu0 %v2237
    %v2305 = vpop.f32.mrb[0].mxu0
    %v2306 = vadd.f32 0.0, %v2305
    %v2307 = vpop.f32.mrb[0].mxu0
    %2308 = vdwg.mxu0
    %v2309 = vrcp.pop %v2232
    %v2310 = vmul.f32 %v2306, %v2309
    %2311 = vst.msk [vmem:[#allocation2] sm:$0xff] %vm248, %v2310
    %2312 = vrot.lane.b32.xlu0 %v2139, 120
    %v2313 = vpop.permute.xlu0 %2312
    %2314 = vrot.lane.b32.xlu0 %v2139, 88
    %v2315 = vpop.permute.xlu0 %2314
    %v2316 = vsel %vm248, %v2313, 0
    %v2318 = vsel %vm248, %v2315, 0
    %2320 = vmatprep.subr.mxu0 0.0
    %2321 = vmatpush1.xpose.msra.mxu0 %v2318
    %2322 = vmatprep.subr.mxu0 0.0
    %2323 = vmatpush1.xpose.msra.mxu0 0.0
    %2324 = vmatprep.subr.mxu0 0.0
    %2325 = vmatpush1.xpose.msra.mxu0 0.0
    %2326 = vmatprep.subr.mxu0 0.0
    %2327 = vmatpush1.xpose.msra.mxu0 0.0
    %2328 = vmatprep.subr.mxu0 0.0
    %2329 = vmatpush1.xpose.msra.mxu0 0.0
    %2330 = vmatprep.subr.mxu0 0.0
    %2331 = vmatpush1.xpose.msra.mxu0 0.0
    %2332 = vmatprep.subr.mxu0 0.0
    %2333 = vmatpush1.xpose.msra.mxu0 0.0
    %2334 = vmatprep.subr.mxu0 0.0
    %2335 = vmatpush1.xpose.msra.mxu0 0.0
    %2336 = vmatprep.subr.mxu0 0.0
    %2337 = vmatpush1.xpose.msra.mxu0 0.0
    %2338 = vmatprep.subr.mxu0 0.0
    %2339 = vmatpush1.xpose.msra.mxu0 0.0
    %2340 = vmatprep.subr.mxu0 0.0
    %2341 = vmatpush1.xpose.msra.mxu0 0.0
    %2342 = vmatprep.subr.mxu0 0.0
    %2343 = vmatpush1.xpose.msra.mxu0 0.0
    %2344 = vmatprep.subr.mxu0 0.0
    %2345 = vmatpush1.xpose.msra.mxu0 0.0
    %2346 = vmatprep.subr.mxu0 0.0
    %2347 = vmatpush1.xpose.msra.mxu0 0.0
    %2348 = vmatprep.subr.mxu0 0.0
    %2349 = vmatpush1.xpose.msra.mxu0 0.0
    %2350 = vmatprep.subr.mxu0 0.0
    %2351 = vmatpush1.xpose.msra.mxu0 0.0
    %2352 = vmatprep.subr.mxu0 0.0
    %2353 = vmatpush1.xpose.msra.mxu0 0.0
    %2354 = vmatprep.subr.mxu0 0.0
    %2355 = vmatpush1.xpose.msra.mxu0 0.0
    %2356 = vmatprep.subr.mxu0 0.0
    %2357 = vmatpush1.xpose.msra.mxu0 0.0
    %2358 = vmatprep.subr.mxu0 0.0
    %2359 = vmatpush1.xpose.msra.mxu0 0.0
    %2360 = vmatprep.subr.mxu0 0.0
    %2361 = vmatpush1.xpose.msra.mxu0 0.0
    %2362 = vmatprep.subr.mxu0 0.0
    %2363 = vmatpush1.xpose.msra.mxu0 0.0
    %2364 = vmatprep.subr.mxu0 0.0
    %2365 = vmatpush1.xpose.msra.mxu0 0.0
    %2366 = vmatprep.subr.mxu0 0.0
    %2367 = vmatpush1.xpose.msra.mxu0 0.0
    %2368 = vmatprep.subr.mxu0 0.0
    %2369 = vmatpush1.xpose.msra.mxu0 0.0
    %2370 = vmatprep.subr.mxu0 0.0
    %2371 = vmatpush1.xpose.msra.mxu0 0.0
    %2372 = vmatprep.subr.mxu0 0.0
    %2373 = vmatpush1.xpose.msra.mxu0 0.0
    %2374 = vmatprep.subr.mxu0 0.0
    %2375 = vmatpush1.xpose.msra.mxu0 0.0
    %2376 = vmatprep.subr.mxu0 0.0
    %2377 = vmatpush1.xpose.msra.mxu0 0.0
    %2378 = vmatprep.subr.mxu0 0.0
    %2379 = vmatpush1.xpose.msra.mxu0 0.0
    %2380 = vmatprep.subr.mxu0 0.0
    %2381 = vmatpush1.xpose.msra.mxu0 0.0
    %2382 = vmatprep.subr.mxu0 0.0
    %2383 = vmatpush1.xpose.msra.mxu0 0.0
    %2384 = vmatprep.mubr.f32.mxu0 0.0
    %2385 = vmatmul.mubr.f32.gmra.mrb[0].mxu0 %v2316
    %v2386 = vpop.f32.mrb[0].mxu0
    %v2387 = vadd.f32 0.0, %v2386
    %v2388 = vpop.f32.mrb[0].mxu0
    %2389 = vdwg.mxu0
    %v2390 = vsel %vm248, %v2387, -inf
    %2391 = vmax.xlane.f32.xlu0 %v2390
    %v2392 = vpop.xlane.xlu0 %2391
    %v2393 = vsub.f32 %v2387, %v2392
    %v2394 = vmul.f32 %v2393, 1.442695
    %v2395 = vpow.pop %v2394
    %v2396 = vsel %vm248, %v2395, 0.0
    %2397 = vadd.xlane.f32.xlu0 %v2396
    %v2398 = vpop.xlane.xlu0 %2397
    %2399 = vrot.lane.b32.xlu0 %v2139, 56
    %v2400 = vpop.permute.xlu0 %2399
    %v2403 = vsel %vm248, %v2395, 0
    %2405 = vmatprep.subr.mxu0 0.0
    %2406 = vmatpush1.msra.mxu0 %v2400
    %2407 = vmatprep.subr.mxu0 0.0
    %2408 = vmatpush1.msra.mxu0 0.0
    %2409 = vmatprep.subr.mxu0 0.0
    %2410 = vmatpush1.msra.mxu0 0.0
    %2411 = vmatprep.subr.mxu0 0.0
    %2412 = vmatpush1.msra.mxu0 0.0
    %2413 = vmatprep.subr.mxu0 0.0
    %2414 = vmatpush1.msra.mxu0 0.0
    %2415 = vmatprep.subr.mxu0 0.0
    %2416 = vmatpush1.msra.mxu0 0.0
    %2417 = vmatprep.subr.mxu0 0.0
    %2418 = vmatpush1.msra.mxu0 0.0
    %2419 = vmatprep.subr.mxu0 0.0
    %2420 = vmatpush1.msra.mxu0 0.0
    %2421 = vmatprep.subr.mxu0 0.0
    %2422 = vmatpush1.msra.mxu0 0.0
    %2423 = vmatprep.subr.mxu0 0.0
    %2424 = vmatpush1.msra.mxu0 0.0
    %2425 = vmatprep.subr.mxu0 0.0
    %2426 = vmatpush1.msra.mxu0 0.0
    %2427 = vmatprep.subr.mxu0 0.0
    %2428 = vmatpush1.msra.mxu0 0.0
    %2429 = vmatprep.subr.mxu0 0.0
    %2430 = vmatpush1.msra.mxu0 0.0
    %2431 = vmatprep.subr.mxu0 0.0
    %2432 = vmatpush1.msra.mxu0 0.0
    %2433 = vmatprep.subr.mxu0 0.0
    %2434 = vmatpush1.msra.mxu0 0.0
    %2435 = vmatprep.subr.mxu0 0.0
    %2436 = vmatpush1.msra.mxu0 0.0
    %2437 = vmatprep.subr.mxu0 0.0
    %2438 = vmatpush1.msra.mxu0 0.0
    %2439 = vmatprep.subr.mxu0 0.0
    %2440 = vmatpush1.msra.mxu0 0.0
    %2441 = vmatprep.subr.mxu0 0.0
    %2442 = vmatpush1.msra.mxu0 0.0
    %2443 = vmatprep.subr.mxu0 0.0
    %2444 = vmatpush1.msra.mxu0 0.0
    %2445 = vmatprep.subr.mxu0 0.0
    %2446 = vmatpush1.msra.mxu0 0.0
    %2447 = vmatprep.subr.mxu0 0.0
    %2448 = vmatpush1.msra.mxu0 0.0
    %2449 = vmatprep.subr.mxu0 0.0
    %2450 = vmatpush1.msra.mxu0 0.0
    %2451 = vmatprep.subr.mxu0 0.0
    %2452 = vmatpush1.msra.mxu0 0.0
    %2453 = vmatprep.subr.mxu0 0.0
    %2454 = vmatpush1.msra.mxu0 0.0
    %2455 = vmatprep.subr.mxu0 0.0
    %2456 = vmatpush1.msra.mxu0 0.0
    %2457 = vmatprep.subr.mxu0 0.0
    %2458 = vmatpush1.msra.mxu0 0.0
    %2459 = vmatprep.subr.mxu0 0.0
    %2460 = vmatpush1.msra.mxu0 0.0
    %2461 = vmatprep.subr.mxu0 0.0
    %2462 = vmatpush1.msra.mxu0 0.0
    %2463 = vmatprep.subr.mxu0 0.0
    %2464 = vmatpush1.msra.mxu0 0.0
    %2465 = vmatprep.subr.mxu0 0.0
    %2466 = vmatpush1.msra.mxu0 0.0
    %2467 = vmatprep.subr.mxu0 0.0
    %2468 = vmatpush1.msra.mxu0 0.0
    %2469 = vmatprep.mubr.f32.mxu0 0.0
    %2470 = vmatmul.mubr.f32.gmra.mrb[0].mxu0 %v2403
    %v2471 = vpop.f32.mrb[0].mxu0
    %v2472 = vadd.f32 0.0, %v2471
    %v2473 = vpop.f32.mrb[0].mxu0
    %2474 = vdwg.mxu0
    %v2475 = vrcp.pop %v2398
    %v2476 = vmul.f32 %v2472, %v2475
    %2478 = vrot.lane.b32.xlu0 %v2476, 8
    %v2479 = vpop.permute.xlu0 %2478
    %2481 = vst.msk [vmem:[#allocation2] sm:$0xff] %vm854, %v2479
    %2482 = vrot.lane.b32.xlu0 %v2139, 112
    %v2483 = vpop.permute.xlu0 %2482
    %2484 = vrot.lane.b32.xlu0 %v2139, 80
    %v2485 = vpop.permute.xlu0 %2484
    %v2486 = vsel %vm248, %v2483, 0
    %v2488 = vsel %vm248, %v2485, 0
    %2490 = vmatprep.subr.mxu0 0.0
    %2491 = vmatpush1.xpose.msra.mxu0 %v2488
    %2492 = vmatprep.subr.mxu0 0.0
    %2493 = vmatpush1.xpose.msra.mxu0 0.0
    %2494 = vmatprep.subr.mxu0 0.0
    %2495 = vmatpush1.xpose.msra.mxu0 0.0
    %2496 = vmatprep.subr.mxu0 0.0
    %2497 = vmatpush1.xpose.msra.mxu0 0.0
    %2498 = vmatprep.subr.mxu0 0.0
    %2499 = vmatpush1.xpose.msra.mxu0 0.0
    %2500 = vmatprep.subr.mxu0 0.0
    %2501 = vmatpush1.xpose.msra.mxu0 0.0
    %2502 = vmatprep.subr.mxu0 0.0
    %2503 = vmatpush1.xpose.msra.mxu0 0.0
    %2504 = vmatprep.subr.mxu0 0.0
    %2505 = vmatpush1.xpose.msra.mxu0 0.0
    %2506 = vmatprep.subr.mxu0 0.0
    %2507 = vmatpush1.xpose.msra.mxu0 0.0
    %2508 = vmatprep.subr.mxu0 0.0
    %2509 = vmatpush1.xpose.msra.mxu0 0.0
    %2510 = vmatprep.subr.mxu0 0.0
    %2511 = vmatpush1.xpose.msra.mxu0 0.0
    %2512 = vmatprep.subr.mxu0 0.0
    %2513 = vmatpush1.xpose.msra.mxu0 0.0
    %2514 = vmatprep.subr.mxu0 0.0
    %2515 = vmatpush1.xpose.msra.mxu0 0.0
    %2516 = vmatprep.subr.mxu0 0.0
    %2517 = vmatpush1.xpose.msra.mxu0 0.0
    %2518 = vmatprep.subr.mxu0 0.0
    %2519 = vmatpush1.xpose.msra.mxu0 0.0
    %2520 = vmatprep.subr.mxu0 0.0
    %2521 = vmatpush1.xpose.msra.mxu0 0.0
    %2522 = vmatprep.subr.mxu0 0.0
    %2523 = vmatpush1.xpose.msra.mxu0 0.0
    %2524 = vmatprep.subr.mxu0 0.0
    %2525 = vmatpush1.xpose.msra.mxu0 0.0
    %2526 = vmatprep.subr.mxu0 0.0
    %2527 = vmatpush1.xpose.msra.mxu0 0.0
    %2528 = vmatprep.subr.mxu0 0.0
    %2529 = vmatpush1.xpose.msra.mxu0 0.0
    %2530 = vmatprep.subr.mxu0 0.0
    %2531 = vmatpush1.xpose.msra.mxu0 0.0
    %2532 = vmatprep.subr.mxu0 0.0
    %2533 = vmatpush1.xpose.msra.mxu0 0.0
    %2534 = vmatprep.subr.mxu0 0.0
    %2535 = vmatpush1.xpose.msra.mxu0 0.0
    %2536 = vmatprep.subr.mxu0 0.0
    %2537 = vmatpush1.xpose.msra.mxu0 0.0
    %2538 = vmatprep.subr.mxu0 0.0
    %2539 = vmatpush1.xpose.msra.mxu0 0.0
    %2540 = vmatprep.subr.mxu0 0.0
    %2541 = vmatpush1.xpose.msra.mxu0 0.0
    %2542 = vmatprep.subr.mxu0 0.0
    %2543 = vmatpush1.xpose.msra.mxu0 0.0
    %2544 = vmatprep.subr.mxu0 0.0
    %2545 = vmatpush1.xpose.msra.mxu0 0.0
    %2546 = vmatprep.subr.mxu0 0.0
    %2547 = vmatpush1.xpose.msra.mxu0 0.0
    %2548 = vmatprep.subr.mxu0 0.0
    %2549 = vmatpush1.xpose.msra.mxu0 0.0
    %2550 = vmatprep.subr.mxu0 0.0
    %2551 = vmatpush1.xpose.msra.mxu0 0.0
    %2552 = vmatprep.subr.mxu0 0.0
    %2553 = vmatpush1.xpose.msra.mxu0 0.0
    %2554 = vmatprep.mubr.f32.mxu0 0.0
    %2555 = vmatmul.mubr.f32.gmra.mrb[0].mxu0 %v2486
    %v2556 = vpop.f32.mrb[0].mxu0
    %v2557 = vadd.f32 0.0, %v2556
    %v2558 = vpop.f32.mrb[0].mxu0
    %2559 = vdwg.mxu0
    %v2560 = vsel %vm248, %v2557, -inf
    %2561 = vmax.xlane.f32.xlu0 %v2560
    %v2562 = vpop.xlane.xlu0 %2561
    %v2563 = vsub.f32 %v2557, %v2562
    %v2564 = vmul.f32 %v2563, 1.442695
    %v2565 = vpow.pop %v2564
    %v2566 = vsel %vm248, %v2565, 0.0
    %2567 = vadd.xlane.f32.xlu0 %v2566
    %v2568 = vpop.xlane.xlu0 %2567
    %2569 = vrot.lane.b32.xlu0 %v2139, 48
    %v2570 = vpop.permute.xlu0 %2569
    %v2573 = vsel %vm248, %v2565, 0
    %2575 = vmatprep.subr.mxu0 0.0
    %2576 = vmatpush1.msra.mxu0 %v2570
    %2577 = vmatprep.subr.mxu0 0.0
    %2578 = vmatpush1.msra.mxu0 0.0
    %2579 = vmatprep.subr.mxu0 0.0
    %2580 = vmatpush1.msra.mxu0 0.0
    %2581 = vmatprep.subr.mxu0 0.0
    %2582 = vmatpush1.msra.mxu0 0.0
    %2583 = vmatprep.subr.mxu0 0.0
    %2584 = vmatpush1.msra.mxu0 0.0
    %2585 = vmatprep.subr.mxu0 0.0
    %2586 = vmatpush1.msra.mxu0 0.0
    %2587 = vmatprep.subr.mxu0 0.0
    %2588 = vmatpush1.msra.mxu0 0.0
    %2589 = vmatprep.subr.mxu0 0.0
    %2590 = vmatpush1.msra.mxu0 0.0
    %2591 = vmatprep.subr.mxu0 0.0
    %2592 = vmatpush1.msra.mxu0 0.0
    %2593 = vmatprep.subr.mxu0 0.0
    %2594 = vmatpush1.msra.mxu0 0.0
    %2595 = vmatprep.subr.mxu0 0.0
    %2596 = vmatpush1.msra.mxu0 0.0
    %2597 = vmatprep.subr.mxu0 0.0
    %2598 = vmatpush1.msra.mxu0 0.0
    %2599 = vmatprep.subr.mxu0 0.0
    %2600 = vmatpush1.msra.mxu0 0.0
    %2601 = vmatprep.subr.mxu0 0.0
    %2602 = vmatpush1.msra.mxu0 0.0
    %2603 = vmatprep.subr.mxu0 0.0
    %2604 = vmatpush1.msra.mxu0 0.0
    %2605 = vmatprep.subr.mxu0 0.0
    %2606 = vmatpush1.msra.mxu0 0.0
    %2607 = vmatprep.subr.mxu0 0.0
    %2608 = vmatpush1.msra.mxu0 0.0
    %2609 = vmatprep.subr.mxu0 0.0
    %2610 = vmatpush1.msra.mxu0 0.0
    %2611 = vmatprep.subr.mxu0 0.0
    %2612 = vmatpush1.msra.mxu0 0.0
    %2613 = vmatprep.subr.mxu0 0.0
    %2614 = vmatpush1.msra.mxu0 0.0
    %2615 = vmatprep.subr.mxu0 0.0
    %2616 = vmatpush1.msra.mxu0 0.0
    %2617 = vmatprep.subr.mxu0 0.0
    %2618 = vmatpush1.msra.mxu0 0.0
    %2619 = vmatprep.subr.mxu0 0.0
    %2620 = vmatpush1.msra.mxu0 0.0
    %2621 = vmatprep.subr.mxu0 0.0
    %2622 = vmatpush1.msra.mxu0 0.0
    %2623 = vmatprep.subr.mxu0 0.0
    %2624 = vmatpush1.msra.mxu0 0.0
    %2625 = vmatprep.subr.mxu0 0.0
    %2626 = vmatpush1.msra.mxu0 0.0
    %2627 = vmatprep.subr.mxu0 0.0
    %2628 = vmatpush1.msra.mxu0 0.0
    %2629 = vmatprep.subr.mxu0 0.0
    %2630 = vmatpush1.msra.mxu0 0.0
    %2631 = vmatprep.subr.mxu0 0.0
    %2632 = vmatpush1.msra.mxu0 0.0
    %2633 = vmatprep.subr.mxu0 0.0
    %2634 = vmatpush1.msra.mxu0 0.0
    %2635 = vmatprep.subr.mxu0 0.0
    %2636 = vmatpush1.msra.mxu0 0.0
    %2637 = vmatprep.subr.mxu0 0.0
    %2638 = vmatpush1.msra.mxu0 0.0
    %2639 = vmatprep.mubr.f32.mxu0 0.0
    %2640 = vmatmul.mubr.f32.gmra.mrb[0].mxu0 %v2573
    %v2641 = vpop.f32.mrb[0].mxu0
    %v2642 = vadd.f32 0.0, %v2641
    %v2643 = vpop.f32.mrb[0].mxu0
    %2644 = vdwg.mxu0
    %v2645 = vrcp.pop %v2568
    %v2646 = vmul.f32 %v2642, %v2645
    %2648 = vrot.lane.b32.xlu0 %v2646, 16
    %v2649 = vpop.permute.xlu0 %2648
    %2651 = vst.msk [vmem:[#allocation2] sm:$0xff] %vm1025, %v2649
    %2652 = vrot.lane.b32.xlu0 %v2139, 104
    %v2653 = vpop.permute.xlu0 %2652
    %2654 = vrot.lane.b32.xlu0 %v2139, 72
    %v2655 = vpop.permute.xlu0 %2654
    %v2656 = vsel %vm248, %v2653, 0
    %v2658 = vsel %vm248, %v2655, 0
    %2660 = vmatprep.subr.mxu0 0.0
    %2661 = vmatpush1.xpose.msra.mxu0 %v2658
    %2662 = vmatprep.subr.mxu0 0.0
    %2663 = vmatpush1.xpose.msra.mxu0 0.0
    %2664 = vmatprep.subr.mxu0 0.0
    %2665 = vmatpush1.xpose.msra.mxu0 0.0
    %2666 = vmatprep.subr.mxu0 0.0
    %2667 = vmatpush1.xpose.msra.mxu0 0.0
    %2668 = vmatprep.subr.mxu0 0.0
    %2669 = vmatpush1.xpose.msra.mxu0 0.0
    %2670 = vmatprep.subr.mxu0 0.0
    %2671 = vmatpush1.xpose.msra.mxu0 0.0
    %2672 = vmatprep.subr.mxu0 0.0
    %2673 = vmatpush1.xpose.msra.mxu0 0.0
    %2674 = vmatprep.subr.mxu0 0.0
    %2675 = vmatpush1.xpose.msra.mxu0 0.0
    %2676 = vmatprep.subr.mxu0 0.0
    %2677 = vmatpush1.xpose.msra.mxu0 0.0
    %2678 = vmatprep.subr.mxu0 0.0
    %2679 = vmatpush1.xpose.msra.mxu0 0.0
    %2680 = vmatprep.subr.mxu0 0.0
    %2681 = vmatpush1.xpose.msra.mxu0 0.0
    %2682 = vmatprep.subr.mxu0 0.0
    %2683 = vmatpush1.xpose.msra.mxu0 0.0
    %2684 = vmatprep.subr.mxu0 0.0
    %2685 = vmatpush1.xpose.msra.mxu0 0.0
    %2686 = vmatprep.subr.mxu0 0.0
    %2687 = vmatpush1.xpose.msra.mxu0 0.0
    %2688 = vmatprep.subr.mxu0 0.0
    %2689 = vmatpush1.xpose.msra.mxu0 0.0
    %2690 = vmatprep.subr.mxu0 0.0
    %2691 = vmatpush1.xpose.msra.mxu0 0.0
    %2692 = vmatprep.subr.mxu0 0.0
    %2693 = vmatpush1.xpose.msra.mxu0 0.0
    %2694 = vmatprep.subr.mxu0 0.0
    %2695 = vmatpush1.xpose.msra.mxu0 0.0
    %2696 = vmatprep.subr.mxu0 0.0
    %2697 = vmatpush1.xpose.msra.mxu0 0.0
    %2698 = vmatprep.subr.mxu0 0.0
    %2699 = vmatpush1.xpose.msra.mxu0 0.0
    %2700 = vmatprep.subr.mxu0 0.0
    %2701 = vmatpush1.xpose.msra.mxu0 0.0
    %2702 = vmatprep.subr.mxu0 0.0
    %2703 = vmatpush1.xpose.msra.mxu0 0.0
    %2704 = vmatprep.subr.mxu0 0.0
    %2705 = vmatpush1.xpose.msra.mxu0 0.0
    %2706 = vmatprep.subr.mxu0 0.0
    %2707 = vmatpush1.xpose.msra.mxu0 0.0
    %2708 = vmatprep.subr.mxu0 0.0
    %2709 = vmatpush1.xpose.msra.mxu0 0.0
    %2710 = vmatprep.subr.mxu0 0.0
    %2711 = vmatpush1.xpose.msra.mxu0 0.0
    %2712 = vmatprep.subr.mxu0 0.0
    %2713 = vmatpush1.xpose.msra.mxu0 0.0
    %2714 = vmatprep.subr.mxu0 0.0
    %2715 = vmatpush1.xpose.msra.mxu0 0.0
    %2716 = vmatprep.subr.mxu0 0.0
    %2717 = vmatpush1.xpose.msra.mxu0 0.0
    %2718 = vmatprep.subr.mxu0 0.0
    %2719 = vmatpush1.xpose.msra.mxu0 0.0
    %2720 = vmatprep.subr.mxu0 0.0
    %2721 = vmatpush1.xpose.msra.mxu0 0.0
    %2722 = vmatprep.subr.mxu0 0.0
    %2723 = vmatpush1.xpose.msra.mxu0 0.0
    %2724 = vmatprep.mubr.f32.mxu0 0.0
    %2725 = vmatmul.mubr.f32.gmra.mrb[0].mxu0 %v2656
    %v2726 = vpop.f32.mrb[0].mxu0
    %v2727 = vadd.f32 0.0, %v2726
    %v2728 = vpop.f32.mrb[0].mxu0
    %2729 = vdwg.mxu0
    %v2730 = vsel %vm248, %v2727, -inf
    %2731 = vmax.xlane.f32.xlu0 %v2730
    %v2732 = vpop.xlane.xlu0 %2731
    %v2733 = vsub.f32 %v2727, %v2732
    %v2734 = vmul.f32 %v2733, 1.442695
    %v2735 = vpow.pop %v2734
    %v2736 = vsel %vm248, %v2735, 0.0
    %2737 = vadd.xlane.f32.xlu0 %v2736
    %v2738 = vpop.xlane.xlu0 %2737
    %2739 = vrot.lane.b32.xlu0 %v2139, 40
    %v2740 = vpop.permute.xlu0 %2739
    %v2743 = vsel %vm248, %v2735, 0
    %2745 = vmatprep.subr.mxu0 0.0
    %2746 = vmatpush1.msra.mxu0 %v2740
    %2747 = vmatprep.subr.mxu0 0.0
    %2748 = vmatpush1.msra.mxu0 0.0
    %2749 = vmatprep.subr.mxu0 0.0
    %2750 = vmatpush1.msra.mxu0 0.0
    %2751 = vmatprep.subr.mxu0 0.0
    %2752 = vmatpush1.msra.mxu0 0.0
    %2753 = vmatprep.subr.mxu0 0.0
    %2754 = vmatpush1.msra.mxu0 0.0
    %2755 = vmatprep.subr.mxu0 0.0
    %2756 = vmatpush1.msra.mxu0 0.0
    %2757 = vmatprep.subr.mxu0 0.0
    %2758 = vmatpush1.msra.mxu0 0.0
    %2759 = vmatprep.subr.mxu0 0.0
    %2760 = vmatpush1.msra.mxu0 0.0
    %2761 = vmatprep.subr.mxu0 0.0
    %2762 = vmatpush1.msra.mxu0 0.0
    %2763 = vmatprep.subr.mxu0 0.0
    %2764 = vmatpush1.msra.mxu0 0.0
    %2765 = vmatprep.subr.mxu0 0.0
    %2766 = vmatpush1.msra.mxu0 0.0
    %2767 = vmatprep.subr.mxu0 0.0
    %2768 = vmatpush1.msra.mxu0 0.0
    %2769 = vmatprep.subr.mxu0 0.0
    %2770 = vmatpush1.msra.mxu0 0.0
    %2771 = vmatprep.subr.mxu0 0.0
    %2772 = vmatpush1.msra.mxu0 0.0
    %2773 = vmatprep.subr.mxu0 0.0
    %2774 = vmatpush1.msra.mxu0 0.0
    %2775 = vmatprep.subr.mxu0 0.0
    %2776 = vmatpush1.msra.mxu0 0.0
    %2777 = vmatprep.subr.mxu0 0.0
    %2778 = vmatpush1.msra.mxu0 0.0
    %2779 = vmatprep.subr.mxu0 0.0
    %2780 = vmatpush1.msra.mxu0 0.0
    %2781 = vmatprep.subr.mxu0 0.0
    %2782 = vmatpush1.msra.mxu0 0.0
    %2783 = vmatprep.subr.mxu0 0.0
    %2784 = vmatpush1.msra.mxu0 0.0
    %2785 = vmatprep.subr.mxu0 0.0
    %2786 = vmatpush1.msra.mxu0 0.0
    %2787 = vmatprep.subr.mxu0 0.0
    %2788 = vmatpush1.msra.mxu0 0.0
    %2789 = vmatprep.subr.mxu0 0.0
    %2790 = vmatpush1.msra.mxu0 0.0
    %2791 = vmatprep.subr.mxu0 0.0
    %2792 = vmatpush1.msra.mxu0 0.0
    %2793 = vmatprep.subr.mxu0 0.0
    %2794 = vmatpush1.msra.mxu0 0.0
    %2795 = vmatprep.subr.mxu0 0.0
    %2796 = vmatpush1.msra.mxu0 0.0
    %2797 = vmatprep.subr.mxu0 0.0
    %2798 = vmatpush1.msra.mxu0 0.0
    %2799 = vmatprep.subr.mxu0 0.0
    %2800 = vmatpush1.msra.mxu0 0.0
    %2801 = vmatprep.subr.mxu0 0.0
    %2802 = vmatpush1.msra.mxu0 0.0
    %2803 = vmatprep.subr.mxu0 0.0
    %2804 = vmatpush1.msra.mxu0 0.0
    %2805 = vmatprep.subr.mxu0 0.0
    %2806 = vmatpush1.msra.mxu0 0.0
    %2807 = vmatprep.subr.mxu0 0.0
    %2808 = vmatpush1.msra.mxu0 0.0
    %2809 = vmatprep.mubr.f32.mxu0 0.0
    %2810 = vmatmul.mubr.f32.gmra.mrb[0].mxu0 %v2743
    %v2811 = vpop.f32.mrb[0].mxu0
    %v2812 = vadd.f32 0.0, %v2811
    %v2813 = vpop.f32.mrb[0].mxu0
    %2814 = vdwg.mxu0
    %v2815 = vrcp.pop %v2738
    %v2816 = vmul.f32 %v2812, %v2815
    %2818 = vrot.lane.b32.xlu0 %v2816, 24
    %v2819 = vpop.permute.xlu0 %2818
    %2821 = vst.msk [vmem:[#allocation2] sm:$0xff] %vm1196, %v2819
    %2823 = vrot.lane.b32.xlu0 %v2144, 96
    %v2824 = vpop.permute.xlu0 %2823
    %v2825 = vsel %vm248, %v2144, 0
    %v2827 = vsel %vm248, %v2824, 0
    %2829 = vmatprep.subr.mxu0 0.0
    %2830 = vmatpush1.xpose.msra.mxu0 %v2827
    %2831 = vmatprep.subr.mxu0 0.0
    %2832 = vmatpush1.xpose.msra.mxu0 0.0
    %2833 = vmatprep.subr.mxu0 0.0
    %2834 = vmatpush1.xpose.msra.mxu0 0.0
    %2835 = vmatprep.subr.mxu0 0.0
    %2836 = vmatpush1.xpose.msra.mxu0 0.0
    %2837 = vmatprep.subr.mxu0 0.0
    %2838 = vmatpush1.xpose.msra.mxu0 0.0
    %2839 = vmatprep.subr.mxu0 0.0
    %2840 = vmatpush1.xpose.msra.mxu0 0.0
    %2841 = vmatprep.subr.mxu0 0.0
    %2842 = vmatpush1.xpose.msra.mxu0 0.0
    %2843 = vmatprep.subr.mxu0 0.0
    %2844 = vmatpush1.xpose.msra.mxu0 0.0
    %2845 = vmatprep.subr.mxu0 0.0
    %2846 = vmatpush1.xpose.msra.mxu0 0.0
    %2847 = vmatprep.subr.mxu0 0.0
    %2848 = vmatpush1.xpose.msra.mxu0 0.0
    %2849 = vmatprep.subr.mxu0 0.0
    %2850 = vmatpush1.xpose.msra.mxu0 0.0
    %2851 = vmatprep.subr.mxu0 0.0
    %2852 = vmatpush1.xpose.msra.mxu0 0.0
    %2853 = vmatprep.subr.mxu0 0.0
    %2854 = vmatpush1.xpose.msra.mxu0 0.0
    %2855 = vmatprep.subr.mxu0 0.0
    %2856 = vmatpush1.xpose.msra.mxu0 0.0
    %2857 = vmatprep.subr.mxu0 0.0
    %2858 = vmatpush1.xpose.msra.mxu0 0.0
    %2859 = vmatprep.subr.mxu0 0.0
    %2860 = vmatpush1.xpose.msra.mxu0 0.0
    %2861 = vmatprep.subr.mxu0 0.0
    %2862 = vmatpush1.xpose.msra.mxu0 0.0
    %2863 = vmatprep.subr.mxu0 0.0
    %2864 = vmatpush1.xpose.msra.mxu0 0.0
    %2865 = vmatprep.subr.mxu0 0.0
    %2866 = vmatpush1.xpose.msra.mxu0 0.0
    %2867 = vmatprep.subr.mxu0 0.0
    %2868 = vmatpush1.xpose.msra.mxu0 0.0
    %2869 = vmatprep.subr.mxu0 0.0
    %2870 = vmatpush1.xpose.msra.mxu0 0.0
    %2871 = vmatprep.subr.mxu0 0.0
    %2872 = vmatpush1.xpose.msra.mxu0 0.0
    %2873 = vmatprep.subr.mxu0 0.0
    %2874 = vmatpush1.xpose.msra.mxu0 0.0
    %2875 = vmatprep.subr.mxu0 0.0
    %2876 = vmatpush1.xpose.msra.mxu0 0.0
    %2877 = vmatprep.subr.mxu0 0.0
    %2878 = vmatpush1.xpose.msra.mxu0 0.0
    %2879 = vmatprep.subr.mxu0 0.0
    %2880 = vmatpush1.xpose.msra.mxu0 0.0
    %2881 = vmatprep.subr.mxu0 0.0
    %2882 = vmatpush1.xpose.msra.mxu0 0.0
    %2883 = vmatprep.subr.mxu0 0.0
    %2884 = vmatpush1.xpose.msra.mxu0 0.0
    %2885 = vmatprep.subr.mxu0 0.0
    %2886 = vmatpush1.xpose.msra.mxu0 0.0
    %2887 = vmatprep.subr.mxu0 0.0
    %2888 = vmatpush1.xpose.msra.mxu0 0.0
    %2889 = vmatprep.subr.mxu0 0.0
    %2890 = vmatpush1.xpose.msra.mxu0 0.0
    %2891 = vmatprep.subr.mxu0 0.0
    %2892 = vmatpush1.xpose.msra.mxu0 0.0
    %2893 = vmatprep.mubr.f32.mxu0 0.0
    %2894 = vmatmul.mubr.f32.gmra.mrb[0].mxu0 %v2825
    %v2895 = vpop.f32.mrb[0].mxu0
    %v2896 = vadd.f32 0.0, %v2895
    %v2897 = vpop.f32.mrb[0].mxu0
    %2898 = vdwg.mxu0
    %v2899 = vsel %vm248, %v2896, -inf
    %2900 = vmax.xlane.f32.xlu0 %v2899
    %v2901 = vpop.xlane.xlu0 %2900
    %v2902 = vsub.f32 %v2896, %v2901
    %v2903 = vmul.f32 %v2902, 1.442695
    %v2904 = vpow.pop %v2903
    %v2905 = vsel %vm248, %v2904, 0.0
    %2906 = vadd.xlane.f32.xlu0 %v2905
    %v2907 = vpop.xlane.xlu0 %2906
    %2908 = vrot.lane.b32.xlu0 %v2144, 64
    %v2909 = vpop.permute.xlu0 %2908
    %v2912 = vsel %vm248, %v2904, 0
    %2914 = vmatprep.subr.mxu0 0.0
    %2915 = vmatpush1.msra.mxu0 %v2909
    %2916 = vmatprep.subr.mxu0 0.0
    %2917 = vmatpush1.msra.mxu0 0.0
    %2918 = vmatprep.subr.mxu0 0.0
    %2919 = vmatpush1.msra.mxu0 0.0
    %2920 = vmatprep.subr.mxu0 0.0
    %2921 = vmatpush1.msra.mxu0 0.0
    %2922 = vmatprep.subr.mxu0 0.0
    %2923 = vmatpush1.msra.mxu0 0.0
    %2924 = vmatprep.subr.mxu0 0.0
    %2925 = vmatpush1.msra.mxu0 0.0
    %2926 = vmatprep.subr.mxu0 0.0
    %2927 = vmatpush1.msra.mxu0 0.0
    %2928 = vmatprep.subr.mxu0 0.0
    %2929 = vmatpush1.msra.mxu0 0.0
    %2930 = vmatprep.subr.mxu0 0.0
    %2931 = vmatpush1.msra.mxu0 0.0
    %2932 = vmatprep.subr.mxu0 0.0
    %2933 = vmatpush1.msra.mxu0 0.0
    %2934 = vmatprep.subr.mxu0 0.0
    %2935 = vmatpush1.msra.mxu0 0.0
    %2936 = vmatprep.subr.mxu0 0.0
    %2937 = vmatpush1.msra.mxu0 0.0
    %2938 = vmatprep.subr.mxu0 0.0
    %2939 = vmatpush1.msra.mxu0 0.0
    %2940 = vmatprep.subr.mxu0 0.0
    %2941 = vmatpush1.msra.mxu0 0.0
    %2942 = vmatprep.subr.mxu0 0.0
    %2943 = vmatpush1.msra.mxu0 0.0
    %2944 = vmatprep.subr.mxu0 0.0
    %2945 = vmatpush1.msra.mxu0 0.0
    %2946 = vmatprep.subr.mxu0 0.0
    %2947 = vmatpush1.msra.mxu0 0.0
    %2948 = vmatprep.subr.mxu0 0.0
    %2949 = vmatpush1.msra.mxu0 0.0
    %2950 = vmatprep.subr.mxu0 0.0
    %2951 = vmatpush1.msra.mxu0 0.0
    %2952 = vmatprep.subr.mxu0 0.0
    %2953 = vmatpush1.msra.mxu0 0.0
    %2954 = vmatprep.subr.mxu0 0.0
    %2955 = vmatpush1.msra.mxu0 0.0
    %2956 = vmatprep.subr.mxu0 0.0
    %2957 = vmatpush1.msra.mxu0 0.0
    %2958 = vmatprep.subr.mxu0 0.0
    %2959 = vmatpush1.msra.mxu0 0.0
    %2960 = vmatprep.subr.mxu0 0.0
    %2961 = vmatpush1.msra.mxu0 0.0
    %2962 = vmatprep.subr.mxu0 0.0
    %2963 = vmatpush1.msra.mxu0 0.0
    %2964 = vmatprep.subr.mxu0 0.0
    %2965 = vmatpush1.msra.mxu0 0.0
    %2966 = vmatprep.subr.mxu0 0.0
    %2967 = vmatpush1.msra.mxu0 0.0
    %2968 = vmatprep.subr.mxu0 0.0
    %2969 = vmatpush1.msra.mxu0 0.0
    %2970 = vmatprep.subr.mxu0 0.0
    %2971 = vmatpush1.msra.mxu0 0.0
    %2972 = vmatprep.subr.mxu0 0.0
    %2973 = vmatpush1.msra.mxu0 0.0
    %2974 = vmatprep.subr.mxu0 0.0
    %2975 = vmatpush1.msra.mxu0 0.0
    %2976 = vmatprep.subr.mxu0 0.0
    %2977 = vmatpush1.msra.mxu0 0.0
    %2978 = vmatprep.mubr.f32.mxu0 0.0
    %2979 = vmatmul.mubr.f32.gmra.mrb[0].mxu0 %v2912
    %v2980 = vpop.f32.mrb[0].mxu0
    %v2981 = vadd.f32 0.0, %v2980
    %v2982 = vpop.f32.mrb[0].mxu0
    %2983 = vdwg.mxu0
    %v2984 = vrcp.pop %v2907
    %v2985 = vmul.f32 %v2981, %v2984
    %2986 = vst.msk [vmem:[#allocation2 + $0x8] sm:$0xff] %vm248, %v2985
    %2987 = vrot.lane.b32.xlu0 %v2144, 120
    %v2988 = vpop.permute.xlu0 %2987
    %2989 = vrot.lane.b32.xlu0 %v2144, 88
    %v2990 = vpop.permute.xlu0 %2989
    %v2991 = vsel %vm248, %v2988, 0
    %v2993 = vsel %vm248, %v2990, 0
    %2995 = vmatprep.subr.mxu0 0.0
    %2996 = vmatpush1.xpose.msra.mxu0 %v2993
    %2997 = vmatprep.subr.mxu0 0.0
    %2998 = vmatpush1.xpose.msra.mxu0 0.0
    %2999 = vmatprep.subr.mxu0 0.0
    %3000 = vmatpush1.xpose.msra.mxu0 0.0
    %3001 = vmatprep.subr.mxu0 0.0
    %3002 = vmatpush1.xpose.msra.mxu0 0.0
    %3003 = vmatprep.subr.mxu0 0.0
    %3004 = vmatpush1.xpose.msra.mxu0 0.0
    %3005 = vmatprep.subr.mxu0 0.0
    %3006 = vmatpush1.xpose.msra.mxu0 0.0
    %3007 = vmatprep.subr.mxu0 0.0
    %3008 = vmatpush1.xpose.msra.mxu0 0.0
    %3009 = vmatprep.subr.mxu0 0.0
    %3010 = vmatpush1.xpose.msra.mxu0 0.0
    %3011 = vmatprep.subr.mxu0 0.0
    %3012 = vmatpush1.xpose.msra.mxu0 0.0
    %3013 = vmatprep.subr.mxu0 0.0
    %3014 = vmatpush1.xpose.msra.mxu0 0.0
    %3015 = vmatprep.subr.mxu0 0.0
    %3016 = vmatpush1.xpose.msra.mxu0 0.0
    %3017 = vmatprep.subr.mxu0 0.0
    %3018 = vmatpush1.xpose.msra.mxu0 0.0
    %3019 = vmatprep.subr.mxu0 0.0
    %3020 = vmatpush1.xpose.msra.mxu0 0.0
    %3021 = vmatprep.subr.mxu0 0.0
    %3022 = vmatpush1.xpose.msra.mxu0 0.0
    %3023 = vmatprep.subr.mxu0 0.0
    %3024 = vmatpush1.xpose.msra.mxu0 0.0
    %3025 = vmatprep.subr.mxu0 0.0
    %3026 = vmatpush1.xpose.msra.mxu0 0.0
    %3027 = vmatprep.subr.mxu0 0.0
    %3028 = vmatpush1.xpose.msra.mxu0 0.0
    %3029 = vmatprep.subr.mxu0 0.0
    %3030 = vmatpush1.xpose.msra.mxu0 0.0
    %3031 = vmatprep.subr.mxu0 0.0
    %3032 = vmatpush1.xpose.msra.mxu0 0.0
    %3033 = vmatprep.subr.mxu0 0.0
    %3034 = vmatpush1.xpose.msra.mxu0 0.0
    %3035 = vmatprep.subr.mxu0 0.0
    %3036 = vmatpush1.xpose.msra.mxu0 0.0
    %3037 = vmatprep.subr.mxu0 0.0
    %3038 = vmatpush1.xpose.msra.mxu0 0.0
    %3039 = vmatprep.subr.mxu0 0.0
    %3040 = vmatpush1.xpose.msra.mxu0 0.0
    %3041 = vmatprep.subr.mxu0 0.0
    %3042 = vmatpush1.xpose.msra.mxu0 0.0
    %3043 = vmatprep.subr.mxu0 0.0
    %3044 = vmatpush1.xpose.msra.mxu0 0.0
    %3045 = vmatprep.subr.mxu0 0.0
    %3046 = vmatpush1.xpose.msra.mxu0 0.0
    %3047 = vmatprep.subr.mxu0 0.0
    %3048 = vmatpush1.xpose.msra.mxu0 0.0
    %3049 = vmatprep.subr.mxu0 0.0
    %3050 = vmatpush1.xpose.msra.mxu0 0.0
    %3051 = vmatprep.subr.mxu0 0.0
    %3052 = vmatpush1.xpose.msra.mxu0 0.0
    %3053 = vmatprep.subr.mxu0 0.0
    %3054 = vmatpush1.xpose.msra.mxu0 0.0
    %3055 = vmatprep.subr.mxu0 0.0
    %3056 = vmatpush1.xpose.msra.mxu0 0.0
    %3057 = vmatprep.subr.mxu0 0.0
    %3058 = vmatpush1.xpose.msra.mxu0 0.0
    %3059 = vmatprep.mubr.f32.mxu0 0.0
    %3060 = vmatmul.mubr.f32.gmra.mrb[0].mxu0 %v2991
    %v3061 = vpop.f32.mrb[0].mxu0
    %v3062 = vadd.f32 0.0, %v3061
    %v3063 = vpop.f32.mrb[0].mxu0
    %3064 = vdwg.mxu0
    %v3065 = vsel %vm248, %v3062, -inf
    %3066 = vmax.xlane.f32.xlu0 %v3065
    %v3067 = vpop.xlane.xlu0 %3066
    %v3068 = vsub.f32 %v3062, %v3067
    %v3069 = vmul.f32 %v3068, 1.442695
    %v3070 = vpow.pop %v3069
    %v3071 = vsel %vm248, %v3070, 0.0
    %3072 = vadd.xlane.f32.xlu0 %v3071
    %v3073 = vpop.xlane.xlu0 %3072
    %3074 = vrot.lane.b32.xlu0 %v2144, 56
    %v3075 = vpop.permute.xlu0 %3074
    %v3078 = vsel %vm248, %v3070, 0
    %3080 = vmatprep.subr.mxu0 0.0
    %3081 = vmatpush1.msra.mxu0 %v3075
    %3082 = vmatprep.subr.mxu0 0.0
    %3083 = vmatpush1.msra.mxu0 0.0
    %3084 = vmatprep.subr.mxu0 0.0
    %3085 = vmatpush1.msra.mxu0 0.0
    %3086 = vmatprep.subr.mxu0 0.0
    %3087 = vmatpush1.msra.mxu0 0.0
    %3088 = vmatprep.subr.mxu0 0.0
    %3089 = vmatpush1.msra.mxu0 0.0
    %3090 = vmatprep.subr.mxu0 0.0
    %3091 = vmatpush1.msra.mxu0 0.0
    %3092 = vmatprep.subr.mxu0 0.0
    %3093 = vmatpush1.msra.mxu0 0.0
    %3094 = vmatprep.subr.mxu0 0.0
    %3095 = vmatpush1.msra.mxu0 0.0
    %3096 = vmatprep.subr.mxu0 0.0
    %3097 = vmatpush1.msra.mxu0 0.0
    %3098 = vmatprep.subr.mxu0 0.0
    %3099 = vmatpush1.msra.mxu0 0.0
    %3100 = vmatprep.subr.mxu0 0.0
    %3101 = vmatpush1.msra.mxu0 0.0
    %3102 = vmatprep.subr.mxu0 0.0
    %3103 = vmatpush1.msra.mxu0 0.0
    %3104 = vmatprep.subr.mxu0 0.0
    %3105 = vmatpush1.msra.mxu0 0.0
    %3106 = vmatprep.subr.mxu0 0.0
    %3107 = vmatpush1.msra.mxu0 0.0
    %3108 = vmatprep.subr.mxu0 0.0
    %3109 = vmatpush1.msra.mxu0 0.0
    %3110 = vmatprep.subr.mxu0 0.0
    %3111 = vmatpush1.msra.mxu0 0.0
    %3112 = vmatprep.subr.mxu0 0.0
    %3113 = vmatpush1.msra.mxu0 0.0
    %3114 = vmatprep.subr.mxu0 0.0
    %3115 = vmatpush1.msra.mxu0 0.0
    %3116 = vmatprep.subr.mxu0 0.0
    %3117 = vmatpush1.msra.mxu0 0.0
    %3118 = vmatprep.subr.mxu0 0.0
    %3119 = vmatpush1.msra.mxu0 0.0
    %3120 = vmatprep.subr.mxu0 0.0
    %3121 = vmatpush1.msra.mxu0 0.0
    %3122 = vmatprep.subr.mxu0 0.0
    %3123 = vmatpush1.msra.mxu0 0.0
    %3124 = vmatprep.subr.mxu0 0.0
    %3125 = vmatpush1.msra.mxu0 0.0
    %3126 = vmatprep.subr.mxu0 0.0
    %3127 = vmatpush1.msra.mxu0 0.0
    %3128 = vmatprep.subr.mxu0 0.0
    %3129 = vmatpush1.msra.mxu0 0.0
    %3130 = vmatprep.subr.mxu0 0.0
    %3131 = vmatpush1.msra.mxu0 0.0
    %3132 = vmatprep.subr.mxu0 0.0
    %3133 = vmatpush1.msra.mxu0 0.0
    %3134 = vmatprep.subr.mxu0 0.0
    %3135 = vmatpush1.msra.mxu0 0.0
    %3136 = vmatprep.subr.mxu0 0.0
    %3137 = vmatpush1.msra.mxu0 0.0
    %3138 = vmatprep.subr.mxu0 0.0
    %3139 = vmatpush1.msra.mxu0 0.0
    %3140 = vmatprep.subr.mxu0 0.0
    %3141 = vmatpush1.msra.mxu0 0.0
    %3142 = vmatprep.subr.mxu0 0.0
    %3143 = vmatpush1.msra.mxu0 0.0
    %3144 = vmatprep.mubr.f32.mxu0 0.0
    %3145 = vmatmul.mubr.f32.gmra.mrb[0].mxu0 %v3078
    %v3146 = vpop.f32.mrb[0].mxu0
    %v3147 = vadd.f32 0.0, %v3146
    %v3148 = vpop.f32.mrb[0].mxu0
    %3149 = vdwg.mxu0
    %v3150 = vrcp.pop %v3073
    %v3151 = vmul.f32 %v3147, %v3150
    %3153 = vrot.lane.b32.xlu0 %v3151, 8
    %v3154 = vpop.permute.xlu0 %3153
    %3156 = vst.msk [vmem:[#allocation2 + $0x8] sm:$0xff] %vm854, %v3154
    %3157 = vrot.lane.b32.xlu0 %v2144, 112
    %v3158 = vpop.permute.xlu0 %3157
    %3159 = vrot.lane.b32.xlu0 %v2144, 80
    %v3160 = vpop.permute.xlu0 %3159
    %v3161 = vsel %vm248, %v3158, 0
    %v3163 = vsel %vm248, %v3160, 0
    %3165 = vmatprep.subr.mxu0 0.0
    %3166 = vmatpush1.xpose.msra.mxu0 %v3163
    %3167 = vmatprep.subr.mxu0 0.0
    %3168 = vmatpush1.xpose.msra.mxu0 0.0
    %3169 = vmatprep.subr.mxu0 0.0
    %3170 = vmatpush1.xpose.msra.mxu0 0.0
    %3171 = vmatprep.subr.mxu0 0.0
    %3172 = vmatpush1.xpose.msra.mxu0 0.0
    %3173 = vmatprep.subr.mxu0 0.0
    %3174 = vmatpush1.xpose.msra.mxu0 0.0
    %3175 = vmatprep.subr.mxu0 0.0
    %3176 = vmatpush1.xpose.msra.mxu0 0.0
    %3177 = vmatprep.subr.mxu0 0.0
    %3178 = vmatpush1.xpose.msra.mxu0 0.0
    %3179 = vmatprep.subr.mxu0 0.0
    %3180 = vmatpush1.xpose.msra.mxu0 0.0
    %3181 = vmatprep.subr.mxu0 0.0
    %3182 = vmatpush1.xpose.msra.mxu0 0.0
    %3183 = vmatprep.subr.mxu0 0.0
    %3184 = vmatpush1.xpose.msra.mxu0 0.0
    %3185 = vmatprep.subr.mxu0 0.0
    %3186 = vmatpush1.xpose.msra.mxu0 0.0
    %3187 = vmatprep.subr.mxu0 0.0
    %3188 = vmatpush1.xpose.msra.mxu0 0.0
    %3189 = vmatprep.subr.mxu0 0.0
    %3190 = vmatpush1.xpose.msra.mxu0 0.0
    %3191 = vmatprep.subr.mxu0 0.0
    %3192 = vmatpush1.xpose.msra.mxu0 0.0
    %3193 = vmatprep.subr.mxu0 0.0
    %3194 = vmatpush1.xpose.msra.mxu0 0.0
    %3195 = vmatprep.subr.mxu0 0.0
    %3196 = vmatpush1.xpose.msra.mxu0 0.0
    %3197 = vmatprep.subr.mxu0 0.0
    %3198 = vmatpush1.xpose.msra.mxu0 0.0
    %3199 = vmatprep.subr.mxu0 0.0
    %3200 = vmatpush1.xpose.msra.mxu0 0.0
    %3201 = vmatprep.subr.mxu0 0.0
    %3202 = vmatpush1.xpose.msra.mxu0 0.0
    %3203 = vmatprep.subr.mxu0 0.0
    %3204 = vmatpush1.xpose.msra.mxu0 0.0
    %3205 = vmatprep.subr.mxu0 0.0
    %3206 = vmatpush1.xpose.msra.mxu0 0.0
    %3207 = vmatprep.subr.mxu0 0.0
    %3208 = vmatpush1.xpose.msra.mxu0 0.0
    %3209 = vmatprep.subr.mxu0 0.0
    %3210 = vmatpush1.xpose.msra.mxu0 0.0
    %3211 = vmatprep.subr.mxu0 0.0
    %3212 = vmatpush1.xpose.msra.mxu0 0.0
    %3213 = vmatprep.subr.mxu0 0.0
    %3214 = vmatpush1.xpose.msra.mxu0 0.0
    %3215 = vmatprep.subr.mxu0 0.0
    %3216 = vmatpush1.xpose.msra.mxu0 0.0
    %3217 = vmatprep.subr.mxu0 0.0
    %3218 = vmatpush1.xpose.msra.mxu0 0.0
    %3219 = vmatprep.subr.mxu0 0.0
    %3220 = vmatpush1.xpose.msra.mxu0 0.0
    %3221 = vmatprep.subr.mxu0 0.0
    %3222 = vmatpush1.xpose.msra.mxu0 0.0
    %3223 = vmatprep.subr.mxu0 0.0
    %3224 = vmatpush1.xpose.msra.mxu0 0.0
    %3225 = vmatprep.subr.mxu0 0.0
    %3226 = vmatpush1.xpose.msra.mxu0 0.0
    %3227 = vmatprep.subr.mxu0 0.0
    %3228 = vmatpush1.xpose.msra.mxu0 0.0
    %3229 = vmatprep.mubr.f32.mxu0 0.0
    %3230 = vmatmul.mubr.f32.gmra.mrb[0].mxu0 %v3161
    %v3231 = vpop.f32.mrb[0].mxu0
    %v3232 = vadd.f32 0.0, %v3231
    %v3233 = vpop.f32.mrb[0].mxu0
    %3234 = vdwg.mxu0
    %v3235 = vsel %vm248, %v3232, -inf
    %3236 = vmax.xlane.f32.xlu0 %v3235
    %v3237 = vpop.xlane.xlu0 %3236
    %v3238 = vsub.f32 %v3232, %v3237
    %v3239 = vmul.f32 %v3238, 1.442695
    %v3240 = vpow.pop %v3239
    %v3241 = vsel %vm248, %v3240, 0.0
    %3242 = vadd.xlane.f32.xlu0 %v3241
    %v3243 = vpop.xlane.xlu0 %3242
    %3244 = vrot.lane.b32.xlu0 %v2144, 48
    %v3245 = vpop.permute.xlu0 %3244
    %v3248 = vsel %vm248, %v3240, 0
    %3250 = vmatprep.subr.mxu0 0.0
    %3251 = vmatpush1.msra.mxu0 %v3245
    %3252 = vmatprep.subr.mxu0 0.0
    %3253 = vmatpush1.msra.mxu0 0.0
    %3254 = vmatprep.subr.mxu0 0.0
    %3255 = vmatpush1.msra.mxu0 0.0
    %3256 = vmatprep.subr.mxu0 0.0
    %3257 = vmatpush1.msra.mxu0 0.0
    %3258 = vmatprep.subr.mxu0 0.0
    %3259 = vmatpush1.msra.mxu0 0.0
    %3260 = vmatprep.subr.mxu0 0.0
    %3261 = vmatpush1.msra.mxu0 0.0
    %3262 = vmatprep.subr.mxu0 0.0
    %3263 = vmatpush1.msra.mxu0 0.0
    %3264 = vmatprep.subr.mxu0 0.0
    %3265 = vmatpush1.msra.mxu0 0.0
    %3266 = vmatprep.subr.mxu0 0.0
    %3267 = vmatpush1.msra.mxu0 0.0
    %3268 = vmatprep.subr.mxu0 0.0
    %3269 = vmatpush1.msra.mxu0 0.0
    %3270 = vmatprep.subr.mxu0 0.0
    %3271 = vmatpush1.msra.mxu0 0.0
    %3272 = vmatprep.subr.mxu0 0.0
    %3273 = vmatpush1.msra.mxu0 0.0
    %3274 = vmatprep.subr.mxu0 0.0
    %3275 = vmatpush1.msra.mxu0 0.0
    %3276 = vmatprep.subr.mxu0 0.0
    %3277 = vmatpush1.msra.mxu0 0.0
    %3278 = vmatprep.subr.mxu0 0.0
    %3279 = vmatpush1.msra.mxu0 0.0
    %3280 = vmatprep.subr.mxu0 0.0
    %3281 = vmatpush1.msra.mxu0 0.0
    %3282 = vmatprep.subr.mxu0 0.0
    %3283 = vmatpush1.msra.mxu0 0.0
    %3284 = vmatprep.subr.mxu0 0.0
    %3285 = vmatpush1.msra.mxu0 0.0
    %3286 = vmatprep.subr.mxu0 0.0
    %3287 = vmatpush1.msra.mxu0 0.0
    %3288 = vmatprep.subr.mxu0 0.0
    %3289 = vmatpush1.msra.mxu0 0.0
    %3290 = vmatprep.subr.mxu0 0.0
    %3291 = vmatpush1.msra.mxu0 0.0
    %3292 = vmatprep.subr.mxu0 0.0
    %3293 = vmatpush1.msra.mxu0 0.0
    %3294 = vmatprep.subr.mxu0 0.0
    %3295 = vmatpush1.msra.mxu0 0.0
    %3296 = vmatprep.subr.mxu0 0.0
    %3297 = vmatpush1.msra.mxu0 0.0
    %3298 = vmatprep.subr.mxu0 0.0
    %3299 = vmatpush1.msra.mxu0 0.0
    %3300 = vmatprep.subr.mxu0 0.0
    %3301 = vmatpush1.msra.mxu0 0.0
    %3302 = vmatprep.subr.mxu0 0.0
    %3303 = vmatpush1.msra.mxu0 0.0
    %3304 = vmatprep.subr.mxu0 0.0
    %3305 = vmatpush1.msra.mxu0 0.0
    %3306 = vmatprep.subr.mxu0 0.0
    %3307 = vmatpush1.msra.mxu0 0.0
    %3308 = vmatprep.subr.mxu0 0.0
    %3309 = vmatpush1.msra.mxu0 0.0
    %3310 = vmatprep.subr.mxu0 0.0
    %3311 = vmatpush1.msra.mxu0 0.0
    %3312 = vmatprep.subr.mxu0 0.0
    %3313 = vmatpush1.msra.mxu0 0.0
    %3314 = vmatprep.mubr.f32.mxu0 0.0
    %3315 = vmatmul.mubr.f32.gmra.mrb[0].mxu0 %v3248
    %v3316 = vpop.f32.mrb[0].mxu0
    %v3317 = vadd.f32 0.0, %v3316
    %v3318 = vpop.f32.mrb[0].mxu0
    %3319 = vdwg.mxu0
    %v3320 = vrcp.pop %v3243
    %v3321 = vmul.f32 %v3317, %v3320
    %3323 = vrot.lane.b32.xlu0 %v3321, 16
    %v3324 = vpop.permute.xlu0 %3323
    %3326 = vst.msk [vmem:[#allocation2 + $0x8] sm:$0xff] %vm1025, %v3324
    %3327 = vrot.lane.b32.xlu0 %v2144, 104
    %v3328 = vpop.permute.xlu0 %3327
    %3329 = vrot.lane.b32.xlu0 %v2144, 72
    %v3330 = vpop.permute.xlu0 %3329
    %v3331 = vsel %vm248, %v3328, 0
    %v3333 = vsel %vm248, %v3330, 0
    %3335 = vmatprep.subr.mxu0 0.0
    %3336 = vmatpush1.xpose.msra.mxu0 %v3333
    %3337 = vmatprep.subr.mxu0 0.0
    %3338 = vmatpush1.xpose.msra.mxu0 0.0
    %3339 = vmatprep.subr.mxu0 0.0
    %3340 = vmatpush1.xpose.msra.mxu0 0.0
    %3341 = vmatprep.subr.mxu0 0.0
    %3342 = vmatpush1.xpose.msra.mxu0 0.0
    %3343 = vmatprep.subr.mxu0 0.0
    %3344 = vmatpush1.xpose.msra.mxu0 0.0
    %3345 = vmatprep.subr.mxu0 0.0
    %3346 = vmatpush1.xpose.msra.mxu0 0.0
    %3347 = vmatprep.subr.mxu0 0.0
    %3348 = vmatpush1.xpose.msra.mxu0 0.0
    %3349 = vmatprep.subr.mxu0 0.0
    %3350 = vmatpush1.xpose.msra.mxu0 0.0
    %3351 = vmatprep.subr.mxu0 0.0
    %3352 = vmatpush1.xpose.msra.mxu0 0.0
    %3353 = vmatprep.subr.mxu0 0.0
    %3354 = vmatpush1.xpose.msra.mxu0 0.0
    %3355 = vmatprep.subr.mxu0 0.0
    %3356 = vmatpush1.xpose.msra.mxu0 0.0
    %3357 = vmatprep.subr.mxu0 0.0
    %3358 = vmatpush1.xpose.msra.mxu0 0.0
    %3359 = vmatprep.subr.mxu0 0.0
    %3360 = vmatpush1.xpose.msra.mxu0 0.0
    %3361 = vmatprep.subr.mxu0 0.0
    %3362 = vmatpush1.xpose.msra.mxu0 0.0
    %3363 = vmatprep.subr.mxu0 0.0
    %3364 = vmatpush1.xpose.msra.mxu0 0.0
    %3365 = vmatprep.subr.mxu0 0.0
    %3366 = vmatpush1.xpose.msra.mxu0 0.0
    %3367 = vmatprep.subr.mxu0 0.0
    %3368 = vmatpush1.xpose.msra.mxu0 0.0
    %3369 = vmatprep.subr.mxu0 0.0
    %3370 = vmatpush1.xpose.msra.mxu0 0.0
    %3371 = vmatprep.subr.mxu0 0.0
    %3372 = vmatpush1.xpose.msra.mxu0 0.0
    %3373 = vmatprep.subr.mxu0 0.0
    %3374 = vmatpush1.xpose.msra.mxu0 0.0
    %3375 = vmatprep.subr.mxu0 0.0
    %3376 = vmatpush1.xpose.msra.mxu0 0.0
    %3377 = vmatprep.subr.mxu0 0.0
    %3378 = vmatpush1.xpose.msra.mxu0 0.0
    %3379 = vmatprep.subr.mxu0 0.0
    %3380 = vmatpush1.xpose.msra.mxu0 0.0
    %3381 = vmatprep.subr.mxu0 0.0
    %3382 = vmatpush1.xpose.msra.mxu0 0.0
    %3383 = vmatprep.subr.mxu0 0.0
    %3384 = vmatpush1.xpose.msra.mxu0 0.0
    %3385 = vmatprep.subr.mxu0 0.0
    %3386 = vmatpush1.xpose.msra.mxu0 0.0
    %3387 = vmatprep.subr.mxu0 0.0
    %3388 = vmatpush1.xpose.msra.mxu0 0.0
    %3389 = vmatprep.subr.mxu0 0.0
    %3390 = vmatpush1.xpose.msra.mxu0 0.0
    %3391 = vmatprep.subr.mxu0 0.0
    %3392 = vmatpush1.xpose.msra.mxu0 0.0
    %3393 = vmatprep.subr.mxu0 0.0
    %3394 = vmatpush1.xpose.msra.mxu0 0.0
    %3395 = vmatprep.subr.mxu0 0.0
    %3396 = vmatpush1.xpose.msra.mxu0 0.0
    %3397 = vmatprep.subr.mxu0 0.0
    %3398 = vmatpush1.xpose.msra.mxu0 0.0
    %3399 = vmatprep.mubr.f32.mxu0 0.0
    %3400 = vmatmul.mubr.f32.gmra.mrb[0].mxu0 %v3331
    %v3401 = vpop.f32.mrb[0].mxu0
    %v3402 = vadd.f32 0.0, %v3401
    %v3403 = vpop.f32.mrb[0].mxu0
    %3404 = vdwg.mxu0
    %v3405 = vsel %vm248, %v3402, -inf
    %3406 = vmax.xlane.f32.xlu0 %v3405
    %v3407 = vpop.xlane.xlu0 %3406
    %v3408 = vsub.f32 %v3402, %v3407
    %v3409 = vmul.f32 %v3408, 1.442695
    %v3410 = vpow.pop %v3409
    %v3411 = vsel %vm248, %v3410, 0.0
    %3412 = vadd.xlane.f32.xlu0 %v3411
    %v3413 = vpop.xlane.xlu0 %3412
    %3414 = vrot.lane.b32.xlu0 %v2144, 40
    %v3415 = vpop.permute.xlu0 %3414
    %v3418 = vsel %vm248, %v3410, 0
    %3420 = vmatprep.subr.mxu0 0.0
    %3421 = vmatpush1.msra.mxu0 %v3415
    %3422 = vmatprep.subr.mxu0 0.0
    %3423 = vmatpush1.msra.mxu0 0.0
    %3424 = vmatprep.subr.mxu0 0.0
    %3425 = vmatpush1.msra.mxu0 0.0
    %3426 = vmatprep.subr.mxu0 0.0
    %3427 = vmatpush1.msra.mxu0 0.0
    %3428 = vmatprep.subr.mxu0 0.0
    %3429 = vmatpush1.msra.mxu0 0.0
    %3430 = vmatprep.subr.mxu0 0.0
    %3431 = vmatpush1.msra.mxu0 0.0
    %3432 = vmatprep.subr.mxu0 0.0
    %3433 = vmatpush1.msra.mxu0 0.0
    %3434 = vmatprep.subr.mxu0 0.0
    %3435 = vmatpush1.msra.mxu0 0.0
    %3436 = vmatprep.subr.mxu0 0.0
    %3437 = vmatpush1.msra.mxu0 0.0
    %3438 = vmatprep.subr.mxu0 0.0
    %3439 = vmatpush1.msra.mxu0 0.0
    %3440 = vmatprep.subr.mxu0 0.0
    %3441 = vmatpush1.msra.mxu0 0.0
    %3442 = vmatprep.subr.mxu0 0.0
    %3443 = vmatpush1.msra.mxu0 0.0
    %3444 = vmatprep.subr.mxu0 0.0
    %3445 = vmatpush1.msra.mxu0 0.0
    %3446 = vmatprep.subr.mxu0 0.0
    %3447 = vmatpush1.msra.mxu0 0.0
    %3448 = vmatprep.subr.mxu0 0.0
    %3449 = vmatpush1.msra.mxu0 0.0
    %3450 = vmatprep.subr.mxu0 0.0
    %3451 = vmatpush1.msra.mxu0 0.0
    %3452 = vmatprep.subr.mxu0 0.0
    %3453 = vmatpush1.msra.mxu0 0.0
    %3454 = vmatprep.subr.mxu0 0.0
    %3455 = vmatpush1.msra.mxu0 0.0
    %3456 = vmatprep.subr.mxu0 0.0
    %3457 = vmatpush1.msra.mxu0 0.0
    %3458 = vmatprep.subr.mxu0 0.0
    %3459 = vmatpush1.msra.mxu0 0.0
    %3460 = vmatprep.subr.mxu0 0.0
    %3461 = vmatpush1.msra.mxu0 0.0
    %3462 = vmatprep.subr.mxu0 0.0
    %3463 = vmatpush1.msra.mxu0 0.0
    %3464 = vmatprep.subr.mxu0 0.0
    %3465 = vmatpush1.msra.mxu0 0.0
    %3466 = vmatprep.subr.mxu0 0.0
    %3467 = vmatpush1.msra.mxu0 0.0
    %3468 = vmatprep.subr.mxu0 0.0
    %3469 = vmatpush1.msra.mxu0 0.0
    %3470 = vmatprep.subr.mxu0 0.0
    %3471 = vmatpush1.msra.mxu0 0.0
    %3472 = vmatprep.subr.mxu0 0.0
    %3473 = vmatpush1.msra.mxu0 0.0
    %3474 = vmatprep.subr.mxu0 0.0
    %3475 = vmatpush1.msra.mxu0 0.0
    %3476 = vmatprep.subr.mxu0 0.0
    %3477 = vmatpush1.msra.mxu0 0.0
    %3478 = vmatprep.subr.mxu0 0.0
    %3479 = vmatpush1.msra.mxu0 0.0
    %3480 = vmatprep.subr.mxu0 0.0
    %3481 = vmatpush1.msra.mxu0 0.0
    %3482 = vmatprep.subr.mxu0 0.0
    %3483 = vmatpush1.msra.mxu0 0.0
    %3484 = vmatprep.mubr.f32.mxu0 0.0
    %3485 = vmatmul.mubr.f32.gmra.mrb[0].mxu0 %v3418
    %v3486 = vpop.f32.mrb[0].mxu0
    %v3487 = vadd.f32 0.0, %v3486
    %v3488 = vpop.f32.mrb[0].mxu0
    %3489 = vdwg.mxu0
    %v3490 = vrcp.pop %v3413
    %v3491 = vmul.f32 %v3487, %v3490
    %3493 = vrot.lane.b32.xlu0 %v3491, 24
    %v3494 = vpop.permute.xlu0 %3493
    %3496 = vst.msk [vmem:[#allocation2 + $0x8] sm:$0xff] %vm1196, %v3494
    %v3497 = vld [vmem:[#allocation2] sm:$0xff]
    %v3498 = vld [vmem:[#allocation2 + $0x8] sm:$0xff]
    %v3499 = vadd.f32 %v2053, %v3497
    %v3500 = vadd.f32 %v2054, %v3498
    %v3501 = vsel %vm438, %v3499, 0.0
    %3502 = vadd.xlane.f32.xlu0 %v3501
    %v3503 = vpop.xlane.xlu0 %3502
    %v3504 = vsel %vm438, %v3500, 0.0
    %3505 = vadd.xlane.f32.xlu0 %v3504
    %v3506 = vpop.xlane.xlu0 %3505
    %v3507 = vmul.f32 %v3503, %v1883
    %v3508 = vmul.f32 %v3506, %v1883
    %v3509 = vsub.f32 %v3499, %v3507
    %v3510 = vsub.f32 %v3500, %v3508
    %v3511 = vmul.f32 %v3509, %v3509
    %v3512 = vmul.f32 %v3510, %v3510
    %v3513 = vsel %vm438, %v3511, 0.0
    %3514 = vadd.xlane.f32.xlu0 %v3513
    %v3515 = vpop.xlane.xlu0 %3514
    %v3516 = vsel %vm438, %v3512, 0.0
    %3517 = vadd.xlane.f32.xlu0 %v3516
    %v3518 = vpop.xlane.xlu0 %3517
    %v3519 = vmul.f32 %v3515, %v1883
    %v3520 = vmul.f32 %v3518, %v1883
    %v3521 = vadd.f32 %v3519, 1e-05
    %v3522 = vadd.f32 %v3520, 1e-05
    %v3523 = vrsqrt.pop %v3521
    %v3524 = vrsqrt.pop %v3522
    %v3525 = vmul.f32 %v3509, %v3523
    %v3526 = vmul.f32 %v3510, %v3524
    %v3528 = vlaneseq
    %v3529 = vshrl.u32 %v3528, 7
    %v3530 = vsub.s32 0, %v3529
    %v3531 = vrot.slane %v2059, %v3530
    %v3533 = vmul.f32 %v3525, %v3531
    %v3534 = vmul.f32 %v3526, %v3531
    %v3536 = vlaneseq
    %v3537 = vshrl.u32 %v3536, 7
    %v3538 = vsub.s32 0, %v3537
    %v3539 = vrot.slane %v2060, %v3538
    %v3541 = vadd.f32 %v3533, %v3539
    %v3542 = vadd.f32 %v3534, %v3539
    %v3544 = vlaneseq
    %v3545 = vshrl.u32 %v3544, 7
    %v3546 = vsub.s32 0, %v3545
    %v3547 = vrot.slane %v2065, %v3546
    %v3550 = vsel %vm438, %v3541, 0
    %v3553 = vsel %vm438, %v3542, 0
    %3555 = vmatprep.subr.mxu0 0.0
    %3556 = vmatpush1.msra.mxu0 %v2061
    %3557 = vmatprep.subr.mxu0 0.0
    %3558 = vmatpush1.msra.mxu0 %v2062
    %3559 = vmatprep.subr.mxu0 0.0
    %3560 = vmatpush1.msra.mxu0 %v2063
    %3561 = vmatprep.subr.mxu0 0.0
    %3562 = vmatpush1.msra.mxu0 %v2064
    %3563 = vmatprep.subr.mxu0 0.0
    %3564 = vmatpush1.msra.mxu0 0.0
    %3565 = vmatprep.subr.mxu0 0.0
    %3566 = vmatpush1.msra.mxu0 0.0
    %3567 = vmatprep.subr.mxu0 0.0
    %3568 = vmatpush1.msra.mxu0 0.0
    %3569 = vmatprep.subr.mxu0 0.0
    %3570 = vmatpush1.msra.mxu0 0.0
    %3571 = vmatprep.subr.mxu0 0.0
    %3572 = vmatpush1.msra.mxu0 0.0
    %3573 = vmatprep.subr.mxu0 0.0
    %3574 = vmatpush1.msra.mxu0 0.0
    %3575 = vmatprep.subr.mxu0 0.0
    %3576 = vmatpush1.msra.mxu0 0.0
    %3577 = vmatprep.subr.mxu0 0.0
    %3578 = vmatpush1.msra.mxu0 0.0
    %3579 = vmatprep.subr.mxu0 0.0
    %3580 = vmatpush1.msra.mxu0 0.0
    %3581 = vmatprep.subr.mxu0 0.0
    %3582 = vmatpush1.msra.mxu0 0.0
    %3583 = vmatprep.subr.mxu0 0.0
    %3584 = vmatpush1.msra.mxu0 0.0
    %3585 = vmatprep.subr.mxu0 0.0
    %3586 = vmatpush1.msra.mxu0 0.0
    %3587 = vmatprep.subr.mxu0 0.0
    %3588 = vmatpush1.msra.mxu0 0.0
    %3589 = vmatprep.subr.mxu0 0.0
    %3590 = vmatpush1.msra.mxu0 0.0
    %3591 = vmatprep.subr.mxu0 0.0
    %3592 = vmatpush1.msra.mxu0 0.0
    %3593 = vmatprep.subr.mxu0 0.0
    %3594 = vmatpush1.msra.mxu0 0.0
    %3595 = vmatprep.subr.mxu0 0.0
    %3596 = vmatpush1.msra.mxu0 0.0
    %3597 = vmatprep.subr.mxu0 0.0
    %3598 = vmatpush1.msra.mxu0 0.0
    %3599 = vmatprep.subr.mxu0 0.0
    %3600 = vmatpush1.msra.mxu0 0.0
    %3601 = vmatprep.subr.mxu0 0.0
    %3602 = vmatpush1.msra.mxu0 0.0
    %3603 = vmatprep.subr.mxu0 0.0
    %3604 = vmatpush1.msra.mxu0 0.0
    %3605 = vmatprep.subr.mxu0 0.0
    %3606 = vmatpush1.msra.mxu0 0.0
    %3607 = vmatprep.subr.mxu0 0.0
    %3608 = vmatpush1.msra.mxu0 0.0
    %3609 = vmatprep.subr.mxu0 0.0
    %3610 = vmatpush1.msra.mxu0 0.0
    %3611 = vmatprep.subr.mxu0 0.0
    %3612 = vmatpush1.msra.mxu0 0.0
    %3613 = vmatprep.subr.mxu0 0.0
    %3614 = vmatpush1.msra.mxu0 0.0
    %3615 = vmatprep.subr.mxu0 0.0
    %3616 = vmatpush1.msra.mxu0 0.0
    %3617 = vmatprep.subr.mxu0 0.0
    %3618 = vmatpush1.msra.mxu0 0.0
    %3619 = vmatprep.mubr.f32.mxu0 0.0
    %3620 = vmatmul.mubr.f32.gmra.mrb[0].mxu0 %v3550
    %v3621 = vpop.f32.mrb[0].mxu0
    %v3622 = vadd.f32 %v3547, %v3621
    %v3623 = vpop.f32.mrb[0].mxu0
    %3624 = vmatprep.mubr.f32.mxu0 0.0
    %3625 = vmatmul.mubr.f32.gmra.mrb[0].mxu0 %v3553
    %v3626 = vpop.f32.mrb[0].mxu0
    %v3627 = vadd.f32 %v3547, %v3626
    %v3628 = vpop.f32.mrb[0].mxu0
    %3629 = vdwg.mxu0
    %v3630 = vmax.f32 %v3622, 0.0
    %v3631 = vmax.f32 %v3627, 0.0
    %v3632 = vadd.f32 %v3541, %v3630
    %v3633 = vadd.f32 %v3542, %v3631
    %v3634 = vld [vmem:[#allocation22] sm:$0x1]
    %v3635 = vld [vmem:[#allocation23] sm:$0x1]
    %v3636 = vld [vmem:[%s20] sm:$0xff]
    %v3637 = vld [vmem:[%s20 + $0x8] sm:$0xff]
    %v3638 = vld [vmem:[%s20 + $0x10] sm:$0xff]
    %v3639 = vld [vmem:[%s20 + $0x18] sm:$0xff]
    %v3640 = vsel %vm438, %v3632, 0.0
    %3641 = vadd.xlane.f32.xlu0 %v3640
    %v3642 = vpop.xlane.xlu0 %3641
    %v3643 = vsel %vm438, %v3633, 0.0
    %3644 = vadd.xlane.f32.xlu0 %v3643
    %v3645 = vpop.xlane.xlu0 %3644
    %v3646 = vmul.f32 %v3642, %v1883
    %v3647 = vmul.f32 %v3645, %v1883
    %v3648 = vsub.f32 %v3632, %v3646
    %v3649 = vsub.f32 %v3633, %v3647
    %v3650 = vmul.f32 %v3648, %v3648
    %v3651 = vmul.f32 %v3649, %v3649
    %v3652 = vsel %vm438, %v3650, 0.0
    %3653 = vadd.xlane.f32.xlu0 %v3652
    %v3654 = vpop.xlane.xlu0 %3653
    %v3655 = vsel %vm438, %v3651, 0.0
    %3656 = vadd.xlane.f32.xlu0 %v3655
    %v3657 = vpop.xlane.xlu0 %3656
    %v3658 = vmul.f32 %v3654, %v1883
    %v3659 = vmul.f32 %v3657, %v1883
    %v3660 = vadd.f32 %v3658, 1e-05
    %v3661 = vadd.f32 %v3659, 1e-05
    %v3662 = vrsqrt.pop %v3660
    %v3663 = vrsqrt.pop %v3661
    %v3664 = vmul.f32 %v3648, %v3662
    %v3665 = vmul.f32 %v3649, %v3663
    %v3667 = vlaneseq
    %v3668 = vshrl.u32 %v3667, 7
    %v3669 = vsub.s32 0, %v3668
    %v3670 = vrot.slane %v3634, %v3669
    %v3672 = vmul.f32 %v3664, %v3670
    %v3673 = vmul.f32 %v3665, %v3670
    %v3675 = vlaneseq
    %v3676 = vshrl.u32 %v3675, 7
    %v3677 = vsub.s32 0, %v3676
    %v3678 = vrot.slane %v3635, %v3677
    %v3680 = vadd.f32 %v3672, %v3678
    %v3681 = vadd.f32 %v3673, %v3678
    %v3683 = vsel %vm438, %v3680, 0
    %v3686 = vsel %vm438, %v3681, 0
    %3688 = vmatprep.subr.mxu0 0.0
    %3689 = vmatpush1.msra.mxu0 %v3636
    %3690 = vmatprep.subr.mxu0 0.0
    %3691 = vmatpush1.msra.mxu0 %v3637
    %3692 = vmatprep.subr.mxu0 0.0
    %3693 = vmatpush1.msra.mxu0 %v3638
    %3694 = vmatprep.subr.mxu0 0.0
    %3695 = vmatpush1.msra.mxu0 %v3639
    %3696 = vmatprep.subr.mxu0 0.0
    %3697 = vmatpush1.msra.mxu0 0.0
    %3698 = vmatprep.subr.mxu0 0.0
    %3699 = vmatpush1.msra.mxu0 0.0
    %3700 = vmatprep.subr.mxu0 0.0
    %3701 = vmatpush1.msra.mxu0 0.0
    %3702 = vmatprep.subr.mxu0 0.0
    %3703 = vmatpush1.msra.mxu0 0.0
    %3704 = vmatprep.subr.mxu0 0.0
    %3705 = vmatpush1.msra.mxu0 0.0
    %3706 = vmatprep.subr.mxu0 0.0
    %3707 = vmatpush1.msra.mxu0 0.0
    %3708 = vmatprep.subr.mxu0 0.0
    %3709 = vmatpush1.msra.mxu0 0.0
    %3710 = vmatprep.subr.mxu0 0.0
    %3711 = vmatpush1.msra.mxu0 0.0
    %3712 = vmatprep.subr.mxu0 0.0
    %3713 = vmatpush1.msra.mxu0 0.0
    %3714 = vmatprep.subr.mxu0 0.0
    %3715 = vmatpush1.msra.mxu0 0.0
    %3716 = vmatprep.subr.mxu0 0.0
    %3717 = vmatpush1.msra.mxu0 0.0
    %3718 = vmatprep.subr.mxu0 0.0
    %3719 = vmatpush1.msra.mxu0 0.0
    %3720 = vmatprep.subr.mxu0 0.0
    %3721 = vmatpush1.msra.mxu0 0.0
    %3722 = vmatprep.subr.mxu0 0.0
    %3723 = vmatpush1.msra.mxu0 0.0
    %3724 = vmatprep.subr.mxu0 0.0
    %3725 = vmatpush1.msra.mxu0 0.0
    %3726 = vmatprep.subr.mxu0 0.0
    %3727 = vmatpush1.msra.mxu0 0.0
    %3728 = vmatprep.subr.mxu0 0.0
    %3729 = vmatpush1.msra.mxu0 0.0
    %3730 = vmatprep.subr.mxu0 0.0
    %3731 = vmatpush1.msra.mxu0 0.0
    %3732 = vmatprep.subr.mxu0 0.0
    %3733 = vmatpush1.msra.mxu0 0.0
    %3734 = vmatprep.subr.mxu0 0.0
    %3735 = vmatpush1.msra.mxu0 0.0
    %3736 = vmatprep.subr.mxu0 0.0
    %3737 = vmatpush1.msra.mxu0 0.0
    %3738 = vmatprep.subr.mxu0 0.0
    %3739 = vmatpush1.msra.mxu0 0.0
    %3740 = vmatprep.subr.mxu0 0.0
    %3741 = vmatpush1.msra.mxu0 0.0
    %3742 = vmatprep.subr.mxu0 0.0
    %3743 = vmatpush1.msra.mxu0 0.0
    %3744 = vmatprep.subr.mxu0 0.0
    %3745 = vmatpush1.msra.mxu0 0.0
    %3746 = vmatprep.subr.mxu0 0.0
    %3747 = vmatpush1.msra.mxu0 0.0
    %3748 = vmatprep.subr.mxu0 0.0
    %3749 = vmatpush1.msra.mxu0 0.0
    %3750 = vmatprep.subr.mxu0 0.0
    %3751 = vmatpush1.msra.mxu0 0.0
    %3752 = vmatprep.mubr.f32.mxu0 0.0
    %3753 = vmatmul.mubr.f32.gmra.mrb[0].mxu0 %v3683
    %v3754 = vpop.f32.mrb[0].mxu0
    %v3755 = vadd.f32 0.0, %v3754
    %v3756 = vpop.f32.mrb[0].mxu0
    %3757 = vmatprep.mubr.f32.mxu0 0.0
    %3758 = vmatmul.mubr.f32.gmra.mrb[0].mxu0 %v3686
    %v3759 = vpop.f32.mrb[0].mxu0
    %v3760 = vadd.f32 0.0, %v3759
    %v3761 = vpop.f32.mrb[0].mxu0
    %3762 = vdwg.mxu0
    %vm3763 = vcmask 523264
    %3764 = vst.msk [vmem:[%s21] sm:$0xff] %vm3763, %v3755
    %3765 = vst.msk [vmem:[%s21 + $0x8] sm:$0xff] %vm3763, %v3760
    // Predicated region
    $region142: #{encoder_forward.1} parent=1 // pred_check
      _
    $region143: #{encoder_forward.1} parent=1 // pred_check_branch
      %3767 = sbr.rel (0) target = $region145
    $region144: #{encoder_forward.1} parent=1 // pred_region
      _
    $region145: #{encoder_forward.1} parent=1 // pred_fallthru
      _
    // Predicated region
    $region146: #{encoder_forward.1} parent=1 // pred_check
      _
    $region147: #{encoder_forward.1} parent=1 // pred_check_branch
      %3769 = sbr.rel (0) target = $region149
    $region148: #{encoder_forward.1} parent=1 // pred_region
      _
    $region149: #{encoder_forward.1} parent=1 // pred_fallthru
      _
    %3770 = vsyncpa [#allocation4], 1
    %3771 = vsyncpa [#allocation6], 1
    %3772 = vsyncpa [#allocation9], 1
    %3773 = vsyncpa [#allocation12], 1
    %3774 = vsyncpa [#allocation15], 1
    %3775 = vsyncpa [#allocation18], 1
    %3776 = vsyncpa [#allocation21], 1
    %3777 = vsyncpa [#allocation24], 1

</llo_original>
